<compile_context>
chip_gen: v7x
topology: tpu7x:2x2x1
jax: 0.10.0
libtpu: 0.0.40
codegen_flags: <defaults>
</compile_context>

<pallas_src>
import jax
import jax.numpy as jnp
from jax.experimental import pallas as pl
from jax.experimental.pallas import tpu as pltpu

LANE = 128
SUBLANE = 8


def _sigmoid(x):
    # single-EUP-op sigmoid: 0.5 * tanh(0.5 x) + 0.5 (avoids exp + divide)
    return 0.5 * jnp.tanh(0.5 * x) + 0.5


def _make_kernel(n_layers, hidden_size, time_chunk, total_steps):
    L, H, Tc, T = n_layers, hidden_size, time_chunk, total_steps

    def kernel(x_ref, we_ref, be_ref, w_ref, b_ref, wo_ref, bo_ref,
               h0_ref, c0_ref, y_ref, h_out_ref, c_out_ref,
               hcat_ref, c_ref):
        tc = pl.program_id(0)

        # Seed the recurrent state once; it lives in VMEM scratch for the
        # whole rollout.  hcat layout per layer: [:, :H] = layer input,
        # [:, H:] = layer's previous hidden state.
        @pl.when(tc == 0)
        def _():
            hcat_ref[...] = jnp.zeros_like(hcat_ref)
            hcat_ref[:, :, H:] = h0_ref[...]
            c_ref[...] = c0_ref[...]

        def step(s):
            # ---- embed: Linear(input_size -> hidden_size) ----
            h_in = (jnp.dot(x_ref[s].astype(jnp.bfloat16), we_ref[...],
                            preferred_element_type=jnp.float32)
                    + be_ref[...])                                   # (B, H) f32
            hcat_ref[0, :, :H] = h_in

            # ---- stacked LSTMCells: one merged (B,2H)x(2H,4H) matmul/layer ----
            h_new = h_in
            for l in range(L):
                gates = (jnp.dot(hcat_ref[l].astype(jnp.bfloat16), w_ref[l],
                                 preferred_element_type=jnp.float32)
                         + b_ref[l])                                 # (B, 4H) f32
                i_g = _sigmoid(gates[:, 0 * H:1 * H])
                f_g = _sigmoid(gates[:, 1 * H:2 * H])
                g_g = jnp.tanh(gates[:, 2 * H:3 * H])
                o_g = _sigmoid(gates[:, 3 * H:4 * H])
                c_new = f_g * c_ref[l] + i_g * g_g
                h_new = o_g * jnp.tanh(c_new)
                c_ref[l] = c_new
                hcat_ref[l, :, H:] = h_new            # recurrence, next timestep
                if l + 1 < L:
                    hcat_ref[l + 1, :, :H] = h_new    # input to next layer

            # ---- output head: Linear(hidden -> out_pad) + Tanh ----
            # wo/bo lane-padded to 128 -> padded lanes are tanh(0)=0, sliced
            # off outside; store into the chunk-resident y block.
            y_ref[s] = jnp.tanh(
                jnp.dot(h_new.astype(jnp.bfloat16), wo_ref[...],
                        preferred_element_type=jnp.float32) + bo_ref[...])

        need_guard = (T % Tc) != 0
        for s in range(Tc):
            if need_guard:
                t_glob = tc * Tc + s

                @pl.when(t_glob < T)
                def _(s=s):
                    step(s)
            else:
                step(s)

        # final hidden-state writeback, once
        @pl.when(tc == pl.num_programs(0) - 1)
        def _():
            h_out_ref[...] = hcat_ref[:, :, H:]
            c_out_ref[...] = c_ref[...]

    return kernel


def lstm_svg_forward(x_seq, kparams, hidden, output_size, *, time_chunk=8):
    """Fused T-step rollout of lstm_svg.

    x_seq:   (T, B, input_size)  -- T=1 reproduces the module's single step
    kparams: output of prepare_params()
    hidden:  (h, c), each (L, B, H)
    returns  (y, (h_new, c_new)) with y (T, B, output_size)
    """
    we, be = kparams["we"], kparams["be"]
    w, b = kparams["w"], kparams["b"]          # (L, 2H, 4H) bf16, (L, 1, 4H) f32
    wo, bo = kparams["wo"], kparams["bo"]      # lane-padded; wo bf16, bo f32
    h0, c0 = hidden

    T, B, in_size = x_seq.shape
    L, _, H = h0.shape
    out_pad = wo.shape[1]

    Tc = min(time_chunk, T)
    n_chunks = pl.cdiv(T, Tc)
    T_pad = n_chunks * Tc
    B_pad = ((B + SUBLANE - 1) // SUBLANE) * SUBLANE

    # pad batch to 8 sublanes (dense vregs / unmasked stores) and time to a
    # multiple of the chunk size; padded rows/steps are sliced off afterwards.
    xp = jnp.zeros((T_pad, B_pad, in_size), x_seq.dtype).at[:T, :B].set(x_seq)
    h0p = jnp.zeros((L, B_pad, H), jnp.float32).at[:, :B].set(h0)
    c0p = jnp.zeros((L, B_pad, H), jnp.float32).at[:, :B].set(c0)

    kernel = _make_kernel(L, H, Tc, T)

    def const_spec(a):
        # full-array block, constant index map -> loaded once, VMEM-resident
        nd = a.ndim
        return pl.BlockSpec(a.shape, lambda t, _nd=nd: (0,) * _nd)

    def nbytes(a):
        return a.size * a.dtype.itemsize

    resident = sum(nbytes(a) for a in (we, be, w, b, wo, bo, h0p, c0p))
    chunk_io = (Tc * B_pad * in_size + Tc * B_pad * out_pad) * 4
    state = (L * B_pad * 3 * H) * 4 + 2 * L * B_pad * H * 4
    vmem_limit = int(min(100 * 1024 * 1024,
                         2 * (resident + chunk_io + state) + (4 << 20)))

    y_pad, h_new, c_new = pl.pallas_call(
        kernel,
        grid=(n_chunks,),
        in_specs=[
            pl.BlockSpec((Tc, B_pad, in_size), lambda t: (t, 0, 0)),  # x chunk
            const_spec(we), const_spec(be),
            const_spec(w), const_spec(b),
            const_spec(wo), const_spec(bo),
            const_spec(h0p), const_spec(c0p),
        ],
        out_specs=(
            pl.BlockSpec((Tc, B_pad, out_pad), lambda t: (t, 0, 0)),  # y chunk
            pl.BlockSpec((L, B_pad, H), lambda t: (0, 0, 0)),         # h final
            pl.BlockSpec((L, B_pad, H), lambda t: (0, 0, 0)),         # c final
        ),
        out_shape=(
            jax.ShapeDtypeStruct((T_pad, B_pad, out_pad), jnp.float32),
            jax.ShapeDtypeStruct((L, B_pad, H), jnp.float32),
            jax.ShapeDtypeStruct((L, B_pad, H), jnp.float32),
        ),
        scratch_shapes=[
            pltpu.VMEM((L, B_pad, 2 * H), jnp.float32),   # [h_in | h_prev]
            pltpu.VMEM((L, B_pad, H), jnp.float32),       # cell state
        ],
        compiler_params=pltpu.CompilerParams(
            dimension_semantics=("arbitrary",),           # time is sequential
            vmem_limit_bytes=vmem_limit),
    )(xp, we, be, w, b, wo, bo, h0p, c0p)

    y = y_pad[:T, :B, :output_size]
    return y, (h_new[:, :B], c_new[:, :B])


def init_params(key, input_size, output_size, hidden_size, n_layers):
    """Deterministic synthetic parameters (shapes match the torch module)."""
    ks = jax.random.split(key, 8)
    H = hidden_size
    scale = 0.1
    return {
        # embed: Linear(input_size, hidden_size) stored transposed (in, out)
        "we": scale * jax.random.normal(ks[0], (input_size, H), jnp.float32),
        "be": scale * jax.random.normal(ks[1], (1, H), jnp.float32),
        # per-layer LSTMCell weights, stored transposed, gate order [i,f,g,o]
        "wih": scale * jax.random.normal(ks[2], (n_layers, H, 4 * H), jnp.float32),
        "whh": scale * jax.random.normal(ks[3], (n_layers, H, 4 * H), jnp.float32),
        # b = b_ih + b_hh combined; (L, 1, 4H) so b[l] is 2-D
        "b": scale * jax.random.normal(ks[4], (n_layers, 1, 4 * H), jnp.float32),
        # output: Linear(hidden_size, output_size) stored transposed
        "wo": scale * jax.random.normal(ks[5], (H, output_size), jnp.float32),
        "bo": scale * jax.random.normal(ks[6], (1, output_size), jnp.float32),
    }


def prepare_params(params, lane=LANE):
    """Kernel weight layout: merged gates, bf16 resident weights, padded head."""
    # merged input/hidden gate weights: (L, 2H, 4H), bf16 for MXU + residency
    w = jnp.concatenate([params["wih"], params["whh"]], axis=1)
    H, out = params["wo"].shape
    out_pad = ((out + lane - 1) // lane) * lane
    wo = jnp.zeros((H, out_pad), jnp.float32).at[:, :out].set(params["wo"])
    bo = jnp.zeros((1, out_pad), jnp.float32).at[:, :out].set(params["bo"])
    return {
        "we": params["we"].astype(jnp.bfloat16),
        "be": params["be"],                       # biases stay f32
        "w": w.astype(jnp.bfloat16),
        "b": params["b"],
        "wo": wo.astype(jnp.bfloat16),
        "bo": bo,
    }


def reference_rollout(x_seq, params, hidden):
    """Pure-JAX f32 reference mirroring the torch module step-by-step."""
    h, c = hidden
    L, B, H = h.shape
    ys = []
    for t in range(x_seq.shape[0]):
        h_in = x_seq[t] @ params["we"] + params["be"]
        h_list, c_list = [], []
        for l in range(L):
            gates = (h_in @ params["wih"][l] + h[l] @ params["whh"][l]
                     + params["b"][l])
            i_g = jax.nn.sigmoid(gates[:, 0 * H:1 * H])
            f_g = jax.nn.sigmoid(gates[:, 1 * H:2 * H])
            g_g = jnp.tanh(gates[:, 2 * H:3 * H])
            o_g = jax.nn.sigmoid(gates[:, 3 * H:4 * H])
            cn = f_g * c[l] + i_g * g_g
            hn = o_g * jnp.tanh(cn)
            h_list.append(hn)
            c_list.append(cn)
            h_in = hn
        h = jnp.stack(h_list)
        c = jnp.stack(c_list)
        ys.append(jnp.tanh(h_in @ params["wo"] + params["bo"]))
    return jnp.stack(ys), (h, c)


if __name__ == "__main__":
    batch_size = 2
    input_size = 16
    output_size = 16
    hidden_size = 32
    n_layers = 2
    seq_len = 8

    key = jax.random.PRNGKey(0)
    k_x, k_p = jax.random.split(key)

    x_seq = jax.random.normal(k_x, (seq_len, batch_size, input_size), jnp.float32)
    params = init_params(k_p, input_size, output_size, hidden_size, n_layers)
    kparams = prepare_params(params)

    # init_hidden(): zeros
    h0 = jnp.zeros((n_layers, batch_size, hidden_size), jnp.float32)
    c0 = jnp.zeros((n_layers, batch_size, hidden_size), jnp.float32)

    # f32 reference
    y_ref, (h_ref, c_ref) = reference_rollout(x_seq, params, (h0, c0))

    y, (h1, c1) = lstm_svg_forward(x_seq, kparams, (h0, c0), output_size)
    jax.block_until_ready((y, h1, c1))

    # kernel uses bf16 MXU operands -> compare against f32 reference loosely
    assert jnp.allclose(y, y_ref, atol=2e-2), "output mismatch"
    assert jnp.allclose(h1, h_ref, atol=2e-2), "hidden-h mismatch"
    assert jnp.allclose(c1, c_ref, atol=2e-2), "hidden-c mismatch"

    print("KERNEL_OK")
</pallas_src>

<mosaic_0001>
module attributes {stable_mosaic.version = 11 : i64} {
  func.func @kernel(%arg0: i32, %arg1: memref<8x8x16xf32, #tpu.memory_space<vmem>>, %arg2: memref<16x32xbf16, #tpu.memory_space<vmem>>, %arg3: memref<1x32xf32, #tpu.memory_space<vmem>>, %arg4: memref<2x64x128xbf16, #tpu.memory_space<vmem>>, %arg5: memref<2x1x128xf32, #tpu.memory_space<vmem>>, %arg6: memref<32x128xbf16, #tpu.memory_space<vmem>>, %arg7: memref<1x128xf32, #tpu.memory_space<vmem>>, %arg8: memref<2x8x32xf32, #tpu.memory_space<vmem>>, %arg9: memref<2x8x32xf32, #tpu.memory_space<vmem>>, %arg10: memref<8x8x128xf32, #tpu.memory_space<vmem>>, %arg11: memref<2x8x32xf32, #tpu.memory_space<vmem>>, %arg12: memref<2x8x32xf32, #tpu.memory_space<vmem>>, %arg13: memref<2x8x64xf32, #tpu.memory_space<vmem>>, %arg14: memref<2x8x32xf32, #tpu.memory_space<vmem>>) attributes {dimension_semantics = [#tpu.dimension_semantics<arbitrary>], iteration_bounds = array<i64: 1>, scalar_prefetch = 0 : i64, scratch_operands = 2 : i64, tpu.core_type = #tpu.core_type<tc>, window_params = [{transform_indices = @transform_0, window_bounds = array<i64: 8, 8, 16>}, {pipeline_mode = #tpu.pipeline_mode<synchronous>, transform_indices = @transform_1, window_bounds = array<i64: 16, 32>}, {pipeline_mode = #tpu.pipeline_mode<synchronous>, transform_indices = @transform_2, window_bounds = array<i64: 1, 32>}, {pipeline_mode = #tpu.pipeline_mode<synchronous>, transform_indices = @transform_3, window_bounds = array<i64: 2, 64, 128>}, {pipeline_mode = #tpu.pipeline_mode<synchronous>, transform_indices = @transform_4, window_bounds = array<i64: 2, 1, 128>}, {pipeline_mode = #tpu.pipeline_mode<synchronous>, transform_indices = @transform_5, window_bounds = array<i64: 32, 128>}, {pipeline_mode = #tpu.pipeline_mode<synchronous>, transform_indices = @transform_6, window_bounds = array<i64: 1, 128>}, {pipeline_mode = #tpu.pipeline_mode<synchronous>, transform_indices = @transform_7, window_bounds = array<i64: 2, 8, 32>}, {pipeline_mode = #tpu.pipeline_mode<synchronous>, transform_indices = @transform_8, window_bounds = array<i64: 2, 8, 32>}, {transform_indices = @transform_9, window_bounds = array<i64: 8, 8, 128>}, {pipeline_mode = #tpu.pipeline_mode<synchronous>, transform_indices = @transform_10, window_bounds = array<i64: 2, 8, 32>}, {pipeline_mode = #tpu.pipeline_mode<synchronous>, transform_indices = @transform_11, window_bounds = array<i64: 2, 8, 32>}]} {
    %c0_i32 = arith.constant 0 : i32
    %0 = arith.cmpi eq, %arg0, %c0_i32 : i32
    %1 = arith.extui %0 : i1 to i32
    %c0_i32_0 = arith.constant 0 : i32
    %2 = arith.cmpi ne, %1, %c0_i32_0 : i32
    scf.if %2 {
      %cst_617 = arith.constant 0.000000e+00 : f32
      %982 = vector.broadcast %cst_617 : f32 to vector<2x8x64xf32>
      %c0_618 = arith.constant 0 : index
      %c0_619 = arith.constant 0 : index
      %c0_620 = arith.constant 0 : index
      %983 = vector.load %arg13[%c0_618, %c0_619, %c0_620] : memref<2x8x64xf32, #tpu.memory_space<vmem>>, vector<2x8x64xf32>
      tpu.vector_store %arg13[%c0_618, %c0_619, %c0_620], %982 {strides = array<i32>} : memref<2x8x64xf32, #tpu.memory_space<vmem>>, vector<2x8x64xf32>,
      %c0_621 = arith.constant 0 : index
      %c0_622 = arith.constant 0 : index
      %c0_623 = arith.constant 0 : index
      %984 = vector.load %arg8[%c0_621, %c0_622, %c0_623] : memref<2x8x32xf32, #tpu.memory_space<vmem>>, vector<2x8x32xf32>
      %c0_624 = arith.constant 0 : index
      %c0_625 = arith.constant 0 : index
      %c32_626 = arith.constant 32 : index
      %985 = vector.load %arg13[%c0_624, %c0_625, %c32_626] : memref<2x8x64xf32, #tpu.memory_space<vmem>>, vector<2x8x32xf32>
      tpu.vector_store %arg13[%c0_624, %c0_625, %c32_626], %984 {strides = array<i32>} : memref<2x8x64xf32, #tpu.memory_space<vmem>>, vector<2x8x32xf32>,
      %c0_627 = arith.constant 0 : index
      %c0_628 = arith.constant 0 : index
      %c0_629 = arith.constant 0 : index
      %986 = vector.load %arg9[%c0_627, %c0_628, %c0_629] : memref<2x8x32xf32, #tpu.memory_space<vmem>>, vector<2x8x32xf32>
      %c0_630 = arith.constant 0 : index
      %c0_631 = arith.constant 0 : index
      %c0_632 = arith.constant 0 : index
      %987 = vector.load %arg14[%c0_630, %c0_631, %c0_632] : memref<2x8x32xf32, #tpu.memory_space<vmem>>, vector<2x8x32xf32>
      tpu.vector_store %arg14[%c0_630, %c0_631, %c0_632], %986 {strides = array<i32>} : memref<2x8x32xf32, #tpu.memory_space<vmem>>, vector<2x8x32xf32>,
    } else {
    }
    %c0 = arith.constant 0 : index
    %c0_1 = arith.constant 0 : index
    %c0_2 = arith.constant 0 : index
    %3 = vector.load %arg1[%c0, %c0_1, %c0_2] : memref<8x8x16xf32, #tpu.memory_space<vmem>>, vector<1x8x16xf32>
    %4 = vector.shape_cast %3 : vector<1x8x16xf32> to vector<8x16xf32>
    %5 = arith.truncf %4 : vector<8x16xf32> to vector<8x16xbf16>
    %c0_3 = arith.constant 0 : index
    %c0_4 = arith.constant 0 : index
    %6 = vector.load %arg2[%c0_3, %c0_4] : memref<16x32xbf16, #tpu.memory_space<vmem>>, vector<16x32xbf16>
    %cst = arith.constant dense<0.000000e+00> : vector<8x32xf32>
    %7 = tpu.matmul %5, %6, %cst {dimension_numbers = #tpu.dot_dimension_numbers<[1], [0], [0], [1], [0, 0, 1, 1], [], []>} : vector<8x16xbf16>, vector<16x32xbf16>, vector<8x32xf32> -> vector<8x32xf32>
    %c0_5 = arith.constant 0 : index
    %c0_6 = arith.constant 0 : index
    %8 = vector.load %arg3[%c0_5, %c0_6] : memref<1x32xf32, #tpu.memory_space<vmem>>, vector<1x32xf32>
    %9 = vector.broadcast %8 : vector<1x32xf32> to vector<8x32xf32>
    %10 = arith.addf %7, %9 : vector<8x32xf32>
    %c0_7 = arith.constant 0 : index
    %c0_8 = arith.constant 0 : index
    %c0_9 = arith.constant 0 : index
    %11 = vector.load %arg13[%c0_7, %c0_8, %c0_9] : memref<2x8x64xf32, #tpu.memory_space<vmem>>, vector<1x8x32xf32>
    %12 = vector.shape_cast %11 : vector<1x8x32xf32> to vector<8x32xf32>
    %13 = vector.shape_cast %10 : vector<8x32xf32> to vector<1x8x32xf32>
    tpu.vector_store %arg13[%c0_7, %c0_8, %c0_9], %13 {strides = array<i32>} : memref<2x8x64xf32, #tpu.memory_space<vmem>>, vector<1x8x32xf32>,
    %c0_10 = arith.constant 0 : index
    %c0_11 = arith.constant 0 : index
    %c0_12 = arith.constant 0 : index
    %14 = vector.load %arg13[%c0_10, %c0_11, %c0_12] : memref<2x8x64xf32, #tpu.memory_space<vmem>>, vector<1x8x64xf32>
    %15 = vector.shape_cast %14 : vector<1x8x64xf32> to vector<8x64xf32>
    %16 = arith.truncf %15 : vector<8x64xf32> to vector<8x64xbf16>
    %c0_13 = arith.constant 0 : index
    %c0_14 = arith.constant 0 : index
    %c0_15 = arith.constant 0 : index
    %17 = vector.load %arg4[%c0_13, %c0_14, %c0_15] : memref<2x64x128xbf16, #tpu.memory_space<vmem>>, vector<1x64x128xbf16>
    %18 = vector.shape_cast %17 : vector<1x64x128xbf16> to vector<64x128xbf16>
    %cst_16 = arith.constant dense<0.000000e+00> : vector<8x128xf32>
    %19 = tpu.matmul %16, %18, %cst_16 {dimension_numbers = #tpu.dot_dimension_numbers<[1], [0], [0], [1], [0, 0, 1, 1], [], []>} : vector<8x64xbf16>, vector<64x128xbf16>, vector<8x128xf32> -> vector<8x128xf32>
    %c0_17 = arith.constant 0 : index
    %c0_18 = arith.constant 0 : index
    %c0_19 = arith.constant 0 : index
    %20 = vector.load %arg5[%c0_17, %c0_18, %c0_19] : memref<2x1x128xf32, #tpu.memory_space<vmem>>, vector<1x1x128xf32>
    %21 = vector.shape_cast %20 : vector<1x1x128xf32> to vector<1x128xf32>
    %22 = vector.broadcast %21 : vector<1x128xf32> to vector<8x128xf32>
    %23 = arith.addf %19, %22 : vector<8x128xf32>
    %24 = vector.extract_strided_slice %23 {offsets = [0, 0], sizes = [8, 32], strides = [1, 1]} : vector<8x128xf32> to vector<8x32xf32>
    %cst_20 = arith.constant 5.000000e-01 : f32
    %25 = vector.broadcast %cst_20 : f32 to vector<8x32xf32>
    %26 = arith.mulf %25, %24 : vector<8x32xf32>
    %27 = math.tanh %26 : vector<8x32xf32>
    %cst_21 = arith.constant 5.000000e-01 : f32
    %28 = vector.broadcast %cst_21 : f32 to vector<8x32xf32>
    %29 = arith.mulf %28, %27 : vector<8x32xf32>
    %cst_22 = arith.constant 5.000000e-01 : f32
    %30 = vector.broadcast %cst_22 : f32 to vector<8x32xf32>
    %31 = arith.addf %29, %30 : vector<8x32xf32>
    %32 = vector.extract_strided_slice %23 {offsets = [0, 32], sizes = [8, 32], strides = [1, 1]} : vector<8x128xf32> to vector<8x32xf32>
    %cst_23 = arith.constant 5.000000e-01 : f32
    %33 = vector.broadcast %cst_23 : f32 to vector<8x32xf32>
    %34 = arith.mulf %33, %32 : vector<8x32xf32>
    %35 = math.tanh %34 : vector<8x32xf32>
    %cst_24 = arith.constant 5.000000e-01 : f32
    %36 = vector.broadcast %cst_24 : f32 to vector<8x32xf32>
    %37 = arith.mulf %36, %35 : vector<8x32xf32>
    %cst_25 = arith.constant 5.000000e-01 : f32
    %38 = vector.broadcast %cst_25 : f32 to vector<8x32xf32>
    %39 = arith.addf %37, %38 : vector<8x32xf32>
    %40 = vector.extract_strided_slice %23 {offsets = [0, 64], sizes = [8, 32], strides = [1, 1]} : vector<8x128xf32> to vector<8x32xf32>
    %41 = math.tanh %40 : vector<8x32xf32>
    %42 = vector.extract_strided_slice %23 {offsets = [0, 96], sizes = [8, 32], strides = [1, 1]} : vector<8x128xf32> to vector<8x32xf32>
    %cst_26 = arith.constant 5.000000e-01 : f32
    %43 = vector.broadcast %cst_26 : f32 to vector<8x32xf32>
    %44 = arith.mulf %43, %42 : vector<8x32xf32>
    %45 = math.tanh %44 : vector<8x32xf32>
    %cst_27 = arith.constant 5.000000e-01 : f32
    %46 = vector.broadcast %cst_27 : f32 to vector<8x32xf32>
    %47 = arith.mulf %46, %45 : vector<8x32xf32>
    %cst_28 = arith.constant 5.000000e-01 : f32
    %48 = vector.broadcast %cst_28 : f32 to vector<8x32xf32>
    %49 = arith.addf %47, %48 : vector<8x32xf32>
    %c0_29 = arith.constant 0 : index
    %c0_30 = arith.constant 0 : index
    %c0_31 = arith.constant 0 : index
    %50 = vector.load %arg14[%c0_29, %c0_30, %c0_31] : memref<2x8x32xf32, #tpu.memory_space<vmem>>, vector<1x8x32xf32>
    %51 = vector.shape_cast %50 : vector<1x8x32xf32> to vector<8x32xf32>
    %52 = arith.mulf %39, %51 : vector<8x32xf32>
    %53 = arith.mulf %31, %41 : vector<8x32xf32>
    %54 = arith.addf %52, %53 : vector<8x32xf32>
    %55 = math.tanh %54 : vector<8x32xf32>
    %56 = arith.mulf %49, %55 : vector<8x32xf32>
    %c0_32 = arith.constant 0 : index
    %c0_33 = arith.constant 0 : index
    %c0_34 = arith.constant 0 : index
    %57 = vector.load %arg14[%c0_32, %c0_33, %c0_34] : memref<2x8x32xf32, #tpu.memory_space<vmem>>, vector<1x8x32xf32>
    %58 = vector.shape_cast %57 : vector<1x8x32xf32> to vector<8x32xf32>
    %59 = vector.shape_cast %54 : vector<8x32xf32> to vector<1x8x32xf32>
    tpu.vector_store %arg14[%c0_32, %c0_33, %c0_34], %59 {strides = array<i32>} : memref<2x8x32xf32, #tpu.memory_space<vmem>>, vector<1x8x32xf32>,
    %c0_35 = arith.constant 0 : index
    %c0_36 = arith.constant 0 : index
    %c32 = arith.constant 32 : index
    %60 = vector.load %arg13[%c0_35, %c0_36, %c32] : memref<2x8x64xf32, #tpu.memory_space<vmem>>, vector<1x8x32xf32>
    %61 = vector.shape_cast %60 : vector<1x8x32xf32> to vector<8x32xf32>
    %62 = vector.shape_cast %56 : vector<8x32xf32> to vector<1x8x32xf32>
    tpu.vector_store %arg13[%c0_35, %c0_36, %c32], %62 {strides = array<i32>} : memref<2x8x64xf32, #tpu.memory_space<vmem>>, vector<1x8x32xf32>,
    %c1 = arith.constant 1 : index
    %c0_37 = arith.constant 0 : index
    %c0_38 = arith.constant 0 : index
    %63 = vector.load %arg13[%c1, %c0_37, %c0_38] : memref<2x8x64xf32, #tpu.memory_space<vmem>>, vector<1x8x32xf32>
    %64 = vector.shape_cast %63 : vector<1x8x32xf32> to vector<8x32xf32>
    %65 = vector.shape_cast %56 : vector<8x32xf32> to vector<1x8x32xf32>
    tpu.vector_store %arg13[%c1, %c0_37, %c0_38], %65 {strides = array<i32>} : memref<2x8x64xf32, #tpu.memory_space<vmem>>, vector<1x8x32xf32>,
    %c1_39 = arith.constant 1 : index
    %c0_40 = arith.constant 0 : index
    %c0_41 = arith.constant 0 : index
    %66 = vector.load %arg13[%c1_39, %c0_40, %c0_41] : memref<2x8x64xf32, #tpu.memory_space<vmem>>, vector<1x8x64xf32>
    %67 = vector.shape_cast %66 : vector<1x8x64xf32> to vector<8x64xf32>
    %68 = arith.truncf %67 : vector<8x64xf32> to vector<8x64xbf16>
    %c1_42 = arith.constant 1 : index
    %c0_43 = arith.constant 0 : index
    %c0_44 = arith.constant 0 : index
    %69 = vector.load %arg4[%c1_42, %c0_43, %c0_44] : memref<2x64x128xbf16, #tpu.memory_space<vmem>>, vector<1x64x128xbf16>
    %70 = vector.shape_cast %69 : vector<1x64x128xbf16> to vector<64x128xbf16>
    %cst_45 = arith.constant dense<0.000000e+00> : vector<8x128xf32>
    %71 = tpu.matmul %68, %70, %cst_45 {dimension_numbers = #tpu.dot_dimension_numbers<[1], [0], [0], [1], [0, 0, 1, 1], [], []>} : vector<8x64xbf16>, vector<64x128xbf16>, vector<8x128xf32> -> vector<8x128xf32>
    %c1_46 = arith.constant 1 : index
    %c0_47 = arith.constant 0 : index
    %c0_48 = arith.constant 0 : index
    %72 = vector.load %arg5[%c1_46, %c0_47, %c0_48] : memref<2x1x128xf32, #tpu.memory_space<vmem>>, vector<1x1x128xf32>
    %73 = vector.shape_cast %72 : vector<1x1x128xf32> to vector<1x128xf32>
    %74 = vector.broadcast %73 : vector<1x128xf32> to vector<8x128xf32>
    %75 = arith.addf %71, %74 : vector<8x128xf32>
    %76 = vector.extract_strided_slice %75 {offsets = [0, 0], sizes = [8, 32], strides = [1, 1]} : vector<8x128xf32> to vector<8x32xf32>
    %cst_49 = arith.constant 5.000000e-01 : f32
    %77 = vector.broadcast %cst_49 : f32 to vector<8x32xf32>
    %78 = arith.mulf %77, %76 : vector<8x32xf32>
    %79 = math.tanh %78 : vector<8x32xf32>
    %cst_50 = arith.constant 5.000000e-01 : f32
    %80 = vector.broadcast %cst_50 : f32 to vector<8x32xf32>
    %81 = arith.mulf %80, %79 : vector<8x32xf32>
    %cst_51 = arith.constant 5.000000e-01 : f32
    %82 = vector.broadcast %cst_51 : f32 to vector<8x32xf32>
    %83 = arith.addf %81, %82 : vector<8x32xf32>
    %84 = vector.extract_strided_slice %75 {offsets = [0, 32], sizes = [8, 32], strides = [1, 1]} : vector<8x128xf32> to vector<8x32xf32>
    %cst_52 = arith.constant 5.000000e-01 : f32
    %85 = vector.broadcast %cst_52 : f32 to vector<8x32xf32>
    %86 = arith.mulf %85, %84 : vector<8x32xf32>
    %87 = math.tanh %86 : vector<8x32xf32>
    %cst_53 = arith.constant 5.000000e-01 : f32
    %88 = vector.broadcast %cst_53 : f32 to vector<8x32xf32>
    %89 = arith.mulf %88, %87 : vector<8x32xf32>
    %cst_54 = arith.constant 5.000000e-01 : f32
    %90 = vector.broadcast %cst_54 : f32 to vector<8x32xf32>
    %91 = arith.addf %89, %90 : vector<8x32xf32>
    %92 = vector.extract_strided_slice %75 {offsets = [0, 64], sizes = [8, 32], strides = [1, 1]} : vector<8x128xf32> to vector<8x32xf32>
    %93 = math.tanh %92 : vector<8x32xf32>
    %94 = vector.extract_strided_slice %75 {offsets = [0, 96], sizes = [8, 32], strides = [1, 1]} : vector<8x128xf32> to vector<8x32xf32>
    %cst_55 = arith.constant 5.000000e-01 : f32
    %95 = vector.broadcast %cst_55 : f32 to vector<8x32xf32>
    %96 = arith.mulf %95, %94 : vector<8x32xf32>
    %97 = math.tanh %96 : vector<8x32xf32>
    %cst_56 = arith.constant 5.000000e-01 : f32
    %98 = vector.broadcast %cst_56 : f32 to vector<8x32xf32>
    %99 = arith.mulf %98, %97 : vector<8x32xf32>
    %cst_57 = arith.constant 5.000000e-01 : f32
    %100 = vector.broadcast %cst_57 : f32 to vector<8x32xf32>
    %101 = arith.addf %99, %100 : vector<8x32xf32>
    %c1_58 = arith.constant 1 : index
    %c0_59 = arith.constant 0 : index
    %c0_60 = arith.constant 0 : index
    %102 = vector.load %arg14[%c1_58, %c0_59, %c0_60] : memref<2x8x32xf32, #tpu.memory_space<vmem>>, vector<1x8x32xf32>
    %103 = vector.shape_cast %102 : vector<1x8x32xf32> to vector<8x32xf32>
    %104 = arith.mulf %91, %103 : vector<8x32xf32>
    %105 = arith.mulf %83, %93 : vector<8x32xf32>
    %106 = arith.addf %104, %105 : vector<8x32xf32>
    %107 = math.tanh %106 : vector<8x32xf32>
    %108 = arith.mulf %101, %107 : vector<8x32xf32>
    %c1_61 = arith.constant 1 : index
    %c0_62 = arith.constant 0 : index
    %c0_63 = arith.constant 0 : index
    %109 = vector.load %arg14[%c1_61, %c0_62, %c0_63] : memref<2x8x32xf32, #tpu.memory_space<vmem>>, vector<1x8x32xf32>
    %110 = vector.shape_cast %109 : vector<1x8x32xf32> to vector<8x32xf32>
    %111 = vector.shape_cast %106 : vector<8x32xf32> to vector<1x8x32xf32>
    tpu.vector_store %arg14[%c1_61, %c0_62, %c0_63], %111 {strides = array<i32>} : memref<2x8x32xf32, #tpu.memory_space<vmem>>, vector<1x8x32xf32>,
    %c1_64 = arith.constant 1 : index
    %c0_65 = arith.constant 0 : index
    %c32_66 = arith.constant 32 : index
    %112 = vector.load %arg13[%c1_64, %c0_65, %c32_66] : memref<2x8x64xf32, #tpu.memory_space<vmem>>, vector<1x8x32xf32>
    %113 = vector.shape_cast %112 : vector<1x8x32xf32> to vector<8x32xf32>
    %114 = vector.shape_cast %108 : vector<8x32xf32> to vector<1x8x32xf32>
    tpu.vector_store %arg13[%c1_64, %c0_65, %c32_66], %114 {strides = array<i32>} : memref<2x8x64xf32, #tpu.memory_space<vmem>>, vector<1x8x32xf32>,
    %115 = arith.truncf %108 : vector<8x32xf32> to vector<8x32xbf16>
    %c0_67 = arith.constant 0 : index
    %c0_68 = arith.constant 0 : index
    %116 = vector.load %arg6[%c0_67, %c0_68] : memref<32x128xbf16, #tpu.memory_space<vmem>>, vector<32x128xbf16>
    %cst_69 = arith.constant dense<0.000000e+00> : vector<8x128xf32>
    %117 = tpu.matmul %115, %116, %cst_69 {dimension_numbers = #tpu.dot_dimension_numbers<[1], [0], [0], [1], [0, 0, 1, 1], [], []>} : vector<8x32xbf16>, vector<32x128xbf16>, vector<8x128xf32> -> vector<8x128xf32>
    %c0_70 = arith.constant 0 : index
    %c0_71 = arith.constant 0 : index
    %118 = vector.load %arg7[%c0_70, %c0_71] : memref<1x128xf32, #tpu.memory_space<vmem>>, vector<1x128xf32>
    %119 = vector.broadcast %118 : vector<1x128xf32> to vector<8x128xf32>
    %120 = arith.addf %117, %119 : vector<8x128xf32>
    %121 = math.tanh %120 : vector<8x128xf32>
    %c0_72 = arith.constant 0 : index
    %c0_73 = arith.constant 0 : index
    %c0_74 = arith.constant 0 : index
    %122 = vector.load %arg10[%c0_72, %c0_73, %c0_74] : memref<8x8x128xf32, #tpu.memory_space<vmem>>, vector<1x8x128xf32>
    %123 = vector.shape_cast %122 : vector<1x8x128xf32> to vector<8x128xf32>
    %124 = vector.shape_cast %121 : vector<8x128xf32> to vector<1x8x128xf32>
    tpu.vector_store %arg10[%c0_72, %c0_73, %c0_74], %124 {strides = array<i32>} : memref<8x8x128xf32, #tpu.memory_space<vmem>>, vector<1x8x128xf32>,
    %c1_75 = arith.constant 1 : index
    %c0_76 = arith.constant 0 : index
    %c0_77 = arith.constant 0 : index
    %125 = vector.load %arg1[%c1_75, %c0_76, %c0_77] : memref<8x8x16xf32, #tpu.memory_space<vmem>>, vector<1x8x16xf32>
    %126 = vector.shape_cast %125 : vector<1x8x16xf32> to vector<8x16xf32>
    %127 = arith.truncf %126 : vector<8x16xf32> to vector<8x16xbf16>
    %c0_78 = arith.constant 0 : index
    %c0_79 = arith.constant 0 : index
    %128 = vector.load %arg2[%c0_78, %c0_79] : memref<16x32xbf16, #tpu.memory_space<vmem>>, vector<16x32xbf16>
    %cst_80 = arith.constant dense<0.000000e+00> : vector<8x32xf32>
    %129 = tpu.matmul %127, %128, %cst_80 {dimension_numbers = #tpu.dot_dimension_numbers<[1], [0], [0], [1], [0, 0, 1, 1], [], []>} : vector<8x16xbf16>, vector<16x32xbf16>, vector<8x32xf32> -> vector<8x32xf32>
    %c0_81 = arith.constant 0 : index
    %c0_82 = arith.constant 0 : index
    %130 = vector.load %arg3[%c0_81, %c0_82] : memref<1x32xf32, #tpu.memory_space<vmem>>, vector<1x32xf32>
    %131 = vector.broadcast %130 : vector<1x32xf32> to vector<8x32xf32>
    %132 = arith.addf %129, %131 : vector<8x32xf32>
    %c0_83 = arith.constant 0 : index
    %c0_84 = arith.constant 0 : index
    %c0_85 = arith.constant 0 : index
    %133 = vector.load %arg13[%c0_83, %c0_84, %c0_85] : memref<2x8x64xf32, #tpu.memory_space<vmem>>, vector<1x8x32xf32>
    %134 = vector.shape_cast %133 : vector<1x8x32xf32> to vector<8x32xf32>
    %135 = vector.shape_cast %132 : vector<8x32xf32> to vector<1x8x32xf32>
    tpu.vector_store %arg13[%c0_83, %c0_84, %c0_85], %135 {strides = array<i32>} : memref<2x8x64xf32, #tpu.memory_space<vmem>>, vector<1x8x32xf32>,
    %c0_86 = arith.constant 0 : index
    %c0_87 = arith.constant 0 : index
    %c0_88 = arith.constant 0 : index
    %136 = vector.load %arg13[%c0_86, %c0_87, %c0_88] : memref<2x8x64xf32, #tpu.memory_space<vmem>>, vector<1x8x64xf32>
    %137 = vector.shape_cast %136 : vector<1x8x64xf32> to vector<8x64xf32>
    %138 = arith.truncf %137 : vector<8x64xf32> to vector<8x64xbf16>
    %c0_89 = arith.constant 0 : index
    %c0_90 = arith.constant 0 : index
    %c0_91 = arith.constant 0 : index
    %139 = vector.load %arg4[%c0_89, %c0_90, %c0_91] : memref<2x64x128xbf16, #tpu.memory_space<vmem>>, vector<1x64x128xbf16>
    %140 = vector.shape_cast %139 : vector<1x64x128xbf16> to vector<64x128xbf16>
    %cst_92 = arith.constant dense<0.000000e+00> : vector<8x128xf32>
    %141 = tpu.matmul %138, %140, %cst_92 {dimension_numbers = #tpu.dot_dimension_numbers<[1], [0], [0], [1], [0, 0, 1, 1], [], []>} : vector<8x64xbf16>, vector<64x128xbf16>, vector<8x128xf32> -> vector<8x128xf32>
    %c0_93 = arith.constant 0 : index
    %c0_94 = arith.constant 0 : index
    %c0_95 = arith.constant 0 : index
    %142 = vector.load %arg5[%c0_93, %c0_94, %c0_95] : memref<2x1x128xf32, #tpu.memory_space<vmem>>, vector<1x1x128xf32>
    %143 = vector.shape_cast %142 : vector<1x1x128xf32> to vector<1x128xf32>
    %144 = vector.broadcast %143 : vector<1x128xf32> to vector<8x128xf32>
    %145 = arith.addf %141, %144 : vector<8x128xf32>
    %146 = vector.extract_strided_slice %145 {offsets = [0, 0], sizes = [8, 32], strides = [1, 1]} : vector<8x128xf32> to vector<8x32xf32>
    %cst_96 = arith.constant 5.000000e-01 : f32
    %147 = vector.broadcast %cst_96 : f32 to vector<8x32xf32>
    %148 = arith.mulf %147, %146 : vector<8x32xf32>
    %149 = math.tanh %148 : vector<8x32xf32>
    %cst_97 = arith.constant 5.000000e-01 : f32
    %150 = vector.broadcast %cst_97 : f32 to vector<8x32xf32>
    %151 = arith.mulf %150, %149 : vector<8x32xf32>
    %cst_98 = arith.constant 5.000000e-01 : f32
    %152 = vector.broadcast %cst_98 : f32 to vector<8x32xf32>
    %153 = arith.addf %151, %152 : vector<8x32xf32>
    %154 = vector.extract_strided_slice %145 {offsets = [0, 32], sizes = [8, 32], strides = [1, 1]} : vector<8x128xf32> to vector<8x32xf32>
    %cst_99 = arith.constant 5.000000e-01 : f32
    %155 = vector.broadcast %cst_99 : f32 to vector<8x32xf32>
    %156 = arith.mulf %155, %154 : vector<8x32xf32>
    %157 = math.tanh %156 : vector<8x32xf32>
    %cst_100 = arith.constant 5.000000e-01 : f32
    %158 = vector.broadcast %cst_100 : f32 to vector<8x32xf32>
    %159 = arith.mulf %158, %157 : vector<8x32xf32>
    %cst_101 = arith.constant 5.000000e-01 : f32
    %160 = vector.broadcast %cst_101 : f32 to vector<8x32xf32>
    %161 = arith.addf %159, %160 : vector<8x32xf32>
    %162 = vector.extract_strided_slice %145 {offsets = [0, 64], sizes = [8, 32], strides = [1, 1]} : vector<8x128xf32> to vector<8x32xf32>
    %163 = math.tanh %162 : vector<8x32xf32>
    %164 = vector.extract_strided_slice %145 {offsets = [0, 96], sizes = [8, 32], strides = [1, 1]} : vector<8x128xf32> to vector<8x32xf32>
    %cst_102 = arith.constant 5.000000e-01 : f32
    %165 = vector.broadcast %cst_102 : f32 to vector<8x32xf32>
    %166 = arith.mulf %165, %164 : vector<8x32xf32>
    %167 = math.tanh %166 : vector<8x32xf32>
    %cst_103 = arith.constant 5.000000e-01 : f32
    %168 = vector.broadcast %cst_103 : f32 to vector<8x32xf32>
    %169 = arith.mulf %168, %167 : vector<8x32xf32>
    %cst_104 = arith.constant 5.000000e-01 : f32
    %170 = vector.broadcast %cst_104 : f32 to vector<8x32xf32>
    %171 = arith.addf %169, %170 : vector<8x32xf32>
    %c0_105 = arith.constant 0 : index
    %c0_106 = arith.constant 0 : index
    %c0_107 = arith.constant 0 : index
    %172 = vector.load %arg14[%c0_105, %c0_106, %c0_107] : memref<2x8x32xf32, #tpu.memory_space<vmem>>, vector<1x8x32xf32>
    %173 = vector.shape_cast %172 : vector<1x8x32xf32> to vector<8x32xf32>
    %174 = arith.mulf %161, %173 : vector<8x32xf32>
    %175 = arith.mulf %153, %163 : vector<8x32xf32>
    %176 = arith.addf %174, %175 : vector<8x32xf32>
    %177 = math.tanh %176 : vector<8x32xf32>
    %178 = arith.mulf %171, %177 : vector<8x32xf32>
    %c0_108 = arith.constant 0 : index
    %c0_109 = arith.constant 0 : index
    %c0_110 = arith.constant 0 : index
    %179 = vector.load %arg14[%c0_108, %c0_109, %c0_110] : memref<2x8x32xf32, #tpu.memory_space<vmem>>, vector<1x8x32xf32>
    %180 = vector.shape_cast %179 : vector<1x8x32xf32> to vector<8x32xf32>
    %181 = vector.shape_cast %176 : vector<8x32xf32> to vector<1x8x32xf32>
    tpu.vector_store %arg14[%c0_108, %c0_109, %c0_110], %181 {strides = array<i32>} : memref<2x8x32xf32, #tpu.memory_space<vmem>>, vector<1x8x32xf32>,
    %c0_111 = arith.constant 0 : index
    %c0_112 = arith.constant 0 : index
    %c32_113 = arith.constant 32 : index
    %182 = vector.load %arg13[%c0_111, %c0_112, %c32_113] : memref<2x8x64xf32, #tpu.memory_space<vmem>>, vector<1x8x32xf32>
    %183 = vector.shape_cast %182 : vector<1x8x32xf32> to vector<8x32xf32>
    %184 = vector.shape_cast %178 : vector<8x32xf32> to vector<1x8x32xf32>
    tpu.vector_store %arg13[%c0_111, %c0_112, %c32_113], %184 {strides = array<i32>} : memref<2x8x64xf32, #tpu.memory_space<vmem>>, vector<1x8x32xf32>,
    %c1_114 = arith.constant 1 : index
    %c0_115 = arith.constant 0 : index
    %c0_116 = arith.constant 0 : index
    %185 = vector.load %arg13[%c1_114, %c0_115, %c0_116] : memref<2x8x64xf32, #tpu.memory_space<vmem>>, vector<1x8x32xf32>
    %186 = vector.shape_cast %185 : vector<1x8x32xf32> to vector<8x32xf32>
    %187 = vector.shape_cast %178 : vector<8x32xf32> to vector<1x8x32xf32>
    tpu.vector_store %arg13[%c1_114, %c0_115, %c0_116], %187 {strides = array<i32>} : memref<2x8x64xf32, #tpu.memory_space<vmem>>, vector<1x8x32xf32>,
    %c1_117 = arith.constant 1 : index
    %c0_118 = arith.constant 0 : index
    %c0_119 = arith.constant 0 : index
    %188 = vector.load %arg13[%c1_117, %c0_118, %c0_119] : memref<2x8x64xf32, #tpu.memory_space<vmem>>, vector<1x8x64xf32>
    %189 = vector.shape_cast %188 : vector<1x8x64xf32> to vector<8x64xf32>
    %190 = arith.truncf %189 : vector<8x64xf32> to vector<8x64xbf16>
    %c1_120 = arith.constant 1 : index
    %c0_121 = arith.constant 0 : index
    %c0_122 = arith.constant 0 : index
    %191 = vector.load %arg4[%c1_120, %c0_121, %c0_122] : memref<2x64x128xbf16, #tpu.memory_space<vmem>>, vector<1x64x128xbf16>
    %192 = vector.shape_cast %191 : vector<1x64x128xbf16> to vector<64x128xbf16>
    %cst_123 = arith.constant dense<0.000000e+00> : vector<8x128xf32>
    %193 = tpu.matmul %190, %192, %cst_123 {dimension_numbers = #tpu.dot_dimension_numbers<[1], [0], [0], [1], [0, 0, 1, 1], [], []>} : vector<8x64xbf16>, vector<64x128xbf16>, vector<8x128xf32> -> vector<8x128xf32>
    %c1_124 = arith.constant 1 : index
    %c0_125 = arith.constant 0 : index
    %c0_126 = arith.constant 0 : index
    %194 = vector.load %arg5[%c1_124, %c0_125, %c0_126] : memref<2x1x128xf32, #tpu.memory_space<vmem>>, vector<1x1x128xf32>
    %195 = vector.shape_cast %194 : vector<1x1x128xf32> to vector<1x128xf32>
    %196 = vector.broadcast %195 : vector<1x128xf32> to vector<8x128xf32>
    %197 = arith.addf %193, %196 : vector<8x128xf32>
    %198 = vector.extract_strided_slice %197 {offsets = [0, 0], sizes = [8, 32], strides = [1, 1]} : vector<8x128xf32> to vector<8x32xf32>
    %cst_127 = arith.constant 5.000000e-01 : f32
    %199 = vector.broadcast %cst_127 : f32 to vector<8x32xf32>
    %200 = arith.mulf %199, %198 : vector<8x32xf32>
    %201 = math.tanh %200 : vector<8x32xf32>
    %cst_128 = arith.constant 5.000000e-01 : f32
    %202 = vector.broadcast %cst_128 : f32 to vector<8x32xf32>
    %203 = arith.mulf %202, %201 : vector<8x32xf32>
    %cst_129 = arith.constant 5.000000e-01 : f32
    %204 = vector.broadcast %cst_129 : f32 to vector<8x32xf32>
    %205 = arith.addf %203, %204 : vector<8x32xf32>
    %206 = vector.extract_strided_slice %197 {offsets = [0, 32], sizes = [8, 32], strides = [1, 1]} : vector<8x128xf32> to vector<8x32xf32>
    %cst_130 = arith.constant 5.000000e-01 : f32
    %207 = vector.broadcast %cst_130 : f32 to vector<8x32xf32>
    %208 = arith.mulf %207, %206 : vector<8x32xf32>
    %209 = math.tanh %208 : vector<8x32xf32>
    %cst_131 = arith.constant 5.000000e-01 : f32
    %210 = vector.broadcast %cst_131 : f32 to vector<8x32xf32>
    %211 = arith.mulf %210, %209 : vector<8x32xf32>
    %cst_132 = arith.constant 5.000000e-01 : f32
    %212 = vector.broadcast %cst_132 : f32 to vector<8x32xf32>
    %213 = arith.addf %211, %212 : vector<8x32xf32>
    %214 = vector.extract_strided_slice %197 {offsets = [0, 64], sizes = [8, 32], strides = [1, 1]} : vector<8x128xf32> to vector<8x32xf32>
    %215 = math.tanh %214 : vector<8x32xf32>
    %216 = vector.extract_strided_slice %197 {offsets = [0, 96], sizes = [8, 32], strides = [1, 1]} : vector<8x128xf32> to vector<8x32xf32>
    %cst_133 = arith.constant 5.000000e-01 : f32
    %217 = vector.broadcast %cst_133 : f32 to vector<8x32xf32>
    %218 = arith.mulf %217, %216 : vector<8x32xf32>
    %219 = math.tanh %218 : vector<8x32xf32>
    %cst_134 = arith.constant 5.000000e-01 : f32
    %220 = vector.broadcast %cst_134 : f32 to vector<8x32xf32>
    %221 = arith.mulf %220, %219 : vector<8x32xf32>
    %cst_135 = arith.constant 5.000000e-01 : f32
    %222 = vector.broadcast %cst_135 : f32 to vector<8x32xf32>
    %223 = arith.addf %221, %222 : vector<8x32xf32>
    %c1_136 = arith.constant 1 : index
    %c0_137 = arith.constant 0 : index
    %c0_138 = arith.constant 0 : index
    %224 = vector.load %arg14[%c1_136, %c0_137, %c0_138] : memref<2x8x32xf32, #tpu.memory_space<vmem>>, vector<1x8x32xf32>
    %225 = vector.shape_cast %224 : vector<1x8x32xf32> to vector<8x32xf32>
    %226 = arith.mulf %213, %225 : vector<8x32xf32>
    %227 = arith.mulf %205, %215 : vector<8x32xf32>
    %228 = arith.addf %226, %227 : vector<8x32xf32>
    %229 = math.tanh %228 : vector<8x32xf32>
    %230 = arith.mulf %223, %229 : vector<8x32xf32>
    %c1_139 = arith.constant 1 : index
    %c0_140 = arith.constant 0 : index
    %c0_141 = arith.constant 0 : index
    %231 = vector.load %arg14[%c1_139, %c0_140, %c0_141] : memref<2x8x32xf32, #tpu.memory_space<vmem>>, vector<1x8x32xf32>
    %232 = vector.shape_cast %231 : vector<1x8x32xf32> to vector<8x32xf32>
    %233 = vector.shape_cast %228 : vector<8x32xf32> to vector<1x8x32xf32>
    tpu.vector_store %arg14[%c1_139, %c0_140, %c0_141], %233 {strides = array<i32>} : memref<2x8x32xf32, #tpu.memory_space<vmem>>, vector<1x8x32xf32>,
    %c1_142 = arith.constant 1 : index
    %c0_143 = arith.constant 0 : index
    %c32_144 = arith.constant 32 : index
    %234 = vector.load %arg13[%c1_142, %c0_143, %c32_144] : memref<2x8x64xf32, #tpu.memory_space<vmem>>, vector<1x8x32xf32>
    %235 = vector.shape_cast %234 : vector<1x8x32xf32> to vector<8x32xf32>
    %236 = vector.shape_cast %230 : vector<8x32xf32> to vector<1x8x32xf32>
    tpu.vector_store %arg13[%c1_142, %c0_143, %c32_144], %236 {strides = array<i32>} : memref<2x8x64xf32, #tpu.memory_space<vmem>>, vector<1x8x32xf32>,
    %237 = arith.truncf %230 : vector<8x32xf32> to vector<8x32xbf16>
    %c0_145 = arith.constant 0 : index
    %c0_146 = arith.constant 0 : index
    %238 = vector.load %arg6[%c0_145, %c0_146] : memref<32x128xbf16, #tpu.memory_space<vmem>>, vector<32x128xbf16>
    %cst_147 = arith.constant dense<0.000000e+00> : vector<8x128xf32>
    %239 = tpu.matmul %237, %238, %cst_147 {dimension_numbers = #tpu.dot_dimension_numbers<[1], [0], [0], [1], [0, 0, 1, 1], [], []>} : vector<8x32xbf16>, vector<32x128xbf16>, vector<8x128xf32> -> vector<8x128xf32>
    %c0_148 = arith.constant 0 : index
    %c0_149 = arith.constant 0 : index
    %240 = vector.load %arg7[%c0_148, %c0_149] : memref<1x128xf32, #tpu.memory_space<vmem>>, vector<1x128xf32>
    %241 = vector.broadcast %240 : vector<1x128xf32> to vector<8x128xf32>
    %242 = arith.addf %239, %241 : vector<8x128xf32>
    %243 = math.tanh %242 : vector<8x128xf32>
    %c1_150 = arith.constant 1 : index
    %c0_151 = arith.constant 0 : index
    %c0_152 = arith.constant 0 : index
    %244 = vector.load %arg10[%c1_150, %c0_151, %c0_152] : memref<8x8x128xf32, #tpu.memory_space<vmem>>, vector<1x8x128xf32>
    %245 = vector.shape_cast %244 : vector<1x8x128xf32> to vector<8x128xf32>
    %246 = vector.shape_cast %243 : vector<8x128xf32> to vector<1x8x128xf32>
    tpu.vector_store %arg10[%c1_150, %c0_151, %c0_152], %246 {strides = array<i32>} : memref<8x8x128xf32, #tpu.memory_space<vmem>>, vector<1x8x128xf32>,
    %c2 = arith.constant 2 : index
    %c0_153 = arith.constant 0 : index
    %c0_154 = arith.constant 0 : index
    %247 = vector.load %arg1[%c2, %c0_153, %c0_154] : memref<8x8x16xf32, #tpu.memory_space<vmem>>, vector<1x8x16xf32>
    %248 = vector.shape_cast %247 : vector<1x8x16xf32> to vector<8x16xf32>
    %249 = arith.truncf %248 : vector<8x16xf32> to vector<8x16xbf16>
    %c0_155 = arith.constant 0 : index
    %c0_156 = arith.constant 0 : index
    %250 = vector.load %arg2[%c0_155, %c0_156] : memref<16x32xbf16, #tpu.memory_space<vmem>>, vector<16x32xbf16>
    %cst_157 = arith.constant dense<0.000000e+00> : vector<8x32xf32>
    %251 = tpu.matmul %249, %250, %cst_157 {dimension_numbers = #tpu.dot_dimension_numbers<[1], [0], [0], [1], [0, 0, 1, 1], [], []>} : vector<8x16xbf16>, vector<16x32xbf16>, vector<8x32xf32> -> vector<8x32xf32>
    %c0_158 = arith.constant 0 : index
    %c0_159 = arith.constant 0 : index
    %252 = vector.load %arg3[%c0_158, %c0_159] : memref<1x32xf32, #tpu.memory_space<vmem>>, vector<1x32xf32>
    %253 = vector.broadcast %252 : vector<1x32xf32> to vector<8x32xf32>
    %254 = arith.addf %251, %253 : vector<8x32xf32>
    %c0_160 = arith.constant 0 : index
    %c0_161 = arith.constant 0 : index
    %c0_162 = arith.constant 0 : index
    %255 = vector.load %arg13[%c0_160, %c0_161, %c0_162] : memref<2x8x64xf32, #tpu.memory_space<vmem>>, vector<1x8x32xf32>
    %256 = vector.shape_cast %255 : vector<1x8x32xf32> to vector<8x32xf32>
    %257 = vector.shape_cast %254 : vector<8x32xf32> to vector<1x8x32xf32>
    tpu.vector_store %arg13[%c0_160, %c0_161, %c0_162], %257 {strides = array<i32>} : memref<2x8x64xf32, #tpu.memory_space<vmem>>, vector<1x8x32xf32>,
    %c0_163 = arith.constant 0 : index
    %c0_164 = arith.constant 0 : index
    %c0_165 = arith.constant 0 : index
    %258 = vector.load %arg13[%c0_163, %c0_164, %c0_165] : memref<2x8x64xf32, #tpu.memory_space<vmem>>, vector<1x8x64xf32>
    %259 = vector.shape_cast %258 : vector<1x8x64xf32> to vector<8x64xf32>
    %260 = arith.truncf %259 : vector<8x64xf32> to vector<8x64xbf16>
    %c0_166 = arith.constant 0 : index
    %c0_167 = arith.constant 0 : index
    %c0_168 = arith.constant 0 : index
    %261 = vector.load %arg4[%c0_166, %c0_167, %c0_168] : memref<2x64x128xbf16, #tpu.memory_space<vmem>>, vector<1x64x128xbf16>
    %262 = vector.shape_cast %261 : vector<1x64x128xbf16> to vector<64x128xbf16>
    %cst_169 = arith.constant dense<0.000000e+00> : vector<8x128xf32>
    %263 = tpu.matmul %260, %262, %cst_169 {dimension_numbers = #tpu.dot_dimension_numbers<[1], [0], [0], [1], [0, 0, 1, 1], [], []>} : vector<8x64xbf16>, vector<64x128xbf16>, vector<8x128xf32> -> vector<8x128xf32>
    %c0_170 = arith.constant 0 : index
    %c0_171 = arith.constant 0 : index
    %c0_172 = arith.constant 0 : index
    %264 = vector.load %arg5[%c0_170, %c0_171, %c0_172] : memref<2x1x128xf32, #tpu.memory_space<vmem>>, vector<1x1x128xf32>
    %265 = vector.shape_cast %264 : vector<1x1x128xf32> to vector<1x128xf32>
    %266 = vector.broadcast %265 : vector<1x128xf32> to vector<8x128xf32>
    %267 = arith.addf %263, %266 : vector<8x128xf32>
    %268 = vector.extract_strided_slice %267 {offsets = [0, 0], sizes = [8, 32], strides = [1, 1]} : vector<8x128xf32> to vector<8x32xf32>
    %cst_173 = arith.constant 5.000000e-01 : f32
    %269 = vector.broadcast %cst_173 : f32 to vector<8x32xf32>
    %270 = arith.mulf %269, %268 : vector<8x32xf32>
    %271 = math.tanh %270 : vector<8x32xf32>
    %cst_174 = arith.constant 5.000000e-01 : f32
    %272 = vector.broadcast %cst_174 : f32 to vector<8x32xf32>
    %273 = arith.mulf %272, %271 : vector<8x32xf32>
    %cst_175 = arith.constant 5.000000e-01 : f32
    %274 = vector.broadcast %cst_175 : f32 to vector<8x32xf32>
    %275 = arith.addf %273, %274 : vector<8x32xf32>
    %276 = vector.extract_strided_slice %267 {offsets = [0, 32], sizes = [8, 32], strides = [1, 1]} : vector<8x128xf32> to vector<8x32xf32>
    %cst_176 = arith.constant 5.000000e-01 : f32
    %277 = vector.broadcast %cst_176 : f32 to vector<8x32xf32>
    %278 = arith.mulf %277, %276 : vector<8x32xf32>
    %279 = math.tanh %278 : vector<8x32xf32>
    %cst_177 = arith.constant 5.000000e-01 : f32
    %280 = vector.broadcast %cst_177 : f32 to vector<8x32xf32>
    %281 = arith.mulf %280, %279 : vector<8x32xf32>
    %cst_178 = arith.constant 5.000000e-01 : f32
    %282 = vector.broadcast %cst_178 : f32 to vector<8x32xf32>
    %283 = arith.addf %281, %282 : vector<8x32xf32>
    %284 = vector.extract_strided_slice %267 {offsets = [0, 64], sizes = [8, 32], strides = [1, 1]} : vector<8x128xf32> to vector<8x32xf32>
    %285 = math.tanh %284 : vector<8x32xf32>
    %286 = vector.extract_strided_slice %267 {offsets = [0, 96], sizes = [8, 32], strides = [1, 1]} : vector<8x128xf32> to vector<8x32xf32>
    %cst_179 = arith.constant 5.000000e-01 : f32
    %287 = vector.broadcast %cst_179 : f32 to vector<8x32xf32>
    %288 = arith.mulf %287, %286 : vector<8x32xf32>
    %289 = math.tanh %288 : vector<8x32xf32>
    %cst_180 = arith.constant 5.000000e-01 : f32
    %290 = vector.broadcast %cst_180 : f32 to vector<8x32xf32>
    %291 = arith.mulf %290, %289 : vector<8x32xf32>
    %cst_181 = arith.constant 5.000000e-01 : f32
    %292 = vector.broadcast %cst_181 : f32 to vector<8x32xf32>
    %293 = arith.addf %291, %292 : vector<8x32xf32>
    %c0_182 = arith.constant 0 : index
    %c0_183 = arith.constant 0 : index
    %c0_184 = arith.constant 0 : index
    %294 = vector.load %arg14[%c0_182, %c0_183, %c0_184] : memref<2x8x32xf32, #tpu.memory_space<vmem>>, vector<1x8x32xf32>
    %295 = vector.shape_cast %294 : vector<1x8x32xf32> to vector<8x32xf32>
    %296 = arith.mulf %283, %295 : vector<8x32xf32>
    %297 = arith.mulf %275, %285 : vector<8x32xf32>
    %298 = arith.addf %296, %297 : vector<8x32xf32>
    %299 = math.tanh %298 : vector<8x32xf32>
    %300 = arith.mulf %293, %299 : vector<8x32xf32>
    %c0_185 = arith.constant 0 : index
    %c0_186 = arith.constant 0 : index
    %c0_187 = arith.constant 0 : index
    %301 = vector.load %arg14[%c0_185, %c0_186, %c0_187] : memref<2x8x32xf32, #tpu.memory_space<vmem>>, vector<1x8x32xf32>
    %302 = vector.shape_cast %301 : vector<1x8x32xf32> to vector<8x32xf32>
    %303 = vector.shape_cast %298 : vector<8x32xf32> to vector<1x8x32xf32>
    tpu.vector_store %arg14[%c0_185, %c0_186, %c0_187], %303 {strides = array<i32>} : memref<2x8x32xf32, #tpu.memory_space<vmem>>, vector<1x8x32xf32>,
    %c0_188 = arith.constant 0 : index
    %c0_189 = arith.constant 0 : index
    %c32_190 = arith.constant 32 : index
    %304 = vector.load %arg13[%c0_188, %c0_189, %c32_190] : memref<2x8x64xf32, #tpu.memory_space<vmem>>, vector<1x8x32xf32>
    %305 = vector.shape_cast %304 : vector<1x8x32xf32> to vector<8x32xf32>
    %306 = vector.shape_cast %300 : vector<8x32xf32> to vector<1x8x32xf32>
    tpu.vector_store %arg13[%c0_188, %c0_189, %c32_190], %306 {strides = array<i32>} : memref<2x8x64xf32, #tpu.memory_space<vmem>>, vector<1x8x32xf32>,
    %c1_191 = arith.constant 1 : index
    %c0_192 = arith.constant 0 : index
    %c0_193 = arith.constant 0 : index
    %307 = vector.load %arg13[%c1_191, %c0_192, %c0_193] : memref<2x8x64xf32, #tpu.memory_space<vmem>>, vector<1x8x32xf32>
    %308 = vector.shape_cast %307 : vector<1x8x32xf32> to vector<8x32xf32>
    %309 = vector.shape_cast %300 : vector<8x32xf32> to vector<1x8x32xf32>
    tpu.vector_store %arg13[%c1_191, %c0_192, %c0_193], %309 {strides = array<i32>} : memref<2x8x64xf32, #tpu.memory_space<vmem>>, vector<1x8x32xf32>,
    %c1_194 = arith.constant 1 : index
    %c0_195 = arith.constant 0 : index
    %c0_196 = arith.constant 0 : index
    %310 = vector.load %arg13[%c1_194, %c0_195, %c0_196] : memref<2x8x64xf32, #tpu.memory_space<vmem>>, vector<1x8x64xf32>
    %311 = vector.shape_cast %310 : vector<1x8x64xf32> to vector<8x64xf32>
    %312 = arith.truncf %311 : vector<8x64xf32> to vector<8x64xbf16>
    %c1_197 = arith.constant 1 : index
    %c0_198 = arith.constant 0 : index
    %c0_199 = arith.constant 0 : index
    %313 = vector.load %arg4[%c1_197, %c0_198, %c0_199] : memref<2x64x128xbf16, #tpu.memory_space<vmem>>, vector<1x64x128xbf16>
    %314 = vector.shape_cast %313 : vector<1x64x128xbf16> to vector<64x128xbf16>
    %cst_200 = arith.constant dense<0.000000e+00> : vector<8x128xf32>
    %315 = tpu.matmul %312, %314, %cst_200 {dimension_numbers = #tpu.dot_dimension_numbers<[1], [0], [0], [1], [0, 0, 1, 1], [], []>} : vector<8x64xbf16>, vector<64x128xbf16>, vector<8x128xf32> -> vector<8x128xf32>
    %c1_201 = arith.constant 1 : index
    %c0_202 = arith.constant 0 : index
    %c0_203 = arith.constant 0 : index
    %316 = vector.load %arg5[%c1_201, %c0_202, %c0_203] : memref<2x1x128xf32, #tpu.memory_space<vmem>>, vector<1x1x128xf32>
    %317 = vector.shape_cast %316 : vector<1x1x128xf32> to vector<1x128xf32>
    %318 = vector.broadcast %317 : vector<1x128xf32> to vector<8x128xf32>
    %319 = arith.addf %315, %318 : vector<8x128xf32>
    %320 = vector.extract_strided_slice %319 {offsets = [0, 0], sizes = [8, 32], strides = [1, 1]} : vector<8x128xf32> to vector<8x32xf32>
    %cst_204 = arith.constant 5.000000e-01 : f32
    %321 = vector.broadcast %cst_204 : f32 to vector<8x32xf32>
    %322 = arith.mulf %321, %320 : vector<8x32xf32>
    %323 = math.tanh %322 : vector<8x32xf32>
    %cst_205 = arith.constant 5.000000e-01 : f32
    %324 = vector.broadcast %cst_205 : f32 to vector<8x32xf32>
    %325 = arith.mulf %324, %323 : vector<8x32xf32>
    %cst_206 = arith.constant 5.000000e-01 : f32
    %326 = vector.broadcast %cst_206 : f32 to vector<8x32xf32>
    %327 = arith.addf %325, %326 : vector<8x32xf32>
    %328 = vector.extract_strided_slice %319 {offsets = [0, 32], sizes = [8, 32], strides = [1, 1]} : vector<8x128xf32> to vector<8x32xf32>
    %cst_207 = arith.constant 5.000000e-01 : f32
    %329 = vector.broadcast %cst_207 : f32 to vector<8x32xf32>
    %330 = arith.mulf %329, %328 : vector<8x32xf32>
    %331 = math.tanh %330 : vector<8x32xf32>
    %cst_208 = arith.constant 5.000000e-01 : f32
    %332 = vector.broadcast %cst_208 : f32 to vector<8x32xf32>
    %333 = arith.mulf %332, %331 : vector<8x32xf32>
    %cst_209 = arith.constant 5.000000e-01 : f32
    %334 = vector.broadcast %cst_209 : f32 to vector<8x32xf32>
    %335 = arith.addf %333, %334 : vector<8x32xf32>
    %336 = vector.extract_strided_slice %319 {offsets = [0, 64], sizes = [8, 32], strides = [1, 1]} : vector<8x128xf32> to vector<8x32xf32>
    %337 = math.tanh %336 : vector<8x32xf32>
    %338 = vector.extract_strided_slice %319 {offsets = [0, 96], sizes = [8, 32], strides = [1, 1]} : vector<8x128xf32> to vector<8x32xf32>
    %cst_210 = arith.constant 5.000000e-01 : f32
    %339 = vector.broadcast %cst_210 : f32 to vector<8x32xf32>
    %340 = arith.mulf %339, %338 : vector<8x32xf32>
    %341 = math.tanh %340 : vector<8x32xf32>
    %cst_211 = arith.constant 5.000000e-01 : f32
    %342 = vector.broadcast %cst_211 : f32 to vector<8x32xf32>
    %343 = arith.mulf %342, %341 : vector<8x32xf32>
    %cst_212 = arith.constant 5.000000e-01 : f32
    %344 = vector.broadcast %cst_212 : f32 to vector<8x32xf32>
    %345 = arith.addf %343, %344 : vector<8x32xf32>
    %c1_213 = arith.constant 1 : index
    %c0_214 = arith.constant 0 : index
    %c0_215 = arith.constant 0 : index
    %346 = vector.load %arg14[%c1_213, %c0_214, %c0_215] : memref<2x8x32xf32, #tpu.memory_space<vmem>>, vector<1x8x32xf32>
    %347 = vector.shape_cast %346 : vector<1x8x32xf32> to vector<8x32xf32>
    %348 = arith.mulf %335, %347 : vector<8x32xf32>
    %349 = arith.mulf %327, %337 : vector<8x32xf32>
    %350 = arith.addf %348, %349 : vector<8x32xf32>
    %351 = math.tanh %350 : vector<8x32xf32>
    %352 = arith.mulf %345, %351 : vector<8x32xf32>
    %c1_216 = arith.constant 1 : index
    %c0_217 = arith.constant 0 : index
    %c0_218 = arith.constant 0 : index
    %353 = vector.load %arg14[%c1_216, %c0_217, %c0_218] : memref<2x8x32xf32, #tpu.memory_space<vmem>>, vector<1x8x32xf32>
    %354 = vector.shape_cast %353 : vector<1x8x32xf32> to vector<8x32xf32>
    %355 = vector.shape_cast %350 : vector<8x32xf32> to vector<1x8x32xf32>
    tpu.vector_store %arg14[%c1_216, %c0_217, %c0_218], %355 {strides = array<i32>} : memref<2x8x32xf32, #tpu.memory_space<vmem>>, vector<1x8x32xf32>,
    %c1_219 = arith.constant 1 : index
    %c0_220 = arith.constant 0 : index
    %c32_221 = arith.constant 32 : index
    %356 = vector.load %arg13[%c1_219, %c0_220, %c32_221] : memref<2x8x64xf32, #tpu.memory_space<vmem>>, vector<1x8x32xf32>
    %357 = vector.shape_cast %356 : vector<1x8x32xf32> to vector<8x32xf32>
    %358 = vector.shape_cast %352 : vector<8x32xf32> to vector<1x8x32xf32>
    tpu.vector_store %arg13[%c1_219, %c0_220, %c32_221], %358 {strides = array<i32>} : memref<2x8x64xf32, #tpu.memory_space<vmem>>, vector<1x8x32xf32>,
    %359 = arith.truncf %352 : vector<8x32xf32> to vector<8x32xbf16>
    %c0_222 = arith.constant 0 : index
    %c0_223 = arith.constant 0 : index
    %360 = vector.load %arg6[%c0_222, %c0_223] : memref<32x128xbf16, #tpu.memory_space<vmem>>, vector<32x128xbf16>
    %cst_224 = arith.constant dense<0.000000e+00> : vector<8x128xf32>
    %361 = tpu.matmul %359, %360, %cst_224 {dimension_numbers = #tpu.dot_dimension_numbers<[1], [0], [0], [1], [0, 0, 1, 1], [], []>} : vector<8x32xbf16>, vector<32x128xbf16>, vector<8x128xf32> -> vector<8x128xf32>
    %c0_225 = arith.constant 0 : index
    %c0_226 = arith.constant 0 : index
    %362 = vector.load %arg7[%c0_225, %c0_226] : memref<1x128xf32, #tpu.memory_space<vmem>>, vector<1x128xf32>
    %363 = vector.broadcast %362 : vector<1x128xf32> to vector<8x128xf32>
    %364 = arith.addf %361, %363 : vector<8x128xf32>
    %365 = math.tanh %364 : vector<8x128xf32>
    %c2_227 = arith.constant 2 : index
    %c0_228 = arith.constant 0 : index
    %c0_229 = arith.constant 0 : index
    %366 = vector.load %arg10[%c2_227, %c0_228, %c0_229] : memref<8x8x128xf32, #tpu.memory_space<vmem>>, vector<1x8x128xf32>
    %367 = vector.shape_cast %366 : vector<1x8x128xf32> to vector<8x128xf32>
    %368 = vector.shape_cast %365 : vector<8x128xf32> to vector<1x8x128xf32>
    tpu.vector_store %arg10[%c2_227, %c0_228, %c0_229], %368 {strides = array<i32>} : memref<8x8x128xf32, #tpu.memory_space<vmem>>, vector<1x8x128xf32>,
    %c3 = arith.constant 3 : index
    %c0_230 = arith.constant 0 : index
    %c0_231 = arith.constant 0 : index
    %369 = vector.load %arg1[%c3, %c0_230, %c0_231] : memref<8x8x16xf32, #tpu.memory_space<vmem>>, vector<1x8x16xf32>
    %370 = vector.shape_cast %369 : vector<1x8x16xf32> to vector<8x16xf32>
    %371 = arith.truncf %370 : vector<8x16xf32> to vector<8x16xbf16>
    %c0_232 = arith.constant 0 : index
    %c0_233 = arith.constant 0 : index
    %372 = vector.load %arg2[%c0_232, %c0_233] : memref<16x32xbf16, #tpu.memory_space<vmem>>, vector<16x32xbf16>
    %cst_234 = arith.constant dense<0.000000e+00> : vector<8x32xf32>
    %373 = tpu.matmul %371, %372, %cst_234 {dimension_numbers = #tpu.dot_dimension_numbers<[1], [0], [0], [1], [0, 0, 1, 1], [], []>} : vector<8x16xbf16>, vector<16x32xbf16>, vector<8x32xf32> -> vector<8x32xf32>
    %c0_235 = arith.constant 0 : index
    %c0_236 = arith.constant 0 : index
    %374 = vector.load %arg3[%c0_235, %c0_236] : memref<1x32xf32, #tpu.memory_space<vmem>>, vector<1x32xf32>
    %375 = vector.broadcast %374 : vector<1x32xf32> to vector<8x32xf32>
    %376 = arith.addf %373, %375 : vector<8x32xf32>
    %c0_237 = arith.constant 0 : index
    %c0_238 = arith.constant 0 : index
    %c0_239 = arith.constant 0 : index
    %377 = vector.load %arg13[%c0_237, %c0_238, %c0_239] : memref<2x8x64xf32, #tpu.memory_space<vmem>>, vector<1x8x32xf32>
    %378 = vector.shape_cast %377 : vector<1x8x32xf32> to vector<8x32xf32>
    %379 = vector.shape_cast %376 : vector<8x32xf32> to vector<1x8x32xf32>
    tpu.vector_store %arg13[%c0_237, %c0_238, %c0_239], %379 {strides = array<i32>} : memref<2x8x64xf32, #tpu.memory_space<vmem>>, vector<1x8x32xf32>,
    %c0_240 = arith.constant 0 : index
    %c0_241 = arith.constant 0 : index
    %c0_242 = arith.constant 0 : index
    %380 = vector.load %arg13[%c0_240, %c0_241, %c0_242] : memref<2x8x64xf32, #tpu.memory_space<vmem>>, vector<1x8x64xf32>
    %381 = vector.shape_cast %380 : vector<1x8x64xf32> to vector<8x64xf32>
    %382 = arith.truncf %381 : vector<8x64xf32> to vector<8x64xbf16>
    %c0_243 = arith.constant 0 : index
    %c0_244 = arith.constant 0 : index
    %c0_245 = arith.constant 0 : index
    %383 = vector.load %arg4[%c0_243, %c0_244, %c0_245] : memref<2x64x128xbf16, #tpu.memory_space<vmem>>, vector<1x64x128xbf16>
    %384 = vector.shape_cast %383 : vector<1x64x128xbf16> to vector<64x128xbf16>
    %cst_246 = arith.constant dense<0.000000e+00> : vector<8x128xf32>
    %385 = tpu.matmul %382, %384, %cst_246 {dimension_numbers = #tpu.dot_dimension_numbers<[1], [0], [0], [1], [0, 0, 1, 1], [], []>} : vector<8x64xbf16>, vector<64x128xbf16>, vector<8x128xf32> -> vector<8x128xf32>
    %c0_247 = arith.constant 0 : index
    %c0_248 = arith.constant 0 : index
    %c0_249 = arith.constant 0 : index
    %386 = vector.load %arg5[%c0_247, %c0_248, %c0_249] : memref<2x1x128xf32, #tpu.memory_space<vmem>>, vector<1x1x128xf32>
    %387 = vector.shape_cast %386 : vector<1x1x128xf32> to vector<1x128xf32>
    %388 = vector.broadcast %387 : vector<1x128xf32> to vector<8x128xf32>
    %389 = arith.addf %385, %388 : vector<8x128xf32>
    %390 = vector.extract_strided_slice %389 {offsets = [0, 0], sizes = [8, 32], strides = [1, 1]} : vector<8x128xf32> to vector<8x32xf32>
    %cst_250 = arith.constant 5.000000e-01 : f32
    %391 = vector.broadcast %cst_250 : f32 to vector<8x32xf32>
    %392 = arith.mulf %391, %390 : vector<8x32xf32>
    %393 = math.tanh %392 : vector<8x32xf32>
    %cst_251 = arith.constant 5.000000e-01 : f32
    %394 = vector.broadcast %cst_251 : f32 to vector<8x32xf32>
    %395 = arith.mulf %394, %393 : vector<8x32xf32>
    %cst_252 = arith.constant 5.000000e-01 : f32
    %396 = vector.broadcast %cst_252 : f32 to vector<8x32xf32>
    %397 = arith.addf %395, %396 : vector<8x32xf32>
    %398 = vector.extract_strided_slice %389 {offsets = [0, 32], sizes = [8, 32], strides = [1, 1]} : vector<8x128xf32> to vector<8x32xf32>
    %cst_253 = arith.constant 5.000000e-01 : f32
    %399 = vector.broadcast %cst_253 : f32 to vector<8x32xf32>
    %400 = arith.mulf %399, %398 : vector<8x32xf32>
    %401 = math.tanh %400 : vector<8x32xf32>
    %cst_254 = arith.constant 5.000000e-01 : f32
    %402 = vector.broadcast %cst_254 : f32 to vector<8x32xf32>
    %403 = arith.mulf %402, %401 : vector<8x32xf32>
    %cst_255 = arith.constant 5.000000e-01 : f32
    %404 = vector.broadcast %cst_255 : f32 to vector<8x32xf32>
    %405 = arith.addf %403, %404 : vector<8x32xf32>
    %406 = vector.extract_strided_slice %389 {offsets = [0, 64], sizes = [8, 32], strides = [1, 1]} : vector<8x128xf32> to vector<8x32xf32>
    %407 = math.tanh %406 : vector<8x32xf32>
    %408 = vector.extract_strided_slice %389 {offsets = [0, 96], sizes = [8, 32], strides = [1, 1]} : vector<8x128xf32> to vector<8x32xf32>
    %cst_256 = arith.constant 5.000000e-01 : f32
    %409 = vector.broadcast %cst_256 : f32 to vector<8x32xf32>
    %410 = arith.mulf %409, %408 : vector<8x32xf32>
    %411 = math.tanh %410 : vector<8x32xf32>
    %cst_257 = arith.constant 5.000000e-01 : f32
    %412 = vector.broadcast %cst_257 : f32 to vector<8x32xf32>
    %413 = arith.mulf %412, %411 : vector<8x32xf32>
    %cst_258 = arith.constant 5.000000e-01 : f32
    %414 = vector.broadcast %cst_258 : f32 to vector<8x32xf32>
    %415 = arith.addf %413, %414 : vector<8x32xf32>
    %c0_259 = arith.constant 0 : index
    %c0_260 = arith.constant 0 : index
    %c0_261 = arith.constant 0 : index
    %416 = vector.load %arg14[%c0_259, %c0_260, %c0_261] : memref<2x8x32xf32, #tpu.memory_space<vmem>>, vector<1x8x32xf32>
    %417 = vector.shape_cast %416 : vector<1x8x32xf32> to vector<8x32xf32>
    %418 = arith.mulf %405, %417 : vector<8x32xf32>
    %419 = arith.mulf %397, %407 : vector<8x32xf32>
    %420 = arith.addf %418, %419 : vector<8x32xf32>
    %421 = math.tanh %420 : vector<8x32xf32>
    %422 = arith.mulf %415, %421 : vector<8x32xf32>
    %c0_262 = arith.constant 0 : index
    %c0_263 = arith.constant 0 : index
    %c0_264 = arith.constant 0 : index
    %423 = vector.load %arg14[%c0_262, %c0_263, %c0_264] : memref<2x8x32xf32, #tpu.memory_space<vmem>>, vector<1x8x32xf32>
    %424 = vector.shape_cast %423 : vector<1x8x32xf32> to vector<8x32xf32>
    %425 = vector.shape_cast %420 : vector<8x32xf32> to vector<1x8x32xf32>
    tpu.vector_store %arg14[%c0_262, %c0_263, %c0_264], %425 {strides = array<i32>} : memref<2x8x32xf32, #tpu.memory_space<vmem>>, vector<1x8x32xf32>,
    %c0_265 = arith.constant 0 : index
    %c0_266 = arith.constant 0 : index
    %c32_267 = arith.constant 32 : index
    %426 = vector.load %arg13[%c0_265, %c0_266, %c32_267] : memref<2x8x64xf32, #tpu.memory_space<vmem>>, vector<1x8x32xf32>
    %427 = vector.shape_cast %426 : vector<1x8x32xf32> to vector<8x32xf32>
    %428 = vector.shape_cast %422 : vector<8x32xf32> to vector<1x8x32xf32>
    tpu.vector_store %arg13[%c0_265, %c0_266, %c32_267], %428 {strides = array<i32>} : memref<2x8x64xf32, #tpu.memory_space<vmem>>, vector<1x8x32xf32>,
    %c1_268 = arith.constant 1 : index
    %c0_269 = arith.constant 0 : index
    %c0_270 = arith.constant 0 : index
    %429 = vector.load %arg13[%c1_268, %c0_269, %c0_270] : memref<2x8x64xf32, #tpu.memory_space<vmem>>, vector<1x8x32xf32>
    %430 = vector.shape_cast %429 : vector<1x8x32xf32> to vector<8x32xf32>
    %431 = vector.shape_cast %422 : vector<8x32xf32> to vector<1x8x32xf32>
    tpu.vector_store %arg13[%c1_268, %c0_269, %c0_270], %431 {strides = array<i32>} : memref<2x8x64xf32, #tpu.memory_space<vmem>>, vector<1x8x32xf32>,
    %c1_271 = arith.constant 1 : index
    %c0_272 = arith.constant 0 : index
    %c0_273 = arith.constant 0 : index
    %432 = vector.load %arg13[%c1_271, %c0_272, %c0_273] : memref<2x8x64xf32, #tpu.memory_space<vmem>>, vector<1x8x64xf32>
    %433 = vector.shape_cast %432 : vector<1x8x64xf32> to vector<8x64xf32>
    %434 = arith.truncf %433 : vector<8x64xf32> to vector<8x64xbf16>
    %c1_274 = arith.constant 1 : index
    %c0_275 = arith.constant 0 : index
    %c0_276 = arith.constant 0 : index
    %435 = vector.load %arg4[%c1_274, %c0_275, %c0_276] : memref<2x64x128xbf16, #tpu.memory_space<vmem>>, vector<1x64x128xbf16>
    %436 = vector.shape_cast %435 : vector<1x64x128xbf16> to vector<64x128xbf16>
    %cst_277 = arith.constant dense<0.000000e+00> : vector<8x128xf32>
    %437 = tpu.matmul %434, %436, %cst_277 {dimension_numbers = #tpu.dot_dimension_numbers<[1], [0], [0], [1], [0, 0, 1, 1], [], []>} : vector<8x64xbf16>, vector<64x128xbf16>, vector<8x128xf32> -> vector<8x128xf32>
    %c1_278 = arith.constant 1 : index
    %c0_279 = arith.constant 0 : index
    %c0_280 = arith.constant 0 : index
    %438 = vector.load %arg5[%c1_278, %c0_279, %c0_280] : memref<2x1x128xf32, #tpu.memory_space<vmem>>, vector<1x1x128xf32>
    %439 = vector.shape_cast %438 : vector<1x1x128xf32> to vector<1x128xf32>
    %440 = vector.broadcast %439 : vector<1x128xf32> to vector<8x128xf32>
    %441 = arith.addf %437, %440 : vector<8x128xf32>
    %442 = vector.extract_strided_slice %441 {offsets = [0, 0], sizes = [8, 32], strides = [1, 1]} : vector<8x128xf32> to vector<8x32xf32>
    %cst_281 = arith.constant 5.000000e-01 : f32
    %443 = vector.broadcast %cst_281 : f32 to vector<8x32xf32>
    %444 = arith.mulf %443, %442 : vector<8x32xf32>
    %445 = math.tanh %444 : vector<8x32xf32>
    %cst_282 = arith.constant 5.000000e-01 : f32
    %446 = vector.broadcast %cst_282 : f32 to vector<8x32xf32>
    %447 = arith.mulf %446, %445 : vector<8x32xf32>
    %cst_283 = arith.constant 5.000000e-01 : f32
    %448 = vector.broadcast %cst_283 : f32 to vector<8x32xf32>
    %449 = arith.addf %447, %448 : vector<8x32xf32>
    %450 = vector.extract_strided_slice %441 {offsets = [0, 32], sizes = [8, 32], strides = [1, 1]} : vector<8x128xf32> to vector<8x32xf32>
    %cst_284 = arith.constant 5.000000e-01 : f32
    %451 = vector.broadcast %cst_284 : f32 to vector<8x32xf32>
    %452 = arith.mulf %451, %450 : vector<8x32xf32>
    %453 = math.tanh %452 : vector<8x32xf32>
    %cst_285 = arith.constant 5.000000e-01 : f32
    %454 = vector.broadcast %cst_285 : f32 to vector<8x32xf32>
    %455 = arith.mulf %454, %453 : vector<8x32xf32>
    %cst_286 = arith.constant 5.000000e-01 : f32
    %456 = vector.broadcast %cst_286 : f32 to vector<8x32xf32>
    %457 = arith.addf %455, %456 : vector<8x32xf32>
    %458 = vector.extract_strided_slice %441 {offsets = [0, 64], sizes = [8, 32], strides = [1, 1]} : vector<8x128xf32> to vector<8x32xf32>
    %459 = math.tanh %458 : vector<8x32xf32>
    %460 = vector.extract_strided_slice %441 {offsets = [0, 96], sizes = [8, 32], strides = [1, 1]} : vector<8x128xf32> to vector<8x32xf32>
    %cst_287 = arith.constant 5.000000e-01 : f32
    %461 = vector.broadcast %cst_287 : f32 to vector<8x32xf32>
    %462 = arith.mulf %461, %460 : vector<8x32xf32>
    %463 = math.tanh %462 : vector<8x32xf32>
    %cst_288 = arith.constant 5.000000e-01 : f32
    %464 = vector.broadcast %cst_288 : f32 to vector<8x32xf32>
    %465 = arith.mulf %464, %463 : vector<8x32xf32>
    %cst_289 = arith.constant 5.000000e-01 : f32
    %466 = vector.broadcast %cst_289 : f32 to vector<8x32xf32>
    %467 = arith.addf %465, %466 : vector<8x32xf32>
    %c1_290 = arith.constant 1 : index
    %c0_291 = arith.constant 0 : index
    %c0_292 = arith.constant 0 : index
    %468 = vector.load %arg14[%c1_290, %c0_291, %c0_292] : memref<2x8x32xf32, #tpu.memory_space<vmem>>, vector<1x8x32xf32>
    %469 = vector.shape_cast %468 : vector<1x8x32xf32> to vector<8x32xf32>
    %470 = arith.mulf %457, %469 : vector<8x32xf32>
    %471 = arith.mulf %449, %459 : vector<8x32xf32>
    %472 = arith.addf %470, %471 : vector<8x32xf32>
    %473 = math.tanh %472 : vector<8x32xf32>
    %474 = arith.mulf %467, %473 : vector<8x32xf32>
    %c1_293 = arith.constant 1 : index
    %c0_294 = arith.constant 0 : index
    %c0_295 = arith.constant 0 : index
    %475 = vector.load %arg14[%c1_293, %c0_294, %c0_295] : memref<2x8x32xf32, #tpu.memory_space<vmem>>, vector<1x8x32xf32>
    %476 = vector.shape_cast %475 : vector<1x8x32xf32> to vector<8x32xf32>
    %477 = vector.shape_cast %472 : vector<8x32xf32> to vector<1x8x32xf32>
    tpu.vector_store %arg14[%c1_293, %c0_294, %c0_295], %477 {strides = array<i32>} : memref<2x8x32xf32, #tpu.memory_space<vmem>>, vector<1x8x32xf32>,
    %c1_296 = arith.constant 1 : index
    %c0_297 = arith.constant 0 : index
    %c32_298 = arith.constant 32 : index
    %478 = vector.load %arg13[%c1_296, %c0_297, %c32_298] : memref<2x8x64xf32, #tpu.memory_space<vmem>>, vector<1x8x32xf32>
    %479 = vector.shape_cast %478 : vector<1x8x32xf32> to vector<8x32xf32>
    %480 = vector.shape_cast %474 : vector<8x32xf32> to vector<1x8x32xf32>
    tpu.vector_store %arg13[%c1_296, %c0_297, %c32_298], %480 {strides = array<i32>} : memref<2x8x64xf32, #tpu.memory_space<vmem>>, vector<1x8x32xf32>,
    %481 = arith.truncf %474 : vector<8x32xf32> to vector<8x32xbf16>
    %c0_299 = arith.constant 0 : index
    %c0_300 = arith.constant 0 : index
    %482 = vector.load %arg6[%c0_299, %c0_300] : memref<32x128xbf16, #tpu.memory_space<vmem>>, vector<32x128xbf16>
    %cst_301 = arith.constant dense<0.000000e+00> : vector<8x128xf32>
    %483 = tpu.matmul %481, %482, %cst_301 {dimension_numbers = #tpu.dot_dimension_numbers<[1], [0], [0], [1], [0, 0, 1, 1], [], []>} : vector<8x32xbf16>, vector<32x128xbf16>, vector<8x128xf32> -> vector<8x128xf32>
    %c0_302 = arith.constant 0 : index
    %c0_303 = arith.constant 0 : index
    %484 = vector.load %arg7[%c0_302, %c0_303] : memref<1x128xf32, #tpu.memory_space<vmem>>, vector<1x128xf32>
    %485 = vector.broadcast %484 : vector<1x128xf32> to vector<8x128xf32>
    %486 = arith.addf %483, %485 : vector<8x128xf32>
    %487 = math.tanh %486 : vector<8x128xf32>
    %c3_304 = arith.constant 3 : index
    %c0_305 = arith.constant 0 : index
    %c0_306 = arith.constant 0 : index
    %488 = vector.load %arg10[%c3_304, %c0_305, %c0_306] : memref<8x8x128xf32, #tpu.memory_space<vmem>>, vector<1x8x128xf32>
    %489 = vector.shape_cast %488 : vector<1x8x128xf32> to vector<8x128xf32>
    %490 = vector.shape_cast %487 : vector<8x128xf32> to vector<1x8x128xf32>
    tpu.vector_store %arg10[%c3_304, %c0_305, %c0_306], %490 {strides = array<i32>} : memref<8x8x128xf32, #tpu.memory_space<vmem>>, vector<1x8x128xf32>,
    %c4 = arith.constant 4 : index
    %c0_307 = arith.constant 0 : index
    %c0_308 = arith.constant 0 : index
    %491 = vector.load %arg1[%c4, %c0_307, %c0_308] : memref<8x8x16xf32, #tpu.memory_space<vmem>>, vector<1x8x16xf32>
    %492 = vector.shape_cast %491 : vector<1x8x16xf32> to vector<8x16xf32>
    %493 = arith.truncf %492 : vector<8x16xf32> to vector<8x16xbf16>
    %c0_309 = arith.constant 0 : index
    %c0_310 = arith.constant 0 : index
    %494 = vector.load %arg2[%c0_309, %c0_310] : memref<16x32xbf16, #tpu.memory_space<vmem>>, vector<16x32xbf16>
    %cst_311 = arith.constant dense<0.000000e+00> : vector<8x32xf32>
    %495 = tpu.matmul %493, %494, %cst_311 {dimension_numbers = #tpu.dot_dimension_numbers<[1], [0], [0], [1], [0, 0, 1, 1], [], []>} : vector<8x16xbf16>, vector<16x32xbf16>, vector<8x32xf32> -> vector<8x32xf32>
    %c0_312 = arith.constant 0 : index
    %c0_313 = arith.constant 0 : index
    %496 = vector.load %arg3[%c0_312, %c0_313] : memref<1x32xf32, #tpu.memory_space<vmem>>, vector<1x32xf32>
    %497 = vector.broadcast %496 : vector<1x32xf32> to vector<8x32xf32>
    %498 = arith.addf %495, %497 : vector<8x32xf32>
    %c0_314 = arith.constant 0 : index
    %c0_315 = arith.constant 0 : index
    %c0_316 = arith.constant 0 : index
    %499 = vector.load %arg13[%c0_314, %c0_315, %c0_316] : memref<2x8x64xf32, #tpu.memory_space<vmem>>, vector<1x8x32xf32>
    %500 = vector.shape_cast %499 : vector<1x8x32xf32> to vector<8x32xf32>
    %501 = vector.shape_cast %498 : vector<8x32xf32> to vector<1x8x32xf32>
    tpu.vector_store %arg13[%c0_314, %c0_315, %c0_316], %501 {strides = array<i32>} : memref<2x8x64xf32, #tpu.memory_space<vmem>>, vector<1x8x32xf32>,
    %c0_317 = arith.constant 0 : index
    %c0_318 = arith.constant 0 : index
    %c0_319 = arith.constant 0 : index
    %502 = vector.load %arg13[%c0_317, %c0_318, %c0_319] : memref<2x8x64xf32, #tpu.memory_space<vmem>>, vector<1x8x64xf32>
    %503 = vector.shape_cast %502 : vector<1x8x64xf32> to vector<8x64xf32>
    %504 = arith.truncf %503 : vector<8x64xf32> to vector<8x64xbf16>
    %c0_320 = arith.constant 0 : index
    %c0_321 = arith.constant 0 : index
    %c0_322 = arith.constant 0 : index
    %505 = vector.load %arg4[%c0_320, %c0_321, %c0_322] : memref<2x64x128xbf16, #tpu.memory_space<vmem>>, vector<1x64x128xbf16>
    %506 = vector.shape_cast %505 : vector<1x64x128xbf16> to vector<64x128xbf16>
    %cst_323 = arith.constant dense<0.000000e+00> : vector<8x128xf32>
    %507 = tpu.matmul %504, %506, %cst_323 {dimension_numbers = #tpu.dot_dimension_numbers<[1], [0], [0], [1], [0, 0, 1, 1], [], []>} : vector<8x64xbf16>, vector<64x128xbf16>, vector<8x128xf32> -> vector<8x128xf32>
    %c0_324 = arith.constant 0 : index
    %c0_325 = arith.constant 0 : index
    %c0_326 = arith.constant 0 : index
    %508 = vector.load %arg5[%c0_324, %c0_325, %c0_326] : memref<2x1x128xf32, #tpu.memory_space<vmem>>, vector<1x1x128xf32>
    %509 = vector.shape_cast %508 : vector<1x1x128xf32> to vector<1x128xf32>
    %510 = vector.broadcast %509 : vector<1x128xf32> to vector<8x128xf32>
    %511 = arith.addf %507, %510 : vector<8x128xf32>
    %512 = vector.extract_strided_slice %511 {offsets = [0, 0], sizes = [8, 32], strides = [1, 1]} : vector<8x128xf32> to vector<8x32xf32>
    %cst_327 = arith.constant 5.000000e-01 : f32
    %513 = vector.broadcast %cst_327 : f32 to vector<8x32xf32>
    %514 = arith.mulf %513, %512 : vector<8x32xf32>
    %515 = math.tanh %514 : vector<8x32xf32>
    %cst_328 = arith.constant 5.000000e-01 : f32
    %516 = vector.broadcast %cst_328 : f32 to vector<8x32xf32>
    %517 = arith.mulf %516, %515 : vector<8x32xf32>
    %cst_329 = arith.constant 5.000000e-01 : f32
    %518 = vector.broadcast %cst_329 : f32 to vector<8x32xf32>
    %519 = arith.addf %517, %518 : vector<8x32xf32>
    %520 = vector.extract_strided_slice %511 {offsets = [0, 32], sizes = [8, 32], strides = [1, 1]} : vector<8x128xf32> to vector<8x32xf32>
    %cst_330 = arith.constant 5.000000e-01 : f32
    %521 = vector.broadcast %cst_330 : f32 to vector<8x32xf32>
    %522 = arith.mulf %521, %520 : vector<8x32xf32>
    %523 = math.tanh %522 : vector<8x32xf32>
    %cst_331 = arith.constant 5.000000e-01 : f32
    %524 = vector.broadcast %cst_331 : f32 to vector<8x32xf32>
    %525 = arith.mulf %524, %523 : vector<8x32xf32>
    %cst_332 = arith.constant 5.000000e-01 : f32
    %526 = vector.broadcast %cst_332 : f32 to vector<8x32xf32>
    %527 = arith.addf %525, %526 : vector<8x32xf32>
    %528 = vector.extract_strided_slice %511 {offsets = [0, 64], sizes = [8, 32], strides = [1, 1]} : vector<8x128xf32> to vector<8x32xf32>
    %529 = math.tanh %528 : vector<8x32xf32>
    %530 = vector.extract_strided_slice %511 {offsets = [0, 96], sizes = [8, 32], strides = [1, 1]} : vector<8x128xf32> to vector<8x32xf32>
    %cst_333 = arith.constant 5.000000e-01 : f32
    %531 = vector.broadcast %cst_333 : f32 to vector<8x32xf32>
    %532 = arith.mulf %531, %530 : vector<8x32xf32>
    %533 = math.tanh %532 : vector<8x32xf32>
    %cst_334 = arith.constant 5.000000e-01 : f32
    %534 = vector.broadcast %cst_334 : f32 to vector<8x32xf32>
    %535 = arith.mulf %534, %533 : vector<8x32xf32>
    %cst_335 = arith.constant 5.000000e-01 : f32
    %536 = vector.broadcast %cst_335 : f32 to vector<8x32xf32>
    %537 = arith.addf %535, %536 : vector<8x32xf32>
    %c0_336 = arith.constant 0 : index
    %c0_337 = arith.constant 0 : index
    %c0_338 = arith.constant 0 : index
    %538 = vector.load %arg14[%c0_336, %c0_337, %c0_338] : memref<2x8x32xf32, #tpu.memory_space<vmem>>, vector<1x8x32xf32>
    %539 = vector.shape_cast %538 : vector<1x8x32xf32> to vector<8x32xf32>
    %540 = arith.mulf %527, %539 : vector<8x32xf32>
    %541 = arith.mulf %519, %529 : vector<8x32xf32>
    %542 = arith.addf %540, %541 : vector<8x32xf32>
    %543 = math.tanh %542 : vector<8x32xf32>
    %544 = arith.mulf %537, %543 : vector<8x32xf32>
    %c0_339 = arith.constant 0 : index
    %c0_340 = arith.constant 0 : index
    %c0_341 = arith.constant 0 : index
    %545 = vector.load %arg14[%c0_339, %c0_340, %c0_341] : memref<2x8x32xf32, #tpu.memory_space<vmem>>, vector<1x8x32xf32>
    %546 = vector.shape_cast %545 : vector<1x8x32xf32> to vector<8x32xf32>
    %547 = vector.shape_cast %542 : vector<8x32xf32> to vector<1x8x32xf32>
    tpu.vector_store %arg14[%c0_339, %c0_340, %c0_341], %547 {strides = array<i32>} : memref<2x8x32xf32, #tpu.memory_space<vmem>>, vector<1x8x32xf32>,
    %c0_342 = arith.constant 0 : index
    %c0_343 = arith.constant 0 : index
    %c32_344 = arith.constant 32 : index
    %548 = vector.load %arg13[%c0_342, %c0_343, %c32_344] : memref<2x8x64xf32, #tpu.memory_space<vmem>>, vector<1x8x32xf32>
    %549 = vector.shape_cast %548 : vector<1x8x32xf32> to vector<8x32xf32>
    %550 = vector.shape_cast %544 : vector<8x32xf32> to vector<1x8x32xf32>
    tpu.vector_store %arg13[%c0_342, %c0_343, %c32_344], %550 {strides = array<i32>} : memref<2x8x64xf32, #tpu.memory_space<vmem>>, vector<1x8x32xf32>,
    %c1_345 = arith.constant 1 : index
    %c0_346 = arith.constant 0 : index
    %c0_347 = arith.constant 0 : index
    %551 = vector.load %arg13[%c1_345, %c0_346, %c0_347] : memref<2x8x64xf32, #tpu.memory_space<vmem>>, vector<1x8x32xf32>
    %552 = vector.shape_cast %551 : vector<1x8x32xf32> to vector<8x32xf32>
    %553 = vector.shape_cast %544 : vector<8x32xf32> to vector<1x8x32xf32>
    tpu.vector_store %arg13[%c1_345, %c0_346, %c0_347], %553 {strides = array<i32>} : memref<2x8x64xf32, #tpu.memory_space<vmem>>, vector<1x8x32xf32>,
    %c1_348 = arith.constant 1 : index
    %c0_349 = arith.constant 0 : index
    %c0_350 = arith.constant 0 : index
    %554 = vector.load %arg13[%c1_348, %c0_349, %c0_350] : memref<2x8x64xf32, #tpu.memory_space<vmem>>, vector<1x8x64xf32>
    %555 = vector.shape_cast %554 : vector<1x8x64xf32> to vector<8x64xf32>
    %556 = arith.truncf %555 : vector<8x64xf32> to vector<8x64xbf16>
    %c1_351 = arith.constant 1 : index
    %c0_352 = arith.constant 0 : index
    %c0_353 = arith.constant 0 : index
    %557 = vector.load %arg4[%c1_351, %c0_352, %c0_353] : memref<2x64x128xbf16, #tpu.memory_space<vmem>>, vector<1x64x128xbf16>
    %558 = vector.shape_cast %557 : vector<1x64x128xbf16> to vector<64x128xbf16>
    %cst_354 = arith.constant dense<0.000000e+00> : vector<8x128xf32>
    %559 = tpu.matmul %556, %558, %cst_354 {dimension_numbers = #tpu.dot_dimension_numbers<[1], [0], [0], [1], [0, 0, 1, 1], [], []>} : vector<8x64xbf16>, vector<64x128xbf16>, vector<8x128xf32> -> vector<8x128xf32>
    %c1_355 = arith.constant 1 : index
    %c0_356 = arith.constant 0 : index
    %c0_357 = arith.constant 0 : index
    %560 = vector.load %arg5[%c1_355, %c0_356, %c0_357] : memref<2x1x128xf32, #tpu.memory_space<vmem>>, vector<1x1x128xf32>
    %561 = vector.shape_cast %560 : vector<1x1x128xf32> to vector<1x128xf32>
    %562 = vector.broadcast %561 : vector<1x128xf32> to vector<8x128xf32>
    %563 = arith.addf %559, %562 : vector<8x128xf32>
    %564 = vector.extract_strided_slice %563 {offsets = [0, 0], sizes = [8, 32], strides = [1, 1]} : vector<8x128xf32> to vector<8x32xf32>
    %cst_358 = arith.constant 5.000000e-01 : f32
    %565 = vector.broadcast %cst_358 : f32 to vector<8x32xf32>
    %566 = arith.mulf %565, %564 : vector<8x32xf32>
    %567 = math.tanh %566 : vector<8x32xf32>
    %cst_359 = arith.constant 5.000000e-01 : f32
    %568 = vector.broadcast %cst_359 : f32 to vector<8x32xf32>
    %569 = arith.mulf %568, %567 : vector<8x32xf32>
    %cst_360 = arith.constant 5.000000e-01 : f32
    %570 = vector.broadcast %cst_360 : f32 to vector<8x32xf32>
    %571 = arith.addf %569, %570 : vector<8x32xf32>
    %572 = vector.extract_strided_slice %563 {offsets = [0, 32], sizes = [8, 32], strides = [1, 1]} : vector<8x128xf32> to vector<8x32xf32>
    %cst_361 = arith.constant 5.000000e-01 : f32
    %573 = vector.broadcast %cst_361 : f32 to vector<8x32xf32>
    %574 = arith.mulf %573, %572 : vector<8x32xf32>
    %575 = math.tanh %574 : vector<8x32xf32>
    %cst_362 = arith.constant 5.000000e-01 : f32
    %576 = vector.broadcast %cst_362 : f32 to vector<8x32xf32>
    %577 = arith.mulf %576, %575 : vector<8x32xf32>
    %cst_363 = arith.constant 5.000000e-01 : f32
    %578 = vector.broadcast %cst_363 : f32 to vector<8x32xf32>
    %579 = arith.addf %577, %578 : vector<8x32xf32>
    %580 = vector.extract_strided_slice %563 {offsets = [0, 64], sizes = [8, 32], strides = [1, 1]} : vector<8x128xf32> to vector<8x32xf32>
    %581 = math.tanh %580 : vector<8x32xf32>
    %582 = vector.extract_strided_slice %563 {offsets = [0, 96], sizes = [8, 32], strides = [1, 1]} : vector<8x128xf32> to vector<8x32xf32>
    %cst_364 = arith.constant 5.000000e-01 : f32
    %583 = vector.broadcast %cst_364 : f32 to vector<8x32xf32>
    %584 = arith.mulf %583, %582 : vector<8x32xf32>
    %585 = math.tanh %584 : vector<8x32xf32>
    %cst_365 = arith.constant 5.000000e-01 : f32
    %586 = vector.broadcast %cst_365 : f32 to vector<8x32xf32>
    %587 = arith.mulf %586, %585 : vector<8x32xf32>
    %cst_366 = arith.constant 5.000000e-01 : f32
    %588 = vector.broadcast %cst_366 : f32 to vector<8x32xf32>
    %589 = arith.addf %587, %588 : vector<8x32xf32>
    %c1_367 = arith.constant 1 : index
    %c0_368 = arith.constant 0 : index
    %c0_369 = arith.constant 0 : index
    %590 = vector.load %arg14[%c1_367, %c0_368, %c0_369] : memref<2x8x32xf32, #tpu.memory_space<vmem>>, vector<1x8x32xf32>
    %591 = vector.shape_cast %590 : vector<1x8x32xf32> to vector<8x32xf32>
    %592 = arith.mulf %579, %591 : vector<8x32xf32>
    %593 = arith.mulf %571, %581 : vector<8x32xf32>
    %594 = arith.addf %592, %593 : vector<8x32xf32>
    %595 = math.tanh %594 : vector<8x32xf32>
    %596 = arith.mulf %589, %595 : vector<8x32xf32>
    %c1_370 = arith.constant 1 : index
    %c0_371 = arith.constant 0 : index
    %c0_372 = arith.constant 0 : index
    %597 = vector.load %arg14[%c1_370, %c0_371, %c0_372] : memref<2x8x32xf32, #tpu.memory_space<vmem>>, vector<1x8x32xf32>
    %598 = vector.shape_cast %597 : vector<1x8x32xf32> to vector<8x32xf32>
    %599 = vector.shape_cast %594 : vector<8x32xf32> to vector<1x8x32xf32>
    tpu.vector_store %arg14[%c1_370, %c0_371, %c0_372], %599 {strides = array<i32>} : memref<2x8x32xf32, #tpu.memory_space<vmem>>, vector<1x8x32xf32>,
    %c1_373 = arith.constant 1 : index
    %c0_374 = arith.constant 0 : index
    %c32_375 = arith.constant 32 : index
    %600 = vector.load %arg13[%c1_373, %c0_374, %c32_375] : memref<2x8x64xf32, #tpu.memory_space<vmem>>, vector<1x8x32xf32>
    %601 = vector.shape_cast %600 : vector<1x8x32xf32> to vector<8x32xf32>
    %602 = vector.shape_cast %596 : vector<8x32xf32> to vector<1x8x32xf32>
    tpu.vector_store %arg13[%c1_373, %c0_374, %c32_375], %602 {strides = array<i32>} : memref<2x8x64xf32, #tpu.memory_space<vmem>>, vector<1x8x32xf32>,
    %603 = arith.truncf %596 : vector<8x32xf32> to vector<8x32xbf16>
    %c0_376 = arith.constant 0 : index
    %c0_377 = arith.constant 0 : index
    %604 = vector.load %arg6[%c0_376, %c0_377] : memref<32x128xbf16, #tpu.memory_space<vmem>>, vector<32x128xbf16>
    %cst_378 = arith.constant dense<0.000000e+00> : vector<8x128xf32>
    %605 = tpu.matmul %603, %604, %cst_378 {dimension_numbers = #tpu.dot_dimension_numbers<[1], [0], [0], [1], [0, 0, 1, 1], [], []>} : vector<8x32xbf16>, vector<32x128xbf16>, vector<8x128xf32> -> vector<8x128xf32>
    %c0_379 = arith.constant 0 : index
    %c0_380 = arith.constant 0 : index
    %606 = vector.load %arg7[%c0_379, %c0_380] : memref<1x128xf32, #tpu.memory_space<vmem>>, vector<1x128xf32>
    %607 = vector.broadcast %606 : vector<1x128xf32> to vector<8x128xf32>
    %608 = arith.addf %605, %607 : vector<8x128xf32>
    %609 = math.tanh %608 : vector<8x128xf32>
    %c4_381 = arith.constant 4 : index
    %c0_382 = arith.constant 0 : index
    %c0_383 = arith.constant 0 : index
    %610 = vector.load %arg10[%c4_381, %c0_382, %c0_383] : memref<8x8x128xf32, #tpu.memory_space<vmem>>, vector<1x8x128xf32>
    %611 = vector.shape_cast %610 : vector<1x8x128xf32> to vector<8x128xf32>
    %612 = vector.shape_cast %609 : vector<8x128xf32> to vector<1x8x128xf32>
    tpu.vector_store %arg10[%c4_381, %c0_382, %c0_383], %612 {strides = array<i32>} : memref<8x8x128xf32, #tpu.memory_space<vmem>>, vector<1x8x128xf32>,
    %c5 = arith.constant 5 : index
    %c0_384 = arith.constant 0 : index
    %c0_385 = arith.constant 0 : index
    %613 = vector.load %arg1[%c5, %c0_384, %c0_385] : memref<8x8x16xf32, #tpu.memory_space<vmem>>, vector<1x8x16xf32>
    %614 = vector.shape_cast %613 : vector<1x8x16xf32> to vector<8x16xf32>
    %615 = arith.truncf %614 : vector<8x16xf32> to vector<8x16xbf16>
    %c0_386 = arith.constant 0 : index
    %c0_387 = arith.constant 0 : index
    %616 = vector.load %arg2[%c0_386, %c0_387] : memref<16x32xbf16, #tpu.memory_space<vmem>>, vector<16x32xbf16>
    %cst_388 = arith.constant dense<0.000000e+00> : vector<8x32xf32>
    %617 = tpu.matmul %615, %616, %cst_388 {dimension_numbers = #tpu.dot_dimension_numbers<[1], [0], [0], [1], [0, 0, 1, 1], [], []>} : vector<8x16xbf16>, vector<16x32xbf16>, vector<8x32xf32> -> vector<8x32xf32>
    %c0_389 = arith.constant 0 : index
    %c0_390 = arith.constant 0 : index
    %618 = vector.load %arg3[%c0_389, %c0_390] : memref<1x32xf32, #tpu.memory_space<vmem>>, vector<1x32xf32>
    %619 = vector.broadcast %618 : vector<1x32xf32> to vector<8x32xf32>
    %620 = arith.addf %617, %619 : vector<8x32xf32>
    %c0_391 = arith.constant 0 : index
    %c0_392 = arith.constant 0 : index
    %c0_393 = arith.constant 0 : index
    %621 = vector.load %arg13[%c0_391, %c0_392, %c0_393] : memref<2x8x64xf32, #tpu.memory_space<vmem>>, vector<1x8x32xf32>
    %622 = vector.shape_cast %621 : vector<1x8x32xf32> to vector<8x32xf32>
    %623 = vector.shape_cast %620 : vector<8x32xf32> to vector<1x8x32xf32>
    tpu.vector_store %arg13[%c0_391, %c0_392, %c0_393], %623 {strides = array<i32>} : memref<2x8x64xf32, #tpu.memory_space<vmem>>, vector<1x8x32xf32>,
    %c0_394 = arith.constant 0 : index
    %c0_395 = arith.constant 0 : index
    %c0_396 = arith.constant 0 : index
    %624 = vector.load %arg13[%c0_394, %c0_395, %c0_396] : memref<2x8x64xf32, #tpu.memory_space<vmem>>, vector<1x8x64xf32>
    %625 = vector.shape_cast %624 : vector<1x8x64xf32> to vector<8x64xf32>
    %626 = arith.truncf %625 : vector<8x64xf32> to vector<8x64xbf16>
    %c0_397 = arith.constant 0 : index
    %c0_398 = arith.constant 0 : index
    %c0_399 = arith.constant 0 : index
    %627 = vector.load %arg4[%c0_397, %c0_398, %c0_399] : memref<2x64x128xbf16, #tpu.memory_space<vmem>>, vector<1x64x128xbf16>
    %628 = vector.shape_cast %627 : vector<1x64x128xbf16> to vector<64x128xbf16>
    %cst_400 = arith.constant dense<0.000000e+00> : vector<8x128xf32>
    %629 = tpu.matmul %626, %628, %cst_400 {dimension_numbers = #tpu.dot_dimension_numbers<[1], [0], [0], [1], [0, 0, 1, 1], [], []>} : vector<8x64xbf16>, vector<64x128xbf16>, vector<8x128xf32> -> vector<8x128xf32>
    %c0_401 = arith.constant 0 : index
    %c0_402 = arith.constant 0 : index
    %c0_403 = arith.constant 0 : index
    %630 = vector.load %arg5[%c0_401, %c0_402, %c0_403] : memref<2x1x128xf32, #tpu.memory_space<vmem>>, vector<1x1x128xf32>
    %631 = vector.shape_cast %630 : vector<1x1x128xf32> to vector<1x128xf32>
    %632 = vector.broadcast %631 : vector<1x128xf32> to vector<8x128xf32>
    %633 = arith.addf %629, %632 : vector<8x128xf32>
    %634 = vector.extract_strided_slice %633 {offsets = [0, 0], sizes = [8, 32], strides = [1, 1]} : vector<8x128xf32> to vector<8x32xf32>
    %cst_404 = arith.constant 5.000000e-01 : f32
    %635 = vector.broadcast %cst_404 : f32 to vector<8x32xf32>
    %636 = arith.mulf %635, %634 : vector<8x32xf32>
    %637 = math.tanh %636 : vector<8x32xf32>
    %cst_405 = arith.constant 5.000000e-01 : f32
    %638 = vector.broadcast %cst_405 : f32 to vector<8x32xf32>
    %639 = arith.mulf %638, %637 : vector<8x32xf32>
    %cst_406 = arith.constant 5.000000e-01 : f32
    %640 = vector.broadcast %cst_406 : f32 to vector<8x32xf32>
    %641 = arith.addf %639, %640 : vector<8x32xf32>
    %642 = vector.extract_strided_slice %633 {offsets = [0, 32], sizes = [8, 32], strides = [1, 1]} : vector<8x128xf32> to vector<8x32xf32>
    %cst_407 = arith.constant 5.000000e-01 : f32
    %643 = vector.broadcast %cst_407 : f32 to vector<8x32xf32>
    %644 = arith.mulf %643, %642 : vector<8x32xf32>
    %645 = math.tanh %644 : vector<8x32xf32>
    %cst_408 = arith.constant 5.000000e-01 : f32
    %646 = vector.broadcast %cst_408 : f32 to vector<8x32xf32>
    %647 = arith.mulf %646, %645 : vector<8x32xf32>
    %cst_409 = arith.constant 5.000000e-01 : f32
    %648 = vector.broadcast %cst_409 : f32 to vector<8x32xf32>
    %649 = arith.addf %647, %648 : vector<8x32xf32>
    %650 = vector.extract_strided_slice %633 {offsets = [0, 64], sizes = [8, 32], strides = [1, 1]} : vector<8x128xf32> to vector<8x32xf32>
    %651 = math.tanh %650 : vector<8x32xf32>
    %652 = vector.extract_strided_slice %633 {offsets = [0, 96], sizes = [8, 32], strides = [1, 1]} : vector<8x128xf32> to vector<8x32xf32>
    %cst_410 = arith.constant 5.000000e-01 : f32
    %653 = vector.broadcast %cst_410 : f32 to vector<8x32xf32>
    %654 = arith.mulf %653, %652 : vector<8x32xf32>
    %655 = math.tanh %654 : vector<8x32xf32>
    %cst_411 = arith.constant 5.000000e-01 : f32
    %656 = vector.broadcast %cst_411 : f32 to vector<8x32xf32>
    %657 = arith.mulf %656, %655 : vector<8x32xf32>
    %cst_412 = arith.constant 5.000000e-01 : f32
    %658 = vector.broadcast %cst_412 : f32 to vector<8x32xf32>
    %659 = arith.addf %657, %658 : vector<8x32xf32>
    %c0_413 = arith.constant 0 : index
    %c0_414 = arith.constant 0 : index
    %c0_415 = arith.constant 0 : index
    %660 = vector.load %arg14[%c0_413, %c0_414, %c0_415] : memref<2x8x32xf32, #tpu.memory_space<vmem>>, vector<1x8x32xf32>
    %661 = vector.shape_cast %660 : vector<1x8x32xf32> to vector<8x32xf32>
    %662 = arith.mulf %649, %661 : vector<8x32xf32>
    %663 = arith.mulf %641, %651 : vector<8x32xf32>
    %664 = arith.addf %662, %663 : vector<8x32xf32>
    %665 = math.tanh %664 : vector<8x32xf32>
    %666 = arith.mulf %659, %665 : vector<8x32xf32>
    %c0_416 = arith.constant 0 : index
    %c0_417 = arith.constant 0 : index
    %c0_418 = arith.constant 0 : index
    %667 = vector.load %arg14[%c0_416, %c0_417, %c0_418] : memref<2x8x32xf32, #tpu.memory_space<vmem>>, vector<1x8x32xf32>
    %668 = vector.shape_cast %667 : vector<1x8x32xf32> to vector<8x32xf32>
    %669 = vector.shape_cast %664 : vector<8x32xf32> to vector<1x8x32xf32>
    tpu.vector_store %arg14[%c0_416, %c0_417, %c0_418], %669 {strides = array<i32>} : memref<2x8x32xf32, #tpu.memory_space<vmem>>, vector<1x8x32xf32>,
    %c0_419 = arith.constant 0 : index
    %c0_420 = arith.constant 0 : index
    %c32_421 = arith.constant 32 : index
    %670 = vector.load %arg13[%c0_419, %c0_420, %c32_421] : memref<2x8x64xf32, #tpu.memory_space<vmem>>, vector<1x8x32xf32>
    %671 = vector.shape_cast %670 : vector<1x8x32xf32> to vector<8x32xf32>
    %672 = vector.shape_cast %666 : vector<8x32xf32> to vector<1x8x32xf32>
    tpu.vector_store %arg13[%c0_419, %c0_420, %c32_421], %672 {strides = array<i32>} : memref<2x8x64xf32, #tpu.memory_space<vmem>>, vector<1x8x32xf32>,
    %c1_422 = arith.constant 1 : index
    %c0_423 = arith.constant 0 : index
    %c0_424 = arith.constant 0 : index
    %673 = vector.load %arg13[%c1_422, %c0_423, %c0_424] : memref<2x8x64xf32, #tpu.memory_space<vmem>>, vector<1x8x32xf32>
    %674 = vector.shape_cast %673 : vector<1x8x32xf32> to vector<8x32xf32>
    %675 = vector.shape_cast %666 : vector<8x32xf32> to vector<1x8x32xf32>
    tpu.vector_store %arg13[%c1_422, %c0_423, %c0_424], %675 {strides = array<i32>} : memref<2x8x64xf32, #tpu.memory_space<vmem>>, vector<1x8x32xf32>,
    %c1_425 = arith.constant 1 : index
    %c0_426 = arith.constant 0 : index
    %c0_427 = arith.constant 0 : index
    %676 = vector.load %arg13[%c1_425, %c0_426, %c0_427] : memref<2x8x64xf32, #tpu.memory_space<vmem>>, vector<1x8x64xf32>
    %677 = vector.shape_cast %676 : vector<1x8x64xf32> to vector<8x64xf32>
    %678 = arith.truncf %677 : vector<8x64xf32> to vector<8x64xbf16>
    %c1_428 = arith.constant 1 : index
    %c0_429 = arith.constant 0 : index
    %c0_430 = arith.constant 0 : index
    %679 = vector.load %arg4[%c1_428, %c0_429, %c0_430] : memref<2x64x128xbf16, #tpu.memory_space<vmem>>, vector<1x64x128xbf16>
    %680 = vector.shape_cast %679 : vector<1x64x128xbf16> to vector<64x128xbf16>
    %cst_431 = arith.constant dense<0.000000e+00> : vector<8x128xf32>
    %681 = tpu.matmul %678, %680, %cst_431 {dimension_numbers = #tpu.dot_dimension_numbers<[1], [0], [0], [1], [0, 0, 1, 1], [], []>} : vector<8x64xbf16>, vector<64x128xbf16>, vector<8x128xf32> -> vector<8x128xf32>
    %c1_432 = arith.constant 1 : index
    %c0_433 = arith.constant 0 : index
    %c0_434 = arith.constant 0 : index
    %682 = vector.load %arg5[%c1_432, %c0_433, %c0_434] : memref<2x1x128xf32, #tpu.memory_space<vmem>>, vector<1x1x128xf32>
    %683 = vector.shape_cast %682 : vector<1x1x128xf32> to vector<1x128xf32>
    %684 = vector.broadcast %683 : vector<1x128xf32> to vector<8x128xf32>
    %685 = arith.addf %681, %684 : vector<8x128xf32>
    %686 = vector.extract_strided_slice %685 {offsets = [0, 0], sizes = [8, 32], strides = [1, 1]} : vector<8x128xf32> to vector<8x32xf32>
    %cst_435 = arith.constant 5.000000e-01 : f32
    %687 = vector.broadcast %cst_435 : f32 to vector<8x32xf32>
    %688 = arith.mulf %687, %686 : vector<8x32xf32>
    %689 = math.tanh %688 : vector<8x32xf32>
    %cst_436 = arith.constant 5.000000e-01 : f32
    %690 = vector.broadcast %cst_436 : f32 to vector<8x32xf32>
    %691 = arith.mulf %690, %689 : vector<8x32xf32>
    %cst_437 = arith.constant 5.000000e-01 : f32
    %692 = vector.broadcast %cst_437 : f32 to vector<8x32xf32>
    %693 = arith.addf %691, %692 : vector<8x32xf32>
    %694 = vector.extract_strided_slice %685 {offsets = [0, 32], sizes = [8, 32], strides = [1, 1]} : vector<8x128xf32> to vector<8x32xf32>
    %cst_438 = arith.constant 5.000000e-01 : f32
    %695 = vector.broadcast %cst_438 : f32 to vector<8x32xf32>
    %696 = arith.mulf %695, %694 : vector<8x32xf32>
    %697 = math.tanh %696 : vector<8x32xf32>
    %cst_439 = arith.constant 5.000000e-01 : f32
    %698 = vector.broadcast %cst_439 : f32 to vector<8x32xf32>
    %699 = arith.mulf %698, %697 : vector<8x32xf32>
    %cst_440 = arith.constant 5.000000e-01 : f32
    %700 = vector.broadcast %cst_440 : f32 to vector<8x32xf32>
    %701 = arith.addf %699, %700 : vector<8x32xf32>
    %702 = vector.extract_strided_slice %685 {offsets = [0, 64], sizes = [8, 32], strides = [1, 1]} : vector<8x128xf32> to vector<8x32xf32>
    %703 = math.tanh %702 : vector<8x32xf32>
    %704 = vector.extract_strided_slice %685 {offsets = [0, 96], sizes = [8, 32], strides = [1, 1]} : vector<8x128xf32> to vector<8x32xf32>
    %cst_441 = arith.constant 5.000000e-01 : f32
    %705 = vector.broadcast %cst_441 : f32 to vector<8x32xf32>
    %706 = arith.mulf %705, %704 : vector<8x32xf32>
    %707 = math.tanh %706 : vector<8x32xf32>
    %cst_442 = arith.constant 5.000000e-01 : f32
    %708 = vector.broadcast %cst_442 : f32 to vector<8x32xf32>
    %709 = arith.mulf %708, %707 : vector<8x32xf32>
    %cst_443 = arith.constant 5.000000e-01 : f32
    %710 = vector.broadcast %cst_443 : f32 to vector<8x32xf32>
    %711 = arith.addf %709, %710 : vector<8x32xf32>
    %c1_444 = arith.constant 1 : index
    %c0_445 = arith.constant 0 : index
    %c0_446 = arith.constant 0 : index
    %712 = vector.load %arg14[%c1_444, %c0_445, %c0_446] : memref<2x8x32xf32, #tpu.memory_space<vmem>>, vector<1x8x32xf32>
    %713 = vector.shape_cast %712 : vector<1x8x32xf32> to vector<8x32xf32>
    %714 = arith.mulf %701, %713 : vector<8x32xf32>
    %715 = arith.mulf %693, %703 : vector<8x32xf32>
    %716 = arith.addf %714, %715 : vector<8x32xf32>
    %717 = math.tanh %716 : vector<8x32xf32>
    %718 = arith.mulf %711, %717 : vector<8x32xf32>
    %c1_447 = arith.constant 1 : index
    %c0_448 = arith.constant 0 : index
    %c0_449 = arith.constant 0 : index
    %719 = vector.load %arg14[%c1_447, %c0_448, %c0_449] : memref<2x8x32xf32, #tpu.memory_space<vmem>>, vector<1x8x32xf32>
    %720 = vector.shape_cast %719 : vector<1x8x32xf32> to vector<8x32xf32>
    %721 = vector.shape_cast %716 : vector<8x32xf32> to vector<1x8x32xf32>
    tpu.vector_store %arg14[%c1_447, %c0_448, %c0_449], %721 {strides = array<i32>} : memref<2x8x32xf32, #tpu.memory_space<vmem>>, vector<1x8x32xf32>,
    %c1_450 = arith.constant 1 : index
    %c0_451 = arith.constant 0 : index
    %c32_452 = arith.constant 32 : index
    %722 = vector.load %arg13[%c1_450, %c0_451, %c32_452] : memref<2x8x64xf32, #tpu.memory_space<vmem>>, vector<1x8x32xf32>
    %723 = vector.shape_cast %722 : vector<1x8x32xf32> to vector<8x32xf32>
    %724 = vector.shape_cast %718 : vector<8x32xf32> to vector<1x8x32xf32>
    tpu.vector_store %arg13[%c1_450, %c0_451, %c32_452], %724 {strides = array<i32>} : memref<2x8x64xf32, #tpu.memory_space<vmem>>, vector<1x8x32xf32>,
    %725 = arith.truncf %718 : vector<8x32xf32> to vector<8x32xbf16>
    %c0_453 = arith.constant 0 : index
    %c0_454 = arith.constant 0 : index
    %726 = vector.load %arg6[%c0_453, %c0_454] : memref<32x128xbf16, #tpu.memory_space<vmem>>, vector<32x128xbf16>
    %cst_455 = arith.constant dense<0.000000e+00> : vector<8x128xf32>
    %727 = tpu.matmul %725, %726, %cst_455 {dimension_numbers = #tpu.dot_dimension_numbers<[1], [0], [0], [1], [0, 0, 1, 1], [], []>} : vector<8x32xbf16>, vector<32x128xbf16>, vector<8x128xf32> -> vector<8x128xf32>
    %c0_456 = arith.constant 0 : index
    %c0_457 = arith.constant 0 : index
    %728 = vector.load %arg7[%c0_456, %c0_457] : memref<1x128xf32, #tpu.memory_space<vmem>>, vector<1x128xf32>
    %729 = vector.broadcast %728 : vector<1x128xf32> to vector<8x128xf32>
    %730 = arith.addf %727, %729 : vector<8x128xf32>
    %731 = math.tanh %730 : vector<8x128xf32>
    %c5_458 = arith.constant 5 : index
    %c0_459 = arith.constant 0 : index
    %c0_460 = arith.constant 0 : index
    %732 = vector.load %arg10[%c5_458, %c0_459, %c0_460] : memref<8x8x128xf32, #tpu.memory_space<vmem>>, vector<1x8x128xf32>
    %733 = vector.shape_cast %732 : vector<1x8x128xf32> to vector<8x128xf32>
    %734 = vector.shape_cast %731 : vector<8x128xf32> to vector<1x8x128xf32>
    tpu.vector_store %arg10[%c5_458, %c0_459, %c0_460], %734 {strides = array<i32>} : memref<8x8x128xf32, #tpu.memory_space<vmem>>, vector<1x8x128xf32>,
    %c6 = arith.constant 6 : index
    %c0_461 = arith.constant 0 : index
    %c0_462 = arith.constant 0 : index
    %735 = vector.load %arg1[%c6, %c0_461, %c0_462] : memref<8x8x16xf32, #tpu.memory_space<vmem>>, vector<1x8x16xf32>
    %736 = vector.shape_cast %735 : vector<1x8x16xf32> to vector<8x16xf32>
    %737 = arith.truncf %736 : vector<8x16xf32> to vector<8x16xbf16>
    %c0_463 = arith.constant 0 : index
    %c0_464 = arith.constant 0 : index
    %738 = vector.load %arg2[%c0_463, %c0_464] : memref<16x32xbf16, #tpu.memory_space<vmem>>, vector<16x32xbf16>
    %cst_465 = arith.constant dense<0.000000e+00> : vector<8x32xf32>
    %739 = tpu.matmul %737, %738, %cst_465 {dimension_numbers = #tpu.dot_dimension_numbers<[1], [0], [0], [1], [0, 0, 1, 1], [], []>} : vector<8x16xbf16>, vector<16x32xbf16>, vector<8x32xf32> -> vector<8x32xf32>
    %c0_466 = arith.constant 0 : index
    %c0_467 = arith.constant 0 : index
    %740 = vector.load %arg3[%c0_466, %c0_467] : memref<1x32xf32, #tpu.memory_space<vmem>>, vector<1x32xf32>
    %741 = vector.broadcast %740 : vector<1x32xf32> to vector<8x32xf32>
    %742 = arith.addf %739, %741 : vector<8x32xf32>
    %c0_468 = arith.constant 0 : index
    %c0_469 = arith.constant 0 : index
    %c0_470 = arith.constant 0 : index
    %743 = vector.load %arg13[%c0_468, %c0_469, %c0_470] : memref<2x8x64xf32, #tpu.memory_space<vmem>>, vector<1x8x32xf32>
    %744 = vector.shape_cast %743 : vector<1x8x32xf32> to vector<8x32xf32>
    %745 = vector.shape_cast %742 : vector<8x32xf32> to vector<1x8x32xf32>
    tpu.vector_store %arg13[%c0_468, %c0_469, %c0_470], %745 {strides = array<i32>} : memref<2x8x64xf32, #tpu.memory_space<vmem>>, vector<1x8x32xf32>,
    %c0_471 = arith.constant 0 : index
    %c0_472 = arith.constant 0 : index
    %c0_473 = arith.constant 0 : index
    %746 = vector.load %arg13[%c0_471, %c0_472, %c0_473] : memref<2x8x64xf32, #tpu.memory_space<vmem>>, vector<1x8x64xf32>
    %747 = vector.shape_cast %746 : vector<1x8x64xf32> to vector<8x64xf32>
    %748 = arith.truncf %747 : vector<8x64xf32> to vector<8x64xbf16>
    %c0_474 = arith.constant 0 : index
    %c0_475 = arith.constant 0 : index
    %c0_476 = arith.constant 0 : index
    %749 = vector.load %arg4[%c0_474, %c0_475, %c0_476] : memref<2x64x128xbf16, #tpu.memory_space<vmem>>, vector<1x64x128xbf16>
    %750 = vector.shape_cast %749 : vector<1x64x128xbf16> to vector<64x128xbf16>
    %cst_477 = arith.constant dense<0.000000e+00> : vector<8x128xf32>
    %751 = tpu.matmul %748, %750, %cst_477 {dimension_numbers = #tpu.dot_dimension_numbers<[1], [0], [0], [1], [0, 0, 1, 1], [], []>} : vector<8x64xbf16>, vector<64x128xbf16>, vector<8x128xf32> -> vector<8x128xf32>
    %c0_478 = arith.constant 0 : index
    %c0_479 = arith.constant 0 : index
    %c0_480 = arith.constant 0 : index
    %752 = vector.load %arg5[%c0_478, %c0_479, %c0_480] : memref<2x1x128xf32, #tpu.memory_space<vmem>>, vector<1x1x128xf32>
    %753 = vector.shape_cast %752 : vector<1x1x128xf32> to vector<1x128xf32>
    %754 = vector.broadcast %753 : vector<1x128xf32> to vector<8x128xf32>
    %755 = arith.addf %751, %754 : vector<8x128xf32>
    %756 = vector.extract_strided_slice %755 {offsets = [0, 0], sizes = [8, 32], strides = [1, 1]} : vector<8x128xf32> to vector<8x32xf32>
    %cst_481 = arith.constant 5.000000e-01 : f32
    %757 = vector.broadcast %cst_481 : f32 to vector<8x32xf32>
    %758 = arith.mulf %757, %756 : vector<8x32xf32>
    %759 = math.tanh %758 : vector<8x32xf32>
    %cst_482 = arith.constant 5.000000e-01 : f32
    %760 = vector.broadcast %cst_482 : f32 to vector<8x32xf32>
    %761 = arith.mulf %760, %759 : vector<8x32xf32>
    %cst_483 = arith.constant 5.000000e-01 : f32
    %762 = vector.broadcast %cst_483 : f32 to vector<8x32xf32>
    %763 = arith.addf %761, %762 : vector<8x32xf32>
    %764 = vector.extract_strided_slice %755 {offsets = [0, 32], sizes = [8, 32], strides = [1, 1]} : vector<8x128xf32> to vector<8x32xf32>
    %cst_484 = arith.constant 5.000000e-01 : f32
    %765 = vector.broadcast %cst_484 : f32 to vector<8x32xf32>
    %766 = arith.mulf %765, %764 : vector<8x32xf32>
    %767 = math.tanh %766 : vector<8x32xf32>
    %cst_485 = arith.constant 5.000000e-01 : f32
    %768 = vector.broadcast %cst_485 : f32 to vector<8x32xf32>
    %769 = arith.mulf %768, %767 : vector<8x32xf32>
    %cst_486 = arith.constant 5.000000e-01 : f32
    %770 = vector.broadcast %cst_486 : f32 to vector<8x32xf32>
    %771 = arith.addf %769, %770 : vector<8x32xf32>
    %772 = vector.extract_strided_slice %755 {offsets = [0, 64], sizes = [8, 32], strides = [1, 1]} : vector<8x128xf32> to vector<8x32xf32>
    %773 = math.tanh %772 : vector<8x32xf32>
    %774 = vector.extract_strided_slice %755 {offsets = [0, 96], sizes = [8, 32], strides = [1, 1]} : vector<8x128xf32> to vector<8x32xf32>
    %cst_487 = arith.constant 5.000000e-01 : f32
    %775 = vector.broadcast %cst_487 : f32 to vector<8x32xf32>
    %776 = arith.mulf %775, %774 : vector<8x32xf32>
    %777 = math.tanh %776 : vector<8x32xf32>
    %cst_488 = arith.constant 5.000000e-01 : f32
    %778 = vector.broadcast %cst_488 : f32 to vector<8x32xf32>
    %779 = arith.mulf %778, %777 : vector<8x32xf32>
    %cst_489 = arith.constant 5.000000e-01 : f32
    %780 = vector.broadcast %cst_489 : f32 to vector<8x32xf32>
    %781 = arith.addf %779, %780 : vector<8x32xf32>
    %c0_490 = arith.constant 0 : index
    %c0_491 = arith.constant 0 : index
    %c0_492 = arith.constant 0 : index
    %782 = vector.load %arg14[%c0_490, %c0_491, %c0_492] : memref<2x8x32xf32, #tpu.memory_space<vmem>>, vector<1x8x32xf32>
    %783 = vector.shape_cast %782 : vector<1x8x32xf32> to vector<8x32xf32>
    %784 = arith.mulf %771, %783 : vector<8x32xf32>
    %785 = arith.mulf %763, %773 : vector<8x32xf32>
    %786 = arith.addf %784, %785 : vector<8x32xf32>
    %787 = math.tanh %786 : vector<8x32xf32>
    %788 = arith.mulf %781, %787 : vector<8x32xf32>
    %c0_493 = arith.constant 0 : index
    %c0_494 = arith.constant 0 : index
    %c0_495 = arith.constant 0 : index
    %789 = vector.load %arg14[%c0_493, %c0_494, %c0_495] : memref<2x8x32xf32, #tpu.memory_space<vmem>>, vector<1x8x32xf32>
    %790 = vector.shape_cast %789 : vector<1x8x32xf32> to vector<8x32xf32>
    %791 = vector.shape_cast %786 : vector<8x32xf32> to vector<1x8x32xf32>
    tpu.vector_store %arg14[%c0_493, %c0_494, %c0_495], %791 {strides = array<i32>} : memref<2x8x32xf32, #tpu.memory_space<vmem>>, vector<1x8x32xf32>,
    %c0_496 = arith.constant 0 : index
    %c0_497 = arith.constant 0 : index
    %c32_498 = arith.constant 32 : index
    %792 = vector.load %arg13[%c0_496, %c0_497, %c32_498] : memref<2x8x64xf32, #tpu.memory_space<vmem>>, vector<1x8x32xf32>
    %793 = vector.shape_cast %792 : vector<1x8x32xf32> to vector<8x32xf32>
    %794 = vector.shape_cast %788 : vector<8x32xf32> to vector<1x8x32xf32>
    tpu.vector_store %arg13[%c0_496, %c0_497, %c32_498], %794 {strides = array<i32>} : memref<2x8x64xf32, #tpu.memory_space<vmem>>, vector<1x8x32xf32>,
    %c1_499 = arith.constant 1 : index
    %c0_500 = arith.constant 0 : index
    %c0_501 = arith.constant 0 : index
    %795 = vector.load %arg13[%c1_499, %c0_500, %c0_501] : memref<2x8x64xf32, #tpu.memory_space<vmem>>, vector<1x8x32xf32>
    %796 = vector.shape_cast %795 : vector<1x8x32xf32> to vector<8x32xf32>
    %797 = vector.shape_cast %788 : vector<8x32xf32> to vector<1x8x32xf32>
    tpu.vector_store %arg13[%c1_499, %c0_500, %c0_501], %797 {strides = array<i32>} : memref<2x8x64xf32, #tpu.memory_space<vmem>>, vector<1x8x32xf32>,
    %c1_502 = arith.constant 1 : index
    %c0_503 = arith.constant 0 : index
    %c0_504 = arith.constant 0 : index
    %798 = vector.load %arg13[%c1_502, %c0_503, %c0_504] : memref<2x8x64xf32, #tpu.memory_space<vmem>>, vector<1x8x64xf32>
    %799 = vector.shape_cast %798 : vector<1x8x64xf32> to vector<8x64xf32>
    %800 = arith.truncf %799 : vector<8x64xf32> to vector<8x64xbf16>
    %c1_505 = arith.constant 1 : index
    %c0_506 = arith.constant 0 : index
    %c0_507 = arith.constant 0 : index
    %801 = vector.load %arg4[%c1_505, %c0_506, %c0_507] : memref<2x64x128xbf16, #tpu.memory_space<vmem>>, vector<1x64x128xbf16>
    %802 = vector.shape_cast %801 : vector<1x64x128xbf16> to vector<64x128xbf16>
    %cst_508 = arith.constant dense<0.000000e+00> : vector<8x128xf32>
    %803 = tpu.matmul %800, %802, %cst_508 {dimension_numbers = #tpu.dot_dimension_numbers<[1], [0], [0], [1], [0, 0, 1, 1], [], []>} : vector<8x64xbf16>, vector<64x128xbf16>, vector<8x128xf32> -> vector<8x128xf32>
    %c1_509 = arith.constant 1 : index
    %c0_510 = arith.constant 0 : index
    %c0_511 = arith.constant 0 : index
    %804 = vector.load %arg5[%c1_509, %c0_510, %c0_511] : memref<2x1x128xf32, #tpu.memory_space<vmem>>, vector<1x1x128xf32>
    %805 = vector.shape_cast %804 : vector<1x1x128xf32> to vector<1x128xf32>
    %806 = vector.broadcast %805 : vector<1x128xf32> to vector<8x128xf32>
    %807 = arith.addf %803, %806 : vector<8x128xf32>
    %808 = vector.extract_strided_slice %807 {offsets = [0, 0], sizes = [8, 32], strides = [1, 1]} : vector<8x128xf32> to vector<8x32xf32>
    %cst_512 = arith.constant 5.000000e-01 : f32
    %809 = vector.broadcast %cst_512 : f32 to vector<8x32xf32>
    %810 = arith.mulf %809, %808 : vector<8x32xf32>
    %811 = math.tanh %810 : vector<8x32xf32>
    %cst_513 = arith.constant 5.000000e-01 : f32
    %812 = vector.broadcast %cst_513 : f32 to vector<8x32xf32>
    %813 = arith.mulf %812, %811 : vector<8x32xf32>
    %cst_514 = arith.constant 5.000000e-01 : f32
    %814 = vector.broadcast %cst_514 : f32 to vector<8x32xf32>
    %815 = arith.addf %813, %814 : vector<8x32xf32>
    %816 = vector.extract_strided_slice %807 {offsets = [0, 32], sizes = [8, 32], strides = [1, 1]} : vector<8x128xf32> to vector<8x32xf32>
    %cst_515 = arith.constant 5.000000e-01 : f32
    %817 = vector.broadcast %cst_515 : f32 to vector<8x32xf32>
    %818 = arith.mulf %817, %816 : vector<8x32xf32>
    %819 = math.tanh %818 : vector<8x32xf32>
    %cst_516 = arith.constant 5.000000e-01 : f32
    %820 = vector.broadcast %cst_516 : f32 to vector<8x32xf32>
    %821 = arith.mulf %820, %819 : vector<8x32xf32>
    %cst_517 = arith.constant 5.000000e-01 : f32
    %822 = vector.broadcast %cst_517 : f32 to vector<8x32xf32>
    %823 = arith.addf %821, %822 : vector<8x32xf32>
    %824 = vector.extract_strided_slice %807 {offsets = [0, 64], sizes = [8, 32], strides = [1, 1]} : vector<8x128xf32> to vector<8x32xf32>
    %825 = math.tanh %824 : vector<8x32xf32>
    %826 = vector.extract_strided_slice %807 {offsets = [0, 96], sizes = [8, 32], strides = [1, 1]} : vector<8x128xf32> to vector<8x32xf32>
    %cst_518 = arith.constant 5.000000e-01 : f32
    %827 = vector.broadcast %cst_518 : f32 to vector<8x32xf32>
    %828 = arith.mulf %827, %826 : vector<8x32xf32>
    %829 = math.tanh %828 : vector<8x32xf32>
    %cst_519 = arith.constant 5.000000e-01 : f32
    %830 = vector.broadcast %cst_519 : f32 to vector<8x32xf32>
    %831 = arith.mulf %830, %829 : vector<8x32xf32>
    %cst_520 = arith.constant 5.000000e-01 : f32
    %832 = vector.broadcast %cst_520 : f32 to vector<8x32xf32>
    %833 = arith.addf %831, %832 : vector<8x32xf32>
    %c1_521 = arith.constant 1 : index
    %c0_522 = arith.constant 0 : index
    %c0_523 = arith.constant 0 : index
    %834 = vector.load %arg14[%c1_521, %c0_522, %c0_523] : memref<2x8x32xf32, #tpu.memory_space<vmem>>, vector<1x8x32xf32>
    %835 = vector.shape_cast %834 : vector<1x8x32xf32> to vector<8x32xf32>
    %836 = arith.mulf %823, %835 : vector<8x32xf32>
    %837 = arith.mulf %815, %825 : vector<8x32xf32>
    %838 = arith.addf %836, %837 : vector<8x32xf32>
    %839 = math.tanh %838 : vector<8x32xf32>
    %840 = arith.mulf %833, %839 : vector<8x32xf32>
    %c1_524 = arith.constant 1 : index
    %c0_525 = arith.constant 0 : index
    %c0_526 = arith.constant 0 : index
    %841 = vector.load %arg14[%c1_524, %c0_525, %c0_526] : memref<2x8x32xf32, #tpu.memory_space<vmem>>, vector<1x8x32xf32>
    %842 = vector.shape_cast %841 : vector<1x8x32xf32> to vector<8x32xf32>
    %843 = vector.shape_cast %838 : vector<8x32xf32> to vector<1x8x32xf32>
    tpu.vector_store %arg14[%c1_524, %c0_525, %c0_526], %843 {strides = array<i32>} : memref<2x8x32xf32, #tpu.memory_space<vmem>>, vector<1x8x32xf32>,
    %c1_527 = arith.constant 1 : index
    %c0_528 = arith.constant 0 : index
    %c32_529 = arith.constant 32 : index
    %844 = vector.load %arg13[%c1_527, %c0_528, %c32_529] : memref<2x8x64xf32, #tpu.memory_space<vmem>>, vector<1x8x32xf32>
    %845 = vector.shape_cast %844 : vector<1x8x32xf32> to vector<8x32xf32>
    %846 = vector.shape_cast %840 : vector<8x32xf32> to vector<1x8x32xf32>
    tpu.vector_store %arg13[%c1_527, %c0_528, %c32_529], %846 {strides = array<i32>} : memref<2x8x64xf32, #tpu.memory_space<vmem>>, vector<1x8x32xf32>,
    %847 = arith.truncf %840 : vector<8x32xf32> to vector<8x32xbf16>
    %c0_530 = arith.constant 0 : index
    %c0_531 = arith.constant 0 : index
    %848 = vector.load %arg6[%c0_530, %c0_531] : memref<32x128xbf16, #tpu.memory_space<vmem>>, vector<32x128xbf16>
    %cst_532 = arith.constant dense<0.000000e+00> : vector<8x128xf32>
    %849 = tpu.matmul %847, %848, %cst_532 {dimension_numbers = #tpu.dot_dimension_numbers<[1], [0], [0], [1], [0, 0, 1, 1], [], []>} : vector<8x32xbf16>, vector<32x128xbf16>, vector<8x128xf32> -> vector<8x128xf32>
    %c0_533 = arith.constant 0 : index
    %c0_534 = arith.constant 0 : index
    %850 = vector.load %arg7[%c0_533, %c0_534] : memref<1x128xf32, #tpu.memory_space<vmem>>, vector<1x128xf32>
    %851 = vector.broadcast %850 : vector<1x128xf32> to vector<8x128xf32>
    %852 = arith.addf %849, %851 : vector<8x128xf32>
    %853 = math.tanh %852 : vector<8x128xf32>
    %c6_535 = arith.constant 6 : index
    %c0_536 = arith.constant 0 : index
    %c0_537 = arith.constant 0 : index
    %854 = vector.load %arg10[%c6_535, %c0_536, %c0_537] : memref<8x8x128xf32, #tpu.memory_space<vmem>>, vector<1x8x128xf32>
    %855 = vector.shape_cast %854 : vector<1x8x128xf32> to vector<8x128xf32>
    %856 = vector.shape_cast %853 : vector<8x128xf32> to vector<1x8x128xf32>
    tpu.vector_store %arg10[%c6_535, %c0_536, %c0_537], %856 {strides = array<i32>} : memref<8x8x128xf32, #tpu.memory_space<vmem>>, vector<1x8x128xf32>,
    %c7 = arith.constant 7 : index
    %c0_538 = arith.constant 0 : index
    %c0_539 = arith.constant 0 : index
    %857 = vector.load %arg1[%c7, %c0_538, %c0_539] : memref<8x8x16xf32, #tpu.memory_space<vmem>>, vector<1x8x16xf32>
    %858 = vector.shape_cast %857 : vector<1x8x16xf32> to vector<8x16xf32>
    %859 = arith.truncf %858 : vector<8x16xf32> to vector<8x16xbf16>
    %c0_540 = arith.constant 0 : index
    %c0_541 = arith.constant 0 : index
    %860 = vector.load %arg2[%c0_540, %c0_541] : memref<16x32xbf16, #tpu.memory_space<vmem>>, vector<16x32xbf16>
    %cst_542 = arith.constant dense<0.000000e+00> : vector<8x32xf32>
    %861 = tpu.matmul %859, %860, %cst_542 {dimension_numbers = #tpu.dot_dimension_numbers<[1], [0], [0], [1], [0, 0, 1, 1], [], []>} : vector<8x16xbf16>, vector<16x32xbf16>, vector<8x32xf32> -> vector<8x32xf32>
    %c0_543 = arith.constant 0 : index
    %c0_544 = arith.constant 0 : index
    %862 = vector.load %arg3[%c0_543, %c0_544] : memref<1x32xf32, #tpu.memory_space<vmem>>, vector<1x32xf32>
    %863 = vector.broadcast %862 : vector<1x32xf32> to vector<8x32xf32>
    %864 = arith.addf %861, %863 : vector<8x32xf32>
    %c0_545 = arith.constant 0 : index
    %c0_546 = arith.constant 0 : index
    %c0_547 = arith.constant 0 : index
    %865 = vector.load %arg13[%c0_545, %c0_546, %c0_547] : memref<2x8x64xf32, #tpu.memory_space<vmem>>, vector<1x8x32xf32>
    %866 = vector.shape_cast %865 : vector<1x8x32xf32> to vector<8x32xf32>
    %867 = vector.shape_cast %864 : vector<8x32xf32> to vector<1x8x32xf32>
    tpu.vector_store %arg13[%c0_545, %c0_546, %c0_547], %867 {strides = array<i32>} : memref<2x8x64xf32, #tpu.memory_space<vmem>>, vector<1x8x32xf32>,
    %c0_548 = arith.constant 0 : index
    %c0_549 = arith.constant 0 : index
    %c0_550 = arith.constant 0 : index
    %868 = vector.load %arg13[%c0_548, %c0_549, %c0_550] : memref<2x8x64xf32, #tpu.memory_space<vmem>>, vector<1x8x64xf32>
    %869 = vector.shape_cast %868 : vector<1x8x64xf32> to vector<8x64xf32>
    %870 = arith.truncf %869 : vector<8x64xf32> to vector<8x64xbf16>
    %c0_551 = arith.constant 0 : index
    %c0_552 = arith.constant 0 : index
    %c0_553 = arith.constant 0 : index
    %871 = vector.load %arg4[%c0_551, %c0_552, %c0_553] : memref<2x64x128xbf16, #tpu.memory_space<vmem>>, vector<1x64x128xbf16>
    %872 = vector.shape_cast %871 : vector<1x64x128xbf16> to vector<64x128xbf16>
    %cst_554 = arith.constant dense<0.000000e+00> : vector<8x128xf32>
    %873 = tpu.matmul %870, %872, %cst_554 {dimension_numbers = #tpu.dot_dimension_numbers<[1], [0], [0], [1], [0, 0, 1, 1], [], []>} : vector<8x64xbf16>, vector<64x128xbf16>, vector<8x128xf32> -> vector<8x128xf32>
    %c0_555 = arith.constant 0 : index
    %c0_556 = arith.constant 0 : index
    %c0_557 = arith.constant 0 : index
    %874 = vector.load %arg5[%c0_555, %c0_556, %c0_557] : memref<2x1x128xf32, #tpu.memory_space<vmem>>, vector<1x1x128xf32>
    %875 = vector.shape_cast %874 : vector<1x1x128xf32> to vector<1x128xf32>
    %876 = vector.broadcast %875 : vector<1x128xf32> to vector<8x128xf32>
    %877 = arith.addf %873, %876 : vector<8x128xf32>
    %878 = vector.extract_strided_slice %877 {offsets = [0, 0], sizes = [8, 32], strides = [1, 1]} : vector<8x128xf32> to vector<8x32xf32>
    %cst_558 = arith.constant 5.000000e-01 : f32
    %879 = vector.broadcast %cst_558 : f32 to vector<8x32xf32>
    %880 = arith.mulf %879, %878 : vector<8x32xf32>
    %881 = math.tanh %880 : vector<8x32xf32>
    %cst_559 = arith.constant 5.000000e-01 : f32
    %882 = vector.broadcast %cst_559 : f32 to vector<8x32xf32>
    %883 = arith.mulf %882, %881 : vector<8x32xf32>
    %cst_560 = arith.constant 5.000000e-01 : f32
    %884 = vector.broadcast %cst_560 : f32 to vector<8x32xf32>
    %885 = arith.addf %883, %884 : vector<8x32xf32>
    %886 = vector.extract_strided_slice %877 {offsets = [0, 32], sizes = [8, 32], strides = [1, 1]} : vector<8x128xf32> to vector<8x32xf32>
    %cst_561 = arith.constant 5.000000e-01 : f32
    %887 = vector.broadcast %cst_561 : f32 to vector<8x32xf32>
    %888 = arith.mulf %887, %886 : vector<8x32xf32>
    %889 = math.tanh %888 : vector<8x32xf32>
    %cst_562 = arith.constant 5.000000e-01 : f32
    %890 = vector.broadcast %cst_562 : f32 to vector<8x32xf32>
    %891 = arith.mulf %890, %889 : vector<8x32xf32>
    %cst_563 = arith.constant 5.000000e-01 : f32
    %892 = vector.broadcast %cst_563 : f32 to vector<8x32xf32>
    %893 = arith.addf %891, %892 : vector<8x32xf32>
    %894 = vector.extract_strided_slice %877 {offsets = [0, 64], sizes = [8, 32], strides = [1, 1]} : vector<8x128xf32> to vector<8x32xf32>
    %895 = math.tanh %894 : vector<8x32xf32>
    %896 = vector.extract_strided_slice %877 {offsets = [0, 96], sizes = [8, 32], strides = [1, 1]} : vector<8x128xf32> to vector<8x32xf32>
    %cst_564 = arith.constant 5.000000e-01 : f32
    %897 = vector.broadcast %cst_564 : f32 to vector<8x32xf32>
    %898 = arith.mulf %897, %896 : vector<8x32xf32>
    %899 = math.tanh %898 : vector<8x32xf32>
    %cst_565 = arith.constant 5.000000e-01 : f32
    %900 = vector.broadcast %cst_565 : f32 to vector<8x32xf32>
    %901 = arith.mulf %900, %899 : vector<8x32xf32>
    %cst_566 = arith.constant 5.000000e-01 : f32
    %902 = vector.broadcast %cst_566 : f32 to vector<8x32xf32>
    %903 = arith.addf %901, %902 : vector<8x32xf32>
    %c0_567 = arith.constant 0 : index
    %c0_568 = arith.constant 0 : index
    %c0_569 = arith.constant 0 : index
    %904 = vector.load %arg14[%c0_567, %c0_568, %c0_569] : memref<2x8x32xf32, #tpu.memory_space<vmem>>, vector<1x8x32xf32>
    %905 = vector.shape_cast %904 : vector<1x8x32xf32> to vector<8x32xf32>
    %906 = arith.mulf %893, %905 : vector<8x32xf32>
    %907 = arith.mulf %885, %895 : vector<8x32xf32>
    %908 = arith.addf %906, %907 : vector<8x32xf32>
    %909 = math.tanh %908 : vector<8x32xf32>
    %910 = arith.mulf %903, %909 : vector<8x32xf32>
    %c0_570 = arith.constant 0 : index
    %c0_571 = arith.constant 0 : index
    %c0_572 = arith.constant 0 : index
    %911 = vector.load %arg14[%c0_570, %c0_571, %c0_572] : memref<2x8x32xf32, #tpu.memory_space<vmem>>, vector<1x8x32xf32>
    %912 = vector.shape_cast %911 : vector<1x8x32xf32> to vector<8x32xf32>
    %913 = vector.shape_cast %908 : vector<8x32xf32> to vector<1x8x32xf32>
    tpu.vector_store %arg14[%c0_570, %c0_571, %c0_572], %913 {strides = array<i32>} : memref<2x8x32xf32, #tpu.memory_space<vmem>>, vector<1x8x32xf32>,
    %c0_573 = arith.constant 0 : index
    %c0_574 = arith.constant 0 : index
    %c32_575 = arith.constant 32 : index
    %914 = vector.load %arg13[%c0_573, %c0_574, %c32_575] : memref<2x8x64xf32, #tpu.memory_space<vmem>>, vector<1x8x32xf32>
    %915 = vector.shape_cast %914 : vector<1x8x32xf32> to vector<8x32xf32>
    %916 = vector.shape_cast %910 : vector<8x32xf32> to vector<1x8x32xf32>
    tpu.vector_store %arg13[%c0_573, %c0_574, %c32_575], %916 {strides = array<i32>} : memref<2x8x64xf32, #tpu.memory_space<vmem>>, vector<1x8x32xf32>,
    %c1_576 = arith.constant 1 : index
    %c0_577 = arith.constant 0 : index
    %c0_578 = arith.constant 0 : index
    %917 = vector.load %arg13[%c1_576, %c0_577, %c0_578] : memref<2x8x64xf32, #tpu.memory_space<vmem>>, vector<1x8x32xf32>
    %918 = vector.shape_cast %917 : vector<1x8x32xf32> to vector<8x32xf32>
    %919 = vector.shape_cast %910 : vector<8x32xf32> to vector<1x8x32xf32>
    tpu.vector_store %arg13[%c1_576, %c0_577, %c0_578], %919 {strides = array<i32>} : memref<2x8x64xf32, #tpu.memory_space<vmem>>, vector<1x8x32xf32>,
    %c1_579 = arith.constant 1 : index
    %c0_580 = arith.constant 0 : index
    %c0_581 = arith.constant 0 : index
    %920 = vector.load %arg13[%c1_579, %c0_580, %c0_581] : memref<2x8x64xf32, #tpu.memory_space<vmem>>, vector<1x8x64xf32>
    %921 = vector.shape_cast %920 : vector<1x8x64xf32> to vector<8x64xf32>
    %922 = arith.truncf %921 : vector<8x64xf32> to vector<8x64xbf16>
    %c1_582 = arith.constant 1 : index
    %c0_583 = arith.constant 0 : index
    %c0_584 = arith.constant 0 : index
    %923 = vector.load %arg4[%c1_582, %c0_583, %c0_584] : memref<2x64x128xbf16, #tpu.memory_space<vmem>>, vector<1x64x128xbf16>
    %924 = vector.shape_cast %923 : vector<1x64x128xbf16> to vector<64x128xbf16>
    %cst_585 = arith.constant dense<0.000000e+00> : vector<8x128xf32>
    %925 = tpu.matmul %922, %924, %cst_585 {dimension_numbers = #tpu.dot_dimension_numbers<[1], [0], [0], [1], [0, 0, 1, 1], [], []>} : vector<8x64xbf16>, vector<64x128xbf16>, vector<8x128xf32> -> vector<8x128xf32>
    %c1_586 = arith.constant 1 : index
    %c0_587 = arith.constant 0 : index
    %c0_588 = arith.constant 0 : index
    %926 = vector.load %arg5[%c1_586, %c0_587, %c0_588] : memref<2x1x128xf32, #tpu.memory_space<vmem>>, vector<1x1x128xf32>
    %927 = vector.shape_cast %926 : vector<1x1x128xf32> to vector<1x128xf32>
    %928 = vector.broadcast %927 : vector<1x128xf32> to vector<8x128xf32>
    %929 = arith.addf %925, %928 : vector<8x128xf32>
    %930 = vector.extract_strided_slice %929 {offsets = [0, 0], sizes = [8, 32], strides = [1, 1]} : vector<8x128xf32> to vector<8x32xf32>
    %cst_589 = arith.constant 5.000000e-01 : f32
    %931 = vector.broadcast %cst_589 : f32 to vector<8x32xf32>
    %932 = arith.mulf %931, %930 : vector<8x32xf32>
    %933 = math.tanh %932 : vector<8x32xf32>
    %cst_590 = arith.constant 5.000000e-01 : f32
    %934 = vector.broadcast %cst_590 : f32 to vector<8x32xf32>
    %935 = arith.mulf %934, %933 : vector<8x32xf32>
    %cst_591 = arith.constant 5.000000e-01 : f32
    %936 = vector.broadcast %cst_591 : f32 to vector<8x32xf32>
    %937 = arith.addf %935, %936 : vector<8x32xf32>
    %938 = vector.extract_strided_slice %929 {offsets = [0, 32], sizes = [8, 32], strides = [1, 1]} : vector<8x128xf32> to vector<8x32xf32>
    %cst_592 = arith.constant 5.000000e-01 : f32
    %939 = vector.broadcast %cst_592 : f32 to vector<8x32xf32>
    %940 = arith.mulf %939, %938 : vector<8x32xf32>
    %941 = math.tanh %940 : vector<8x32xf32>
    %cst_593 = arith.constant 5.000000e-01 : f32
    %942 = vector.broadcast %cst_593 : f32 to vector<8x32xf32>
    %943 = arith.mulf %942, %941 : vector<8x32xf32>
    %cst_594 = arith.constant 5.000000e-01 : f32
    %944 = vector.broadcast %cst_594 : f32 to vector<8x32xf32>
    %945 = arith.addf %943, %944 : vector<8x32xf32>
    %946 = vector.extract_strided_slice %929 {offsets = [0, 64], sizes = [8, 32], strides = [1, 1]} : vector<8x128xf32> to vector<8x32xf32>
    %947 = math.tanh %946 : vector<8x32xf32>
    %948 = vector.extract_strided_slice %929 {offsets = [0, 96], sizes = [8, 32], strides = [1, 1]} : vector<8x128xf32> to vector<8x32xf32>
    %cst_595 = arith.constant 5.000000e-01 : f32
    %949 = vector.broadcast %cst_595 : f32 to vector<8x32xf32>
    %950 = arith.mulf %949, %948 : vector<8x32xf32>
    %951 = math.tanh %950 : vector<8x32xf32>
    %cst_596 = arith.constant 5.000000e-01 : f32
    %952 = vector.broadcast %cst_596 : f32 to vector<8x32xf32>
    %953 = arith.mulf %952, %951 : vector<8x32xf32>
    %cst_597 = arith.constant 5.000000e-01 : f32
    %954 = vector.broadcast %cst_597 : f32 to vector<8x32xf32>
    %955 = arith.addf %953, %954 : vector<8x32xf32>
    %c1_598 = arith.constant 1 : index
    %c0_599 = arith.constant 0 : index
    %c0_600 = arith.constant 0 : index
    %956 = vector.load %arg14[%c1_598, %c0_599, %c0_600] : memref<2x8x32xf32, #tpu.memory_space<vmem>>, vector<1x8x32xf32>
    %957 = vector.shape_cast %956 : vector<1x8x32xf32> to vector<8x32xf32>
    %958 = arith.mulf %945, %957 : vector<8x32xf32>
    %959 = arith.mulf %937, %947 : vector<8x32xf32>
    %960 = arith.addf %958, %959 : vector<8x32xf32>
    %961 = math.tanh %960 : vector<8x32xf32>
    %962 = arith.mulf %955, %961 : vector<8x32xf32>
    %c1_601 = arith.constant 1 : index
    %c0_602 = arith.constant 0 : index
    %c0_603 = arith.constant 0 : index
    %963 = vector.load %arg14[%c1_601, %c0_602, %c0_603] : memref<2x8x32xf32, #tpu.memory_space<vmem>>, vector<1x8x32xf32>
    %964 = vector.shape_cast %963 : vector<1x8x32xf32> to vector<8x32xf32>
    %965 = vector.shape_cast %960 : vector<8x32xf32> to vector<1x8x32xf32>
    tpu.vector_store %arg14[%c1_601, %c0_602, %c0_603], %965 {strides = array<i32>} : memref<2x8x32xf32, #tpu.memory_space<vmem>>, vector<1x8x32xf32>,
    %c1_604 = arith.constant 1 : index
    %c0_605 = arith.constant 0 : index
    %c32_606 = arith.constant 32 : index
    %966 = vector.load %arg13[%c1_604, %c0_605, %c32_606] : memref<2x8x64xf32, #tpu.memory_space<vmem>>, vector<1x8x32xf32>
    %967 = vector.shape_cast %966 : vector<1x8x32xf32> to vector<8x32xf32>
    %968 = vector.shape_cast %962 : vector<8x32xf32> to vector<1x8x32xf32>
    tpu.vector_store %arg13[%c1_604, %c0_605, %c32_606], %968 {strides = array<i32>} : memref<2x8x64xf32, #tpu.memory_space<vmem>>, vector<1x8x32xf32>,
    %969 = arith.truncf %962 : vector<8x32xf32> to vector<8x32xbf16>
    %c0_607 = arith.constant 0 : index
    %c0_608 = arith.constant 0 : index
    %970 = vector.load %arg6[%c0_607, %c0_608] : memref<32x128xbf16, #tpu.memory_space<vmem>>, vector<32x128xbf16>
    %cst_609 = arith.constant dense<0.000000e+00> : vector<8x128xf32>
    %971 = tpu.matmul %969, %970, %cst_609 {dimension_numbers = #tpu.dot_dimension_numbers<[1], [0], [0], [1], [0, 0, 1, 1], [], []>} : vector<8x32xbf16>, vector<32x128xbf16>, vector<8x128xf32> -> vector<8x128xf32>
    %c0_610 = arith.constant 0 : index
    %c0_611 = arith.constant 0 : index
    %972 = vector.load %arg7[%c0_610, %c0_611] : memref<1x128xf32, #tpu.memory_space<vmem>>, vector<1x128xf32>
    %973 = vector.broadcast %972 : vector<1x128xf32> to vector<8x128xf32>
    %974 = arith.addf %971, %973 : vector<8x128xf32>
    %975 = math.tanh %974 : vector<8x128xf32>
    %c7_612 = arith.constant 7 : index
    %c0_613 = arith.constant 0 : index
    %c0_614 = arith.constant 0 : index
    %976 = vector.load %arg10[%c7_612, %c0_613, %c0_614] : memref<8x8x128xf32, #tpu.memory_space<vmem>>, vector<1x8x128xf32>
    %977 = vector.shape_cast %976 : vector<1x8x128xf32> to vector<8x128xf32>
    %978 = vector.shape_cast %975 : vector<8x128xf32> to vector<1x8x128xf32>
    tpu.vector_store %arg10[%c7_612, %c0_613, %c0_614], %978 {strides = array<i32>} : memref<8x8x128xf32, #tpu.memory_space<vmem>>, vector<1x8x128xf32>,
    %c0_i32_615 = arith.constant 0 : i32
    %979 = arith.cmpi eq, %arg0, %c0_i32_615 : i32
    %980 = arith.extui %979 : i1 to i32
    %c0_i32_616 = arith.constant 0 : i32
    %981 = arith.cmpi ne, %980, %c0_i32_616 : i32
    scf.if %981 {
      %c0_617 = arith.constant 0 : index
      %c0_618 = arith.constant 0 : index
      %c32_619 = arith.constant 32 : index
      %982 = vector.load %arg13[%c0_617, %c0_618, %c32_619] : memref<2x8x64xf32, #tpu.memory_space<vmem>>, vector<2x8x32xf32>
      %c0_620 = arith.constant 0 : index
      %c0_621 = arith.constant 0 : index
      %c0_622 = arith.constant 0 : index
      %983 = vector.load %arg11[%c0_620, %c0_621, %c0_622] : memref<2x8x32xf32, #tpu.memory_space<vmem>>, vector<2x8x32xf32>
      tpu.vector_store %arg11[%c0_620, %c0_621, %c0_622], %982 {strides = array<i32>} : memref<2x8x32xf32, #tpu.memory_space<vmem>>, vector<2x8x32xf32>,
      %c0_623 = arith.constant 0 : index
      %c0_624 = arith.constant 0 : index
      %c0_625 = arith.constant 0 : index
      %984 = vector.load %arg14[%c0_623, %c0_624, %c0_625] : memref<2x8x32xf32, #tpu.memory_space<vmem>>, vector<2x8x32xf32>
      %c0_626 = arith.constant 0 : index
      %c0_627 = arith.constant 0 : index
      %c0_628 = arith.constant 0 : index
      %985 = vector.load %arg12[%c0_626, %c0_627, %c0_628] : memref<2x8x32xf32, #tpu.memory_space<vmem>>, vector<2x8x32xf32>
      tpu.vector_store %arg12[%c0_626, %c0_627, %c0_628], %984 {strides = array<i32>} : memref<2x8x32xf32, #tpu.memory_space<vmem>>, vector<2x8x32xf32>,
    } else {
    }
    return
  }
  func.func @transform_0(%arg0: i32) -> (i32, i32, i32) {
    %c0_i32 = arith.constant 0 : i32
    %c0_i32_0 = arith.constant 0 : i32
    %c0_i32_1 = arith.constant 0 : i32
    return %arg0, %c0_i32, %c0_i32_0 : i32, i32, i32
  }
  func.func @transform_1(%arg0: i32) -> (i32, i32) {
    %c0_i32 = arith.constant 0 : i32
    %c0_i32_0 = arith.constant 0 : i32
    %c0_i32_1 = arith.constant 0 : i32
    return %c0_i32, %c0_i32_0 : i32, i32
  }
  func.func @transform_2(%arg0: i32) -> (i32, i32) {
    %c0_i32 = arith.constant 0 : i32
    %c0_i32_0 = arith.constant 0 : i32
    %c0_i32_1 = arith.constant 0 : i32
    return %c0_i32, %c0_i32_0 : i32, i32
  }
  func.func @transform_3(%arg0: i32) -> (i32, i32, i32) {
    %c0_i32 = arith.constant 0 : i32
    %c0_i32_0 = arith.constant 0 : i32
    %c0_i32_1 = arith.constant 0 : i32
    %c0_i32_2 = arith.constant 0 : i32
    return %c0_i32, %c0_i32_0, %c0_i32_1 : i32, i32, i32
  }
  func.func @transform_4(%arg0: i32) -> (i32, i32, i32) {
    %c0_i32 = arith.constant 0 : i32
    %c0_i32_0 = arith.constant 0 : i32
    %c0_i32_1 = arith.constant 0 : i32
    %c0_i32_2 = arith.constant 0 : i32
    return %c0_i32, %c0_i32_0, %c0_i32_1 : i32, i32, i32
  }
  func.func @transform_5(%arg0: i32) -> (i32, i32) {
    %c0_i32 = arith.constant 0 : i32
    %c0_i32_0 = arith.constant 0 : i32
    %c0_i32_1 = arith.constant 0 : i32
    return %c0_i32, %c0_i32_0 : i32, i32
  }
  func.func @transform_6(%arg0: i32) -> (i32, i32) {
    %c0_i32 = arith.constant 0 : i32
    %c0_i32_0 = arith.constant 0 : i32
    %c0_i32_1 = arith.constant 0 : i32
    return %c0_i32, %c0_i32_0 : i32, i32
  }
  func.func @transform_7(%arg0: i32) -> (i32, i32, i32) {
    %c0_i32 = arith.constant 0 : i32
    %c0_i32_0 = arith.constant 0 : i32
    %c0_i32_1 = arith.constant 0 : i32
    %c0_i32_2 = arith.constant 0 : i32
    return %c0_i32, %c0_i32_0, %c0_i32_1 : i32, i32, i32
  }
  func.func @transform_8(%arg0: i32) -> (i32, i32, i32) {
    %c0_i32 = arith.constant 0 : i32
    %c0_i32_0 = arith.constant 0 : i32
    %c0_i32_1 = arith.constant 0 : i32
    %c0_i32_2 = arith.constant 0 : i32
    return %c0_i32, %c0_i32_0, %c0_i32_1 : i32, i32, i32
  }
  func.func @transform_9(%arg0: i32) -> (i32, i32, i32) {
    %c0_i32 = arith.constant 0 : i32
    %c0_i32_0 = arith.constant 0 : i32
    %c0_i32_1 = arith.constant 0 : i32
    return %arg0, %c0_i32, %c0_i32_0 : i32, i32, i32
  }
  func.func @transform_10(%arg0: i32) -> (i32, i32, i32) {
    %c0_i32 = arith.constant 0 : i32
    %c0_i32_0 = arith.constant 0 : i32
    %c0_i32_1 = arith.constant 0 : i32
    %c0_i32_2 = arith.constant 0 : i32
    return %c0_i32, %c0_i32_0, %c0_i32_1 : i32, i32, i32
  }
  func.func @transform_11(%arg0: i32) -> (i32, i32, i32) {
    %c0_i32 = arith.constant 0 : i32
    %c0_i32_0 = arith.constant 0 : i32
    %c0_i32_1 = arith.constant 0 : i32
    %c0_i32_2 = arith.constant 0 : i32
    return %c0_i32, %c0_i32_0, %c0_i32_1 : i32, i32, i32
  }
}

</mosaic_0001>

<llo_original>
// kernel: tpu_custom_call.1
$region0: #{tpu_custom_call.1}
  #allocation0 [shape = 'u32[]', space=smem, size = 0x4, offset = 0x4, fixed_abs, tag = 'smem constant byte address 0x4 - core index']
  #allocation1 [shape = 'u32[144,128]{1,0:T(1,128)}', space=vmem, size = 0x12000, scoped, tag = 'internal scratch']
  #allocation2 [shape = 'f32[2,8,64]{2,1,0:T(8,128)}', space=vmem, size = 0x2000, scoped, tag = 'scratch operand']
  #allocation3 [shape = 'f32[2,8,32]{2,1,0:T(8,128)}', space=vmem, size = 0x2000, scoped, tag = 'scratch operand']
  %s0 = inlined_call_operand.hbm [shape: f32[8,8,16], index: 0, kind: input, shape index: {}]
  %s1 = inlined_call_operand.hbm [shape: bf16[16,32], index: 1, kind: input, shape index: {}]
  %s2 = inlined_call_operand.hbm [shape: f32[1,32], index: 2, kind: input, shape index: {}]
  %s3 = inlined_call_operand.hbm [shape: bf16[2,64,128], index: 3, kind: input, shape index: {}]
  %s4 = inlined_call_operand.vmem [shape: f32[2,1,128], index: 4, kind: input, shape index: {}]
  %s5 = inlined_call_operand.vmem [shape: bf16[32,128], index: 5, kind: input, shape index: {}]
  %s6 = inlined_call_operand.vmem [shape: f32[1,128], index: 6, kind: input, shape index: {}]
  %s7 = inlined_call_operand.hbm [shape: f32[2,8,32], index: 7, kind: input, shape index: {}]
  %s8 = inlined_call_operand.hbm [shape: f32[2,8,32], index: 8, kind: input, shape index: {}]
  %s9 = inlined_call_operand.hbm [shape: f32[8,8,128], index: 9, kind: output, shape index: {0}]
  %s10 = inlined_call_operand.hbm [shape: f32[2,8,32], index: 10, kind: output, shape index: {1}]
  %s11 = inlined_call_operand.hbm [shape: f32[2,8,32], index: 11, kind: output, shape index: {2}]
  %12 = xla_tuple %s9, %s10, %s11
  %s13 = sld [smem:[#allocation0]]
  $region94: #{tpu_custom_call.1} parent=0
    _
  %s15 = ssub.s32 1, %s13
  %s16 = scalar_select 0, %s15, %s13
  $region1: #{tpu_custom_call.1} parent=0
    #allocation4 [shape = 'u8[32768]{0}', space=vmem, size = 0x8000, scoped, tag = 'input window, operand 0, single buffered']
    #allocation5 [shape = 's32[1]{0}', space=sflag, size = 0x4, scoped, tag = 'scoped memory for tpu_custom_call.1']
    #allocation6 [shape = 's32[1]{0}', space=sflag, size = 0x4, scoped, tag = 'scoped memory for tpu_custom_call.1']
    #allocation7 [shape = 'u8[4096]{0}', space=vmem, size = 0x1000, scoped, tag = 'input window, operand 1, single buffered']
    #allocation8 [shape = 's32[1]{0}', space=sflag, size = 0x4, scoped, tag = 'scoped memory for tpu_custom_call.1']
    #allocation9 [shape = 'u8[512]{0}', space=vmem, size = 0x400, scoped, tag = 'input window, operand 2, single buffered']
    #allocation10 [shape = 'u8[32768]{0}', space=vmem, size = 0x8000, scoped, tag = 'input window, operand 3, single buffered']
    #allocation11 [shape = 's32[1]{0}', space=sflag, size = 0x4, scoped, tag = 'scoped memory for tpu_custom_call.1']
    #allocation12 [shape = 'u8[8192]{0}', space=vmem, size = 0x2000, scoped, tag = 'input window, operand 7, single buffered']
    #allocation13 [shape = 'u8[8192]{0}', space=vmem, size = 0x2000, scoped, tag = 'input window, operand 8, single buffered']
    #allocation14 [shape = 's32[1]{0}', space=sflag, size = 0x4, scoped, tag = 'scoped memory for tpu_custom_call.1']
    #allocation15 [shape = 'u8[32768]{0}', space=vmem, size = 0x8000, scoped, tag = 'output window, operand 0, single buffered']
    #allocation16 [shape = 'u8[8192]{0}', space=vmem, size = 0x2000, scoped, tag = 'output window, operand 1, single buffered']
    #allocation17 [shape = 's32[1]{0}', space=sflag, size = 0x4, scoped, tag = 'scoped memory for tpu_custom_call.1']
    #allocation18 [shape = 'u8[8192]{0}', space=vmem, size = 0x2000, scoped, tag = 'output window, operand 2, single buffered']
    %17 = vsyncpa [#allocation5], 0
    %18 = vsyncpa [#allocation8], 0
    %19 = vsyncpa [#allocation11], 0
    %20 = vsyncpa [#allocation14], 0
    %21 = vsyncpa [#allocation6], 0
    %22 = vsyncpa [#allocation17], 0
    // Predicated region
    $region2: #{tpu_custom_call.1} parent=1 // pred_check
      _
    $region3: #{tpu_custom_call.1} parent=1 // pred_check_branch
      %24 = sbr.rel (0) target = $region5
    $region4: #{tpu_custom_call.1} parent=1 // pred_region
      %s26 = ssub.s32 1024, 1024
      %27 = vsyncadd [#allocation5], %s26
      %s28 = sshll.u32 [#allocation4], 4
      %s29 = int_to_ptr.vmem [resolvable:$true] %s28
      %34 = dma.hbm_to_vmem [thread:$0]  %s0, 1024, %s29, [#allocation5], 128, 128, 8
    $region5: #{tpu_custom_call.1} parent=1 // pred_fallthru
      _
    // Predicated region
    $region6: #{tpu_custom_call.1} parent=1 // pred_check
      _
    $region7: #{tpu_custom_call.1} parent=1 // pred_check_branch
      %36 = sbr.rel (0) target = $region9
    $region8: #{tpu_custom_call.1} parent=1 // pred_region
      %s38 = ssub.s32 128, 128
      %39 = vsyncadd [#allocation8], %s38
      %s40 = sshll.u32 [#allocation7], 4
      %s41 = int_to_ptr.vmem [resolvable:$true] %s40
      %46 = dma.hbm_to_vmem [thread:$0]  %s1, 128, %s41, [#allocation8], 64, 64, 4
    $region9: #{tpu_custom_call.1} parent=1 // pred_fallthru
      _
    // Predicated region
    $region10: #{tpu_custom_call.1} parent=1 // pred_check
      _
    $region11: #{tpu_custom_call.1} parent=1 // pred_check_branch
      %48 = sbr.rel (0) target = $region13
    $region12: #{tpu_custom_call.1} parent=1 // pred_region
      %s50 = ssub.s32 16, 16
      %51 = vsyncadd [#allocation8], %s50
      %s53 = sshll.u32 [#allocation9], 4
      %s54 = int_to_ptr.vmem [resolvable:$true] %s53
      %56 = dma.hbm_to_vmem [thread:$0]  %s2, 16, %s54, [#allocation8]
    $region13: #{tpu_custom_call.1} parent=1 // pred_fallthru
      _
    // Predicated region
    $region14: #{tpu_custom_call.1} parent=1 // pred_check
      _
    $region15: #{tpu_custom_call.1} parent=1 // pred_check_branch
      %58 = sbr.rel (0) target = $region17
    $region16: #{tpu_custom_call.1} parent=1 // pred_region
      %s60 = ssub.s32 1024, 1024
      %61 = vsyncadd [#allocation11], %s60
      %s62 = sshll.u32 [#allocation10], 4
      %s63 = int_to_ptr.vmem [resolvable:$true] %s62
      %68 = dma.hbm_to_vmem [thread:$0]  %s3, 1024, %s63, [#allocation11], 64, 64, 4
    $region17: #{tpu_custom_call.1} parent=1 // pred_fallthru
      _
    // Predicated region
    $region18: #{tpu_custom_call.1} parent=1 // pred_check
      _
    $region19: #{tpu_custom_call.1} parent=1 // pred_check_branch
      %70 = sbr.rel (0) target = $region21
    $region20: #{tpu_custom_call.1} parent=1 // pred_region
      _
    $region21: #{tpu_custom_call.1} parent=1 // pred_fallthru
      _
    // Predicated region
    $region22: #{tpu_custom_call.1} parent=1 // pred_check
      _
    $region23: #{tpu_custom_call.1} parent=1 // pred_check_branch
      %72 = sbr.rel (0) target = $region25
    $region24: #{tpu_custom_call.1} parent=1 // pred_region
      _
    $region25: #{tpu_custom_call.1} parent=1 // pred_fallthru
      _
    // Predicated region
    $region26: #{tpu_custom_call.1} parent=1 // pred_check
      _
    $region27: #{tpu_custom_call.1} parent=1 // pred_check_branch
      %74 = sbr.rel (0) target = $region29
    $region28: #{tpu_custom_call.1} parent=1 // pred_region
      _
    $region29: #{tpu_custom_call.1} parent=1 // pred_fallthru
      _
    // Predicated region
    $region30: #{tpu_custom_call.1} parent=1 // pred_check
      _
    $region31: #{tpu_custom_call.1} parent=1 // pred_check_branch
      %76 = sbr.rel (0) target = $region33
    $region32: #{tpu_custom_call.1} parent=1 // pred_region
      %s78 = ssub.s32 256, 256
      %79 = vsyncadd [#allocation11], %s78
      %s80 = sshll.u32 [#allocation12], 4
      %s81 = int_to_ptr.vmem [resolvable:$true] %s80
      %86 = dma.hbm_to_vmem [thread:$0]  %s7, 256, %s81, [#allocation11], 128, 128, 8
    $region33: #{tpu_custom_call.1} parent=1 // pred_fallthru
      _
    // Predicated region
    $region34: #{tpu_custom_call.1} parent=1 // pred_check
      _
    $region35: #{tpu_custom_call.1} parent=1 // pred_check_branch
      %88 = sbr.rel (0) target = $region37
    $region36: #{tpu_custom_call.1} parent=1 // pred_region
      %s90 = ssub.s32 256, 256
      %91 = vsyncadd [#allocation14], %s90
      %s92 = sshll.u32 [#allocation13], 4
      %s93 = int_to_ptr.vmem [resolvable:$true] %s92
      %98 = dma.hbm_to_vmem [thread:$0]  %s8, 256, %s93, [#allocation14], 128, 128, 8
    $region37: #{tpu_custom_call.1} parent=1 // pred_fallthru
      _
    // Predicated region
    $region38: #{tpu_custom_call.1} parent=1 // pred_check
      _
    $region39: #{tpu_custom_call.1} parent=1 // pred_check_branch
      %100 = sbr.rel (0) target = $region41
    $region40: #{tpu_custom_call.1} parent=1 // pred_region
      %101 = dma.done [#allocation5], 1024
    $region41: #{tpu_custom_call.1} parent=1 // pred_fallthru
      _
    // Predicated region
    $region42: #{tpu_custom_call.1} parent=1 // pred_check
      _
    $region43: #{tpu_custom_call.1} parent=1 // pred_check_branch
      %103 = sbr.rel (0) target = $region45
    $region44: #{tpu_custom_call.1} parent=1 // pred_region
      %104 = dma.done [#allocation8], 128
    $region45: #{tpu_custom_call.1} parent=1 // pred_fallthru
      _
    // Predicated region
    $region46: #{tpu_custom_call.1} parent=1 // pred_check
      _
    $region47: #{tpu_custom_call.1} parent=1 // pred_check_branch
      %106 = sbr.rel (0) target = $region49
    $region48: #{tpu_custom_call.1} parent=1 // pred_region
      %107 = dma.done [#allocation8], 16
    $region49: #{tpu_custom_call.1} parent=1 // pred_fallthru
      _
    // Predicated region
    $region50: #{tpu_custom_call.1} parent=1 // pred_check
      _
    $region51: #{tpu_custom_call.1} parent=1 // pred_check_branch
      %109 = sbr.rel (0) target = $region53
    $region52: #{tpu_custom_call.1} parent=1 // pred_region
      %110 = dma.done [#allocation11], 1024
    $region53: #{tpu_custom_call.1} parent=1 // pred_fallthru
      _
    // Predicated region
    $region54: #{tpu_custom_call.1} parent=1 // pred_check
      _
    $region55: #{tpu_custom_call.1} parent=1 // pred_check_branch
      %112 = sbr.rel (0) target = $region57
    $region56: #{tpu_custom_call.1} parent=1 // pred_region
      %113 = dma.done [#allocation11], 256
    $region57: #{tpu_custom_call.1} parent=1 // pred_fallthru
      _
    // Predicated region
    $region58: #{tpu_custom_call.1} parent=1 // pred_check
      _
    $region59: #{tpu_custom_call.1} parent=1 // pred_check_branch
      %115 = sbr.rel (0) target = $region61
    $region60: #{tpu_custom_call.1} parent=1 // pred_region
      %116 = dma.done [#allocation14], 256
    $region61: #{tpu_custom_call.1} parent=1 // pred_fallthru
      _
    %p118 = scmp.eq.s32.totalorder 0, 0
    // Predicated region
    $region62: #{tpu_custom_call.1} parent=1 // pred_check
      %p119 = pneg %p118
    $region63: #{tpu_custom_call.1} parent=1 // pred_check_branch
      %121 = sbr.rel (%p119) target = $region65
    $region64: #{tpu_custom_call.1} parent=1 // pred_region
      %vm122 = vcmask 523264
      %123 = vst.msk [vmem:[#allocation2] sm:$0xff] %vm122, 0.0
      %124 = vst.msk [vmem:[#allocation2 + $0x8] sm:$0xff] %vm122, 0.0
      %v125 = vld [vmem:[#allocation12] sm:$0xff]
      %v126 = vld [vmem:[#allocation12 + $0x8] sm:$0xff]
      %129 = vrot.lane.b32.xlu0 %v125, 32
      %v130 = vpop.permute.xlu0 %129
      %131 = vrot.lane.b32.xlu0 %v126, 32
      %v132 = vpop.permute.xlu0 %131
      %vm135 = vcmask 523520
      %136 = vst.msk [vmem:[#allocation2] sm:$0xff] %vm135, %v130
      %137 = vst.msk [vmem:[#allocation2 + $0x8] sm:$0xff] %vm135, %v132
      %v138 = vld [vmem:[#allocation13] sm:$0xff]
      %v139 = vld [vmem:[#allocation13 + $0x8] sm:$0xff]
      %vm140 = vcmask 261120
      %141 = vst.msk [vmem:[#allocation3] sm:$0xff] %vm140, %v138
      %142 = vst.msk [vmem:[#allocation3 + $0x8] sm:$0xff] %vm140, %v139
    $region65: #{tpu_custom_call.1} parent=1 // pred_fallthru
      _
    %v143 = vld [vmem:[#allocation4] sm:$0xff]
    %v144 = vpack.c.bf16 %v143, %v143
    %v145 = vld [vmem:[#allocation7] sm:$0xf]
    %v146 = vld [vmem:[#allocation7 + $0x4] sm:$0xf]
    %v147 = vld [vmem:[#allocation9] sm:$0x1]
    %v149 = vlaneseq
    %v150 = vshrl.u32 %v149, 7
    %v151 = vsub.s32 0, %v150
    %v152 = vrot.slane %v147, %v151
    %v156 = vunpack.c.l.b16 %v145
    %v157 = vunpack.c.l.b16 %v146
    %v158 = vpack.c.b16 %v157, %v156
    %vm160 = vcmask 130048
    %v162 = vsel %vm160, %v144, 0
    %164 = vmatprep.subr.bf16.mxu0 0
    %165 = vmatpush1.bf16.msra.mxu0 %v158
    %166 = vmatprep.subr.bf16.mxu0 0
    %167 = vmatpush1.bf16.msra.mxu0 0
    %168 = vmatprep.subr.bf16.mxu0 0
    %169 = vmatpush1.bf16.msra.mxu0 0
    %170 = vmatprep.subr.bf16.mxu0 0
    %171 = vmatpush1.bf16.msra.mxu0 0
    %172 = vmatprep.subr.bf16.mxu0 0
    %173 = vmatpush1.bf16.msra.mxu0 0
    %174 = vmatprep.subr.bf16.mxu0 0
    %175 = vmatpush1.bf16.msra.mxu0 0
    %176 = vmatprep.subr.bf16.mxu0 0
    %177 = vmatpush1.bf16.msra.mxu0 0
    %178 = vmatprep.subr.bf16.mxu0 0
    %179 = vmatpush1.bf16.msra.mxu0 0
    %180 = vmatprep.subr.bf16.mxu0 0
    %181 = vmatpush1.bf16.msra.mxu0 0
    %182 = vmatprep.subr.bf16.mxu0 0
    %183 = vmatpush1.bf16.msra.mxu0 0
    %184 = vmatprep.subr.bf16.mxu0 0
    %185 = vmatpush1.bf16.msra.mxu0 0
    %186 = vmatprep.subr.bf16.mxu0 0
    %187 = vmatpush1.bf16.msra.mxu0 0
    %188 = vmatprep.subr.bf16.mxu0 0
    %189 = vmatpush1.bf16.msra.mxu0 0
    %190 = vmatprep.subr.bf16.mxu0 0
    %191 = vmatpush1.bf16.msra.mxu0 0
    %192 = vmatprep.subr.bf16.mxu0 0
    %193 = vmatpush1.bf16.msra.mxu0 0
    %194 = vmatprep.subr.bf16.mxu0 0
    %195 = vmatpush1.bf16.msra.mxu0 0
    %196 = vmatprep.mubr.bf16.mxu0 0
    %197 = vmatmul.mubr.bf16.gmra.mrb[0].mxu0 %v162
    %v198 = vpop.f32.mrb[0].mxu0
    %v199 = vadd.f32 %v152, %v198
    %v200 = vpop.f32.mrb[0].mxu0
    %v201 = vpop.f32.mrb[0].mxu0
    %v202 = vpop.f32.mrb[0].mxu0
    %203 = vdwg.mxu0
    %vm204 = vcmask 261120
    %205 = vst.msk [vmem:[#allocation2] sm:$0xff] %vm204, %v199
    %v206 = vld [vmem:[#allocation2] sm:$0xff]
    %v207 = vpack.c.bf16 %v206, %v206
    %v208 = vld [vmem:[#allocation10] sm:$0xf]
    %v209 = vld [vmem:[#allocation10 + $0x4] sm:$0xf]
    %v210 = vld [vmem:[#allocation10 + $0x8] sm:$0xf]
    %v211 = vld [vmem:[#allocation10 + $0xc] sm:$0xf]
    %v212 = vld [vmem:[#allocation10 + $0x10] sm:$0xf]
    %v213 = vld [vmem:[#allocation10 + $0x14] sm:$0xf]
    %v214 = vld [vmem:[#allocation10 + $0x18] sm:$0xf]
    %v215 = vld [vmem:[#allocation10 + $0x1c] sm:$0xf]
    %v216 = vld [vmem:[%s4] sm:$0x1]
    %v218 = vlaneseq
    %v219 = vshrl.u32 %v218, 7
    %v220 = vsub.s32 0, %v219
    %v221 = vrot.slane %v216, %v220
    %v231 = vunpack.c.l.b16 %v208
    %v232 = vunpack.c.l.b16 %v209
    %v233 = vunpack.c.l.b16 %v210
    %v234 = vunpack.c.l.b16 %v211
    %v235 = vunpack.c.l.b16 %v212
    %v236 = vunpack.c.l.b16 %v213
    %v237 = vunpack.c.l.b16 %v214
    %v238 = vunpack.c.l.b16 %v215
    %v239 = vpack.c.b16 %v232, %v231
    %v240 = vpack.c.b16 %v234, %v233
    %v241 = vpack.c.b16 %v236, %v235
    %v242 = vpack.c.b16 %v238, %v237
    %vm247 = vcmask 523264
    %v249 = vsel %vm247, %v207, 0
    %251 = vmatprep.subr.bf16.mxu0 0
    %252 = vmatpush1.bf16.msra.mxu0 %v239
    %253 = vmatprep.subr.bf16.mxu0 0
    %254 = vmatpush1.bf16.msra.mxu0 %v240
    %255 = vmatprep.subr.bf16.mxu0 0
    %256 = vmatpush1.bf16.msra.mxu0 %v241
    %257 = vmatprep.subr.bf16.mxu0 0
    %258 = vmatpush1.bf16.msra.mxu0 %v242
    %259 = vmatprep.subr.bf16.mxu0 0
    %260 = vmatpush1.bf16.msra.mxu0 0
    %261 = vmatprep.subr.bf16.mxu0 0
    %262 = vmatpush1.bf16.msra.mxu0 0
    %263 = vmatprep.subr.bf16.mxu0 0
    %264 = vmatpush1.bf16.msra.mxu0 0
    %265 = vmatprep.subr.bf16.mxu0 0
    %266 = vmatpush1.bf16.msra.mxu0 0
    %267 = vmatprep.subr.bf16.mxu0 0
    %268 = vmatpush1.bf16.msra.mxu0 0
    %269 = vmatprep.subr.bf16.mxu0 0
    %270 = vmatpush1.bf16.msra.mxu0 0
    %271 = vmatprep.subr.bf16.mxu0 0
    %272 = vmatpush1.bf16.msra.mxu0 0
    %273 = vmatprep.subr.bf16.mxu0 0
    %274 = vmatpush1.bf16.msra.mxu0 0
    %275 = vmatprep.subr.bf16.mxu0 0
    %276 = vmatpush1.bf16.msra.mxu0 0
    %277 = vmatprep.subr.bf16.mxu0 0
    %278 = vmatpush1.bf16.msra.mxu0 0
    %279 = vmatprep.subr.bf16.mxu0 0
    %280 = vmatpush1.bf16.msra.mxu0 0
    %281 = vmatprep.subr.bf16.mxu0 0
    %282 = vmatpush1.bf16.msra.mxu0 0
    %283 = vmatprep.mubr.bf16.mxu0 0
    %284 = vmatmul.mubr.bf16.gmra.mrb[0].mxu0 %v249
    %v285 = vpop.f32.mrb[0].mxu0
    %v286 = vadd.f32 %v221, %v285
    %v287 = vpop.f32.mrb[0].mxu0
    %v288 = vpop.f32.mrb[0].mxu0
    %v289 = vpop.f32.mrb[0].mxu0
    %290 = vdwg.mxu0
    %v291 = vmul.f32 %v286, 0.5
    %v292 = vtanh.pop %v291
    %v293 = vmul.f32 %v292, 0.5
    %v294 = vadd.f32 %v293, 0.5
    %v295 = vtanh.pop %v286
    %v296 = vld [vmem:[#allocation3] sm:$0xff]
    %298 = vrot.lane.b32.xlu0 %v296, 32
    %v299 = vpop.permute.xlu0 %298
    %v301 = vmul.f32 %v294, %v299
    %303 = vrot.lane.b32.xlu0 %v295, 64
    %v304 = vpop.permute.xlu0 %303
    %v306 = vmul.f32 %v294, %v304
    %308 = vrot.lane.b32.xlu0 %v306, 32
    %v309 = vpop.permute.xlu0 %308
    %v311 = vadd.f32 %v301, %v309
    %v312 = vtanh.pop %v311
    %314 = vrot.lane.b32.xlu0 %v312, 64
    %v315 = vpop.permute.xlu0 %314
    %v317 = vmul.f32 %v294, %v315
    %319 = vrot.lane.b32.xlu0 %v311, 96
    %v320 = vpop.permute.xlu0 %319
    %322 = vst.msk [vmem:[#allocation3] sm:$0xff] %vm204, %v320
    %324 = vrot.lane.b32.xlu0 %v317, 64
    %v325 = vpop.permute.xlu0 %324
    %vm327 = vcmask 523520
    %328 = vst.msk [vmem:[#allocation2] sm:$0xff] %vm327, %v325
    %329 = vrot.lane.b32.xlu0 %v317, 32
    %v330 = vpop.permute.xlu0 %329
    %s332 = scalar_lea.vmem [#allocation2], 8
    %333 = vst.msk [vmem:[%s332] sm:$0xff] %vm204, %v330
    %v334 = vld [vmem:[%s332] sm:$0xff]
    %v335 = vpack.c.bf16 %v334, %v334
    %s336 = scalar_lea.vmem [#allocation10], 32
    %v337 = vld [vmem:[%s336] sm:$0xf]
    %v338 = vld [vmem:[%s336 + $0x4] sm:$0xf]
    %v339 = vld [vmem:[%s336 + $0x8] sm:$0xf]
    %v340 = vld [vmem:[%s336 + $0xc] sm:$0xf]
    %v341 = vld [vmem:[%s336 + $0x10] sm:$0xf]
    %v342 = vld [vmem:[%s336 + $0x14] sm:$0xf]
    %v343 = vld [vmem:[%s336 + $0x18] sm:$0xf]
    %v344 = vld [vmem:[%s336 + $0x1c] sm:$0xf]
    %s345 = scalar_lea.vmem %s4, 1
    %v346 = vld [vmem:[%s345] sm:$0x1]
    %v348 = vlaneseq
    %v349 = vshrl.u32 %v348, 7
    %v350 = vsub.s32 0, %v349
    %v351 = vrot.slane %v346, %v350
    %v361 = vunpack.c.l.b16 %v337
    %v362 = vunpack.c.l.b16 %v338
    %v363 = vunpack.c.l.b16 %v339
    %v364 = vunpack.c.l.b16 %v340
    %v365 = vunpack.c.l.b16 %v341
    %v366 = vunpack.c.l.b16 %v342
    %v367 = vunpack.c.l.b16 %v343
    %v368 = vunpack.c.l.b16 %v344
    %v369 = vpack.c.b16 %v362, %v361
    %v370 = vpack.c.b16 %v364, %v363
    %v371 = vpack.c.b16 %v366, %v365
    %v372 = vpack.c.b16 %v368, %v367
    %v378 = vsel %vm247, %v335, 0
    %380 = vmatprep.subr.bf16.mxu0 0
    %381 = vmatpush1.bf16.msra.mxu0 %v369
    %382 = vmatprep.subr.bf16.mxu0 0
    %383 = vmatpush1.bf16.msra.mxu0 %v370
    %384 = vmatprep.subr.bf16.mxu0 0
    %385 = vmatpush1.bf16.msra.mxu0 %v371
    %386 = vmatprep.subr.bf16.mxu0 0
    %387 = vmatpush1.bf16.msra.mxu0 %v372
    %388 = vmatprep.subr.bf16.mxu0 0
    %389 = vmatpush1.bf16.msra.mxu0 0
    %390 = vmatprep.subr.bf16.mxu0 0
    %391 = vmatpush1.bf16.msra.mxu0 0
    %392 = vmatprep.subr.bf16.mxu0 0
    %393 = vmatpush1.bf16.msra.mxu0 0
    %394 = vmatprep.subr.bf16.mxu0 0
    %395 = vmatpush1.bf16.msra.mxu0 0
    %396 = vmatprep.subr.bf16.mxu0 0
    %397 = vmatpush1.bf16.msra.mxu0 0
    %398 = vmatprep.subr.bf16.mxu0 0
    %399 = vmatpush1.bf16.msra.mxu0 0
    %400 = vmatprep.subr.bf16.mxu0 0
    %401 = vmatpush1.bf16.msra.mxu0 0
    %402 = vmatprep.subr.bf16.mxu0 0
    %403 = vmatpush1.bf16.msra.mxu0 0
    %404 = vmatprep.subr.bf16.mxu0 0
    %405 = vmatpush1.bf16.msra.mxu0 0
    %406 = vmatprep.subr.bf16.mxu0 0
    %407 = vmatpush1.bf16.msra.mxu0 0
    %408 = vmatprep.subr.bf16.mxu0 0
    %409 = vmatpush1.bf16.msra.mxu0 0
    %410 = vmatprep.subr.bf16.mxu0 0
    %411 = vmatpush1.bf16.msra.mxu0 0
    %412 = vmatprep.mubr.bf16.mxu0 0
    %413 = vmatmul.mubr.bf16.gmra.mrb[0].mxu0 %v378
    %v414 = vpop.f32.mrb[0].mxu0
    %v415 = vadd.f32 %v351, %v414
    %v416 = vpop.f32.mrb[0].mxu0
    %v417 = vpop.f32.mrb[0].mxu0
    %v418 = vpop.f32.mrb[0].mxu0
    %419 = vdwg.mxu0
    %v420 = vmul.f32 %v415, 0.5
    %v421 = vtanh.pop %v420
    %v422 = vmul.f32 %v421, 0.5
    %v423 = vadd.f32 %v422, 0.5
    %v424 = vtanh.pop %v415
    %s425 = scalar_lea.vmem [#allocation3], 8
    %v426 = vld [vmem:[%s425] sm:$0xff]
    %428 = vrot.lane.b32.xlu0 %v426, 32
    %v429 = vpop.permute.xlu0 %428
    %v431 = vmul.f32 %v423, %v429
    %433 = vrot.lane.b32.xlu0 %v424, 64
    %v434 = vpop.permute.xlu0 %433
    %v436 = vmul.f32 %v423, %v434
    %438 = vrot.lane.b32.xlu0 %v436, 32
    %v439 = vpop.permute.xlu0 %438
    %v441 = vadd.f32 %v431, %v439
    %v442 = vtanh.pop %v441
    %444 = vrot.lane.b32.xlu0 %v442, 64
    %v445 = vpop.permute.xlu0 %444
    %v447 = vmul.f32 %v423, %v445
    %449 = vrot.lane.b32.xlu0 %v441, 96
    %v450 = vpop.permute.xlu0 %449
    %452 = vst.msk [vmem:[%s425] sm:$0xff] %vm204, %v450
    %454 = vrot.lane.b32.xlu0 %v447, 64
    %v455 = vpop.permute.xlu0 %454
    %457 = vst.msk [vmem:[%s332] sm:$0xff] %vm327, %v455
    %v458 = vpack.c.bf16 %v447, %v447
    %v459 = vld [vmem:[%s5] sm:$0xf]
    %v460 = vld [vmem:[%s5 + $0x4] sm:$0xf]
    %v461 = vld [vmem:[%s5 + $0x8] sm:$0xf]
    %v462 = vld [vmem:[%s5 + $0xc] sm:$0xf]
    %v463 = vld [vmem:[%s6] sm:$0x1]
    %v465 = vlaneseq
    %v466 = vshrl.u32 %v465, 7
    %v467 = vsub.s32 0, %v466
    %v468 = vrot.slane %v463, %v467
    %471 = vrot.lane.b32.xlu0 %v458, 32
    %v472 = vpop.permute.xlu0 %471
    %v477 = vunpack.c.l.b16 %v459
    %v478 = vunpack.c.l.b16 %v460
    %v479 = vunpack.c.l.b16 %v461
    %v480 = vunpack.c.l.b16 %v462
    %v481 = vpack.c.b16 %v478, %v477
    %v482 = vpack.c.b16 %v480, %v479
    %v486 = vsel %vm204, %v472, 0
    %488 = vmatprep.subr.bf16.mxu0 0
    %489 = vmatpush1.bf16.msra.mxu0 %v481
    %490 = vmatprep.subr.bf16.mxu0 0
    %491 = vmatpush1.bf16.msra.mxu0 %v482
    %492 = vmatprep.subr.bf16.mxu0 0
    %493 = vmatpush1.bf16.msra.mxu0 0
    %494 = vmatprep.subr.bf16.mxu0 0
    %495 = vmatpush1.bf16.msra.mxu0 0
    %496 = vmatprep.subr.bf16.mxu0 0
    %497 = vmatpush1.bf16.msra.mxu0 0
    %498 = vmatprep.subr.bf16.mxu0 0
    %499 = vmatpush1.bf16.msra.mxu0 0
    %500 = vmatprep.subr.bf16.mxu0 0
    %501 = vmatpush1.bf16.msra.mxu0 0
    %502 = vmatprep.subr.bf16.mxu0 0
    %503 = vmatpush1.bf16.msra.mxu0 0
    %504 = vmatprep.subr.bf16.mxu0 0
    %505 = vmatpush1.bf16.msra.mxu0 0
    %506 = vmatprep.subr.bf16.mxu0 0
    %507 = vmatpush1.bf16.msra.mxu0 0
    %508 = vmatprep.subr.bf16.mxu0 0
    %509 = vmatpush1.bf16.msra.mxu0 0
    %510 = vmatprep.subr.bf16.mxu0 0
    %511 = vmatpush1.bf16.msra.mxu0 0
    %512 = vmatprep.subr.bf16.mxu0 0
    %513 = vmatpush1.bf16.msra.mxu0 0
    %514 = vmatprep.subr.bf16.mxu0 0
    %515 = vmatpush1.bf16.msra.mxu0 0
    %516 = vmatprep.subr.bf16.mxu0 0
    %517 = vmatpush1.bf16.msra.mxu0 0
    %518 = vmatprep.subr.bf16.mxu0 0
    %519 = vmatpush1.bf16.msra.mxu0 0
    %520 = vmatprep.mubr.bf16.mxu0 0
    %521 = vmatmul.mubr.bf16.gmra.mrb[0].mxu0 %v486
    %v522 = vpop.f32.mrb[0].mxu0
    %v523 = vadd.f32 %v468, %v522
    %v524 = vpop.f32.mrb[0].mxu0
    %v525 = vpop.f32.mrb[0].mxu0
    %v526 = vpop.f32.mrb[0].mxu0
    %527 = vdwg.mxu0
    %v528 = vtanh.pop %v523
    %529 = vst [vmem:[#allocation15] sm:$0xff] %v528
    %s530 = scalar_lea.vmem [#allocation4], 8
    %v531 = vld [vmem:[%s530] sm:$0xff]
    %v532 = vpack.c.bf16 %v531, %v531
    %v533 = vld [vmem:[#allocation7] sm:$0xf]
    %v534 = vld [vmem:[#allocation7 + $0x4] sm:$0xf]
    %v535 = vld [vmem:[#allocation9] sm:$0x1]
    %v537 = vlaneseq
    %v538 = vshrl.u32 %v537, 7
    %v539 = vsub.s32 0, %v538
    %v540 = vrot.slane %v535, %v539
    %v544 = vunpack.c.l.b16 %v533
    %v545 = vunpack.c.l.b16 %v534
    %v546 = vpack.c.b16 %v545, %v544
    %v549 = vsel %vm160, %v532, 0
    %551 = vmatprep.subr.bf16.mxu0 0
    %552 = vmatpush1.bf16.msra.mxu0 %v546
    %553 = vmatprep.subr.bf16.mxu0 0
    %554 = vmatpush1.bf16.msra.mxu0 0
    %555 = vmatprep.subr.bf16.mxu0 0
    %556 = vmatpush1.bf16.msra.mxu0 0
    %557 = vmatprep.subr.bf16.mxu0 0
    %558 = vmatpush1.bf16.msra.mxu0 0
    %559 = vmatprep.subr.bf16.mxu0 0
    %560 = vmatpush1.bf16.msra.mxu0 0
    %561 = vmatprep.subr.bf16.mxu0 0
    %562 = vmatpush1.bf16.msra.mxu0 0
    %563 = vmatprep.subr.bf16.mxu0 0
    %564 = vmatpush1.bf16.msra.mxu0 0
    %565 = vmatprep.subr.bf16.mxu0 0
    %566 = vmatpush1.bf16.msra.mxu0 0
    %567 = vmatprep.subr.bf16.mxu0 0
    %568 = vmatpush1.bf16.msra.mxu0 0
    %569 = vmatprep.subr.bf16.mxu0 0
    %570 = vmatpush1.bf16.msra.mxu0 0
    %571 = vmatprep.subr.bf16.mxu0 0
    %572 = vmatpush1.bf16.msra.mxu0 0
    %573 = vmatprep.subr.bf16.mxu0 0
    %574 = vmatpush1.bf16.msra.mxu0 0
    %575 = vmatprep.subr.bf16.mxu0 0
    %576 = vmatpush1.bf16.msra.mxu0 0
    %577 = vmatprep.subr.bf16.mxu0 0
    %578 = vmatpush1.bf16.msra.mxu0 0
    %579 = vmatprep.subr.bf16.mxu0 0
    %580 = vmatpush1.bf16.msra.mxu0 0
    %581 = vmatprep.subr.bf16.mxu0 0
    %582 = vmatpush1.bf16.msra.mxu0 0
    %583 = vmatprep.mubr.bf16.mxu0 0
    %584 = vmatmul.mubr.bf16.gmra.mrb[0].mxu0 %v549
    %v585 = vpop.f32.mrb[0].mxu0
    %v586 = vadd.f32 %v540, %v585
    %v587 = vpop.f32.mrb[0].mxu0
    %v588 = vpop.f32.mrb[0].mxu0
    %v589 = vpop.f32.mrb[0].mxu0
    %590 = vdwg.mxu0
    %591 = vst.msk [vmem:[#allocation2] sm:$0xff] %vm204, %v586
    %v592 = vld [vmem:[#allocation2] sm:$0xff]
    %v593 = vpack.c.bf16 %v592, %v592
    %v594 = vld [vmem:[#allocation10] sm:$0xf]
    %v595 = vld [vmem:[#allocation10 + $0x4] sm:$0xf]
    %v596 = vld [vmem:[#allocation10 + $0x8] sm:$0xf]
    %v597 = vld [vmem:[#allocation10 + $0xc] sm:$0xf]
    %v598 = vld [vmem:[#allocation10 + $0x10] sm:$0xf]
    %v599 = vld [vmem:[#allocation10 + $0x14] sm:$0xf]
    %v600 = vld [vmem:[#allocation10 + $0x18] sm:$0xf]
    %v601 = vld [vmem:[#allocation10 + $0x1c] sm:$0xf]
    %v602 = vld [vmem:[%s4] sm:$0x1]
    %v604 = vlaneseq
    %v605 = vshrl.u32 %v604, 7
    %v606 = vsub.s32 0, %v605
    %v607 = vrot.slane %v602, %v606
    %v617 = vunpack.c.l.b16 %v594
    %v618 = vunpack.c.l.b16 %v595
    %v619 = vunpack.c.l.b16 %v596
    %v620 = vunpack.c.l.b16 %v597
    %v621 = vunpack.c.l.b16 %v598
    %v622 = vunpack.c.l.b16 %v599
    %v623 = vunpack.c.l.b16 %v600
    %v624 = vunpack.c.l.b16 %v601
    %v625 = vpack.c.b16 %v618, %v617
    %v626 = vpack.c.b16 %v620, %v619
    %v627 = vpack.c.b16 %v622, %v621
    %v628 = vpack.c.b16 %v624, %v623
    %v634 = vsel %vm247, %v593, 0
    %636 = vmatprep.subr.bf16.mxu0 0
    %637 = vmatpush1.bf16.msra.mxu0 %v625
    %638 = vmatprep.subr.bf16.mxu0 0
    %639 = vmatpush1.bf16.msra.mxu0 %v626
    %640 = vmatprep.subr.bf16.mxu0 0
    %641 = vmatpush1.bf16.msra.mxu0 %v627
    %642 = vmatprep.subr.bf16.mxu0 0
    %643 = vmatpush1.bf16.msra.mxu0 %v628
    %644 = vmatprep.subr.bf16.mxu0 0
    %645 = vmatpush1.bf16.msra.mxu0 0
    %646 = vmatprep.subr.bf16.mxu0 0
    %647 = vmatpush1.bf16.msra.mxu0 0
    %648 = vmatprep.subr.bf16.mxu0 0
    %649 = vmatpush1.bf16.msra.mxu0 0
    %650 = vmatprep.subr.bf16.mxu0 0
    %651 = vmatpush1.bf16.msra.mxu0 0
    %652 = vmatprep.subr.bf16.mxu0 0
    %653 = vmatpush1.bf16.msra.mxu0 0
    %654 = vmatprep.subr.bf16.mxu0 0
    %655 = vmatpush1.bf16.msra.mxu0 0
    %656 = vmatprep.subr.bf16.mxu0 0
    %657 = vmatpush1.bf16.msra.mxu0 0
    %658 = vmatprep.subr.bf16.mxu0 0
    %659 = vmatpush1.bf16.msra.mxu0 0
    %660 = vmatprep.subr.bf16.mxu0 0
    %661 = vmatpush1.bf16.msra.mxu0 0
    %662 = vmatprep.subr.bf16.mxu0 0
    %663 = vmatpush1.bf16.msra.mxu0 0
    %664 = vmatprep.subr.bf16.mxu0 0
    %665 = vmatpush1.bf16.msra.mxu0 0
    %666 = vmatprep.subr.bf16.mxu0 0
    %667 = vmatpush1.bf16.msra.mxu0 0
    %668 = vmatprep.mubr.bf16.mxu0 0
    %669 = vmatmul.mubr.bf16.gmra.mrb[0].mxu0 %v634
    %v670 = vpop.f32.mrb[0].mxu0
    %v671 = vadd.f32 %v607, %v670
    %v672 = vpop.f32.mrb[0].mxu0
    %v673 = vpop.f32.mrb[0].mxu0
    %v674 = vpop.f32.mrb[0].mxu0
    %675 = vdwg.mxu0
    %v676 = vmul.f32 %v671, 0.5
    %v677 = vtanh.pop %v676
    %v678 = vmul.f32 %v677, 0.5
    %v679 = vadd.f32 %v678, 0.5
    %v680 = vtanh.pop %v671
    %v681 = vld [vmem:[#allocation3] sm:$0xff]
    %683 = vrot.lane.b32.xlu0 %v681, 32
    %v684 = vpop.permute.xlu0 %683
    %v686 = vmul.f32 %v679, %v684
    %688 = vrot.lane.b32.xlu0 %v680, 64
    %v689 = vpop.permute.xlu0 %688
    %v691 = vmul.f32 %v679, %v689
    %693 = vrot.lane.b32.xlu0 %v691, 32
    %v694 = vpop.permute.xlu0 %693
    %v696 = vadd.f32 %v686, %v694
    %v697 = vtanh.pop %v696
    %699 = vrot.lane.b32.xlu0 %v697, 64
    %v700 = vpop.permute.xlu0 %699
    %v702 = vmul.f32 %v679, %v700
    %704 = vrot.lane.b32.xlu0 %v696, 96
    %v705 = vpop.permute.xlu0 %704
    %707 = vst.msk [vmem:[#allocation3] sm:$0xff] %vm204, %v705
    %709 = vrot.lane.b32.xlu0 %v702, 64
    %v710 = vpop.permute.xlu0 %709
    %712 = vst.msk [vmem:[#allocation2] sm:$0xff] %vm327, %v710
    %713 = vrot.lane.b32.xlu0 %v702, 32
    %v714 = vpop.permute.xlu0 %713
    %716 = vst.msk [vmem:[%s332] sm:$0xff] %vm204, %v714
    %v717 = vld [vmem:[%s332] sm:$0xff]
    %v718 = vpack.c.bf16 %v717, %v717
    %v719 = vld [vmem:[%s336] sm:$0xf]
    %v720 = vld [vmem:[%s336 + $0x4] sm:$0xf]
    %v721 = vld [vmem:[%s336 + $0x8] sm:$0xf]
    %v722 = vld [vmem:[%s336 + $0xc] sm:$0xf]
    %v723 = vld [vmem:[%s336 + $0x10] sm:$0xf]
    %v724 = vld [vmem:[%s336 + $0x14] sm:$0xf]
    %v725 = vld [vmem:[%s336 + $0x18] sm:$0xf]
    %v726 = vld [vmem:[%s336 + $0x1c] sm:$0xf]
    %v727 = vld [vmem:[%s345] sm:$0x1]
    %v729 = vlaneseq
    %v730 = vshrl.u32 %v729, 7
    %v731 = vsub.s32 0, %v730
    %v732 = vrot.slane %v727, %v731
    %v742 = vunpack.c.l.b16 %v719
    %v743 = vunpack.c.l.b16 %v720
    %v744 = vunpack.c.l.b16 %v721
    %v745 = vunpack.c.l.b16 %v722
    %v746 = vunpack.c.l.b16 %v723
    %v747 = vunpack.c.l.b16 %v724
    %v748 = vunpack.c.l.b16 %v725
    %v749 = vunpack.c.l.b16 %v726
    %v750 = vpack.c.b16 %v743, %v742
    %v751 = vpack.c.b16 %v745, %v744
    %v752 = vpack.c.b16 %v747, %v746
    %v753 = vpack.c.b16 %v749, %v748
    %v759 = vsel %vm247, %v718, 0
    %761 = vmatprep.subr.bf16.mxu0 0
    %762 = vmatpush1.bf16.msra.mxu0 %v750
    %763 = vmatprep.subr.bf16.mxu0 0
    %764 = vmatpush1.bf16.msra.mxu0 %v751
    %765 = vmatprep.subr.bf16.mxu0 0
    %766 = vmatpush1.bf16.msra.mxu0 %v752
    %767 = vmatprep.subr.bf16.mxu0 0
    %768 = vmatpush1.bf16.msra.mxu0 %v753
    %769 = vmatprep.subr.bf16.mxu0 0
    %770 = vmatpush1.bf16.msra.mxu0 0
    %771 = vmatprep.subr.bf16.mxu0 0
    %772 = vmatpush1.bf16.msra.mxu0 0
    %773 = vmatprep.subr.bf16.mxu0 0
    %774 = vmatpush1.bf16.msra.mxu0 0
    %775 = vmatprep.subr.bf16.mxu0 0
    %776 = vmatpush1.bf16.msra.mxu0 0
    %777 = vmatprep.subr.bf16.mxu0 0
    %778 = vmatpush1.bf16.msra.mxu0 0
    %779 = vmatprep.subr.bf16.mxu0 0
    %780 = vmatpush1.bf16.msra.mxu0 0
    %781 = vmatprep.subr.bf16.mxu0 0
    %782 = vmatpush1.bf16.msra.mxu0 0
    %783 = vmatprep.subr.bf16.mxu0 0
    %784 = vmatpush1.bf16.msra.mxu0 0
    %785 = vmatprep.subr.bf16.mxu0 0
    %786 = vmatpush1.bf16.msra.mxu0 0
    %787 = vmatprep.subr.bf16.mxu0 0
    %788 = vmatpush1.bf16.msra.mxu0 0
    %789 = vmatprep.subr.bf16.mxu0 0
    %790 = vmatpush1.bf16.msra.mxu0 0
    %791 = vmatprep.subr.bf16.mxu0 0
    %792 = vmatpush1.bf16.msra.mxu0 0
    %793 = vmatprep.mubr.bf16.mxu0 0
    %794 = vmatmul.mubr.bf16.gmra.mrb[0].mxu0 %v759
    %v795 = vpop.f32.mrb[0].mxu0
    %v796 = vadd.f32 %v732, %v795
    %v797 = vpop.f32.mrb[0].mxu0
    %v798 = vpop.f32.mrb[0].mxu0
    %v799 = vpop.f32.mrb[0].mxu0
    %800 = vdwg.mxu0
    %v801 = vmul.f32 %v796, 0.5
    %v802 = vtanh.pop %v801
    %v803 = vmul.f32 %v802, 0.5
    %v804 = vadd.f32 %v803, 0.5
    %v805 = vtanh.pop %v796
    %v806 = vld [vmem:[%s425] sm:$0xff]
    %808 = vrot.lane.b32.xlu0 %v806, 32
    %v809 = vpop.permute.xlu0 %808
    %v811 = vmul.f32 %v804, %v809
    %813 = vrot.lane.b32.xlu0 %v805, 64
    %v814 = vpop.permute.xlu0 %813
    %v816 = vmul.f32 %v804, %v814
    %818 = vrot.lane.b32.xlu0 %v816, 32
    %v819 = vpop.permute.xlu0 %818
    %v821 = vadd.f32 %v811, %v819
    %v822 = vtanh.pop %v821
    %824 = vrot.lane.b32.xlu0 %v822, 64
    %v825 = vpop.permute.xlu0 %824
    %v827 = vmul.f32 %v804, %v825
    %829 = vrot.lane.b32.xlu0 %v821, 96
    %v830 = vpop.permute.xlu0 %829
    %832 = vst.msk [vmem:[%s425] sm:$0xff] %vm204, %v830
    %834 = vrot.lane.b32.xlu0 %v827, 64
    %v835 = vpop.permute.xlu0 %834
    %837 = vst.msk [vmem:[%s332] sm:$0xff] %vm327, %v835
    %v838 = vpack.c.bf16 %v827, %v827
    %v839 = vld [vmem:[%s5] sm:$0xf]
    %v840 = vld [vmem:[%s5 + $0x4] sm:$0xf]
    %v841 = vld [vmem:[%s5 + $0x8] sm:$0xf]
    %v842 = vld [vmem:[%s5 + $0xc] sm:$0xf]
    %v843 = vld [vmem:[%s6] sm:$0x1]
    %v845 = vlaneseq
    %v846 = vshrl.u32 %v845, 7
    %v847 = vsub.s32 0, %v846
    %v848 = vrot.slane %v843, %v847
    %851 = vrot.lane.b32.xlu0 %v838, 32
    %v852 = vpop.permute.xlu0 %851
    %v857 = vunpack.c.l.b16 %v839
    %v858 = vunpack.c.l.b16 %v840
    %v859 = vunpack.c.l.b16 %v841
    %v860 = vunpack.c.l.b16 %v842
    %v861 = vpack.c.b16 %v858, %v857
    %v862 = vpack.c.b16 %v860, %v859
    %v866 = vsel %vm204, %v852, 0
    %868 = vmatprep.subr.bf16.mxu0 0
    %869 = vmatpush1.bf16.msra.mxu0 %v861
    %870 = vmatprep.subr.bf16.mxu0 0
    %871 = vmatpush1.bf16.msra.mxu0 %v862
    %872 = vmatprep.subr.bf16.mxu0 0
    %873 = vmatpush1.bf16.msra.mxu0 0
    %874 = vmatprep.subr.bf16.mxu0 0
    %875 = vmatpush1.bf16.msra.mxu0 0
    %876 = vmatprep.subr.bf16.mxu0 0
    %877 = vmatpush1.bf16.msra.mxu0 0
    %878 = vmatprep.subr.bf16.mxu0 0
    %879 = vmatpush1.bf16.msra.mxu0 0
    %880 = vmatprep.subr.bf16.mxu0 0
    %881 = vmatpush1.bf16.msra.mxu0 0
    %882 = vmatprep.subr.bf16.mxu0 0
    %883 = vmatpush1.bf16.msra.mxu0 0
    %884 = vmatprep.subr.bf16.mxu0 0
    %885 = vmatpush1.bf16.msra.mxu0 0
    %886 = vmatprep.subr.bf16.mxu0 0
    %887 = vmatpush1.bf16.msra.mxu0 0
    %888 = vmatprep.subr.bf16.mxu0 0
    %889 = vmatpush1.bf16.msra.mxu0 0
    %890 = vmatprep.subr.bf16.mxu0 0
    %891 = vmatpush1.bf16.msra.mxu0 0
    %892 = vmatprep.subr.bf16.mxu0 0
    %893 = vmatpush1.bf16.msra.mxu0 0
    %894 = vmatprep.subr.bf16.mxu0 0
    %895 = vmatpush1.bf16.msra.mxu0 0
    %896 = vmatprep.subr.bf16.mxu0 0
    %897 = vmatpush1.bf16.msra.mxu0 0
    %898 = vmatprep.subr.bf16.mxu0 0
    %899 = vmatpush1.bf16.msra.mxu0 0
    %900 = vmatprep.mubr.bf16.mxu0 0
    %901 = vmatmul.mubr.bf16.gmra.mrb[0].mxu0 %v866
    %v902 = vpop.f32.mrb[0].mxu0
    %v903 = vadd.f32 %v848, %v902
    %v904 = vpop.f32.mrb[0].mxu0
    %v905 = vpop.f32.mrb[0].mxu0
    %v906 = vpop.f32.mrb[0].mxu0
    %907 = vdwg.mxu0
    %v908 = vtanh.pop %v903
    %s909 = scalar_lea.vmem [#allocation15], 8
    %910 = vst [vmem:[%s909] sm:$0xff] %v908
    %s911 = scalar_lea.vmem [#allocation4], 16
    %v912 = vld [vmem:[%s911] sm:$0xff]
    %v913 = vpack.c.bf16 %v912, %v912
    %v914 = vld [vmem:[#allocation7] sm:$0xf]
    %v915 = vld [vmem:[#allocation7 + $0x4] sm:$0xf]
    %v916 = vld [vmem:[#allocation9] sm:$0x1]
    %v918 = vlaneseq
    %v919 = vshrl.u32 %v918, 7
    %v920 = vsub.s32 0, %v919
    %v921 = vrot.slane %v916, %v920
    %v925 = vunpack.c.l.b16 %v914
    %v926 = vunpack.c.l.b16 %v915
    %v927 = vpack.c.b16 %v926, %v925
    %v930 = vsel %vm160, %v913, 0
    %932 = vmatprep.subr.bf16.mxu0 0
    %933 = vmatpush1.bf16.msra.mxu0 %v927
    %934 = vmatprep.subr.bf16.mxu0 0
    %935 = vmatpush1.bf16.msra.mxu0 0
    %936 = vmatprep.subr.bf16.mxu0 0
    %937 = vmatpush1.bf16.msra.mxu0 0
    %938 = vmatprep.subr.bf16.mxu0 0
    %939 = vmatpush1.bf16.msra.mxu0 0
    %940 = vmatprep.subr.bf16.mxu0 0
    %941 = vmatpush1.bf16.msra.mxu0 0
    %942 = vmatprep.subr.bf16.mxu0 0
    %943 = vmatpush1.bf16.msra.mxu0 0
    %944 = vmatprep.subr.bf16.mxu0 0
    %945 = vmatpush1.bf16.msra.mxu0 0
    %946 = vmatprep.subr.bf16.mxu0 0
    %947 = vmatpush1.bf16.msra.mxu0 0
    %948 = vmatprep.subr.bf16.mxu0 0
    %949 = vmatpush1.bf16.msra.mxu0 0
    %950 = vmatprep.subr.bf16.mxu0 0
    %951 = vmatpush1.bf16.msra.mxu0 0
    %952 = vmatprep.subr.bf16.mxu0 0
    %953 = vmatpush1.bf16.msra.mxu0 0
    %954 = vmatprep.subr.bf16.mxu0 0
    %955 = vmatpush1.bf16.msra.mxu0 0
    %956 = vmatprep.subr.bf16.mxu0 0
    %957 = vmatpush1.bf16.msra.mxu0 0
    %958 = vmatprep.subr.bf16.mxu0 0
    %959 = vmatpush1.bf16.msra.mxu0 0
    %960 = vmatprep.subr.bf16.mxu0 0
    %961 = vmatpush1.bf16.msra.mxu0 0
    %962 = vmatprep.subr.bf16.mxu0 0
    %963 = vmatpush1.bf16.msra.mxu0 0
    %964 = vmatprep.mubr.bf16.mxu0 0
    %965 = vmatmul.mubr.bf16.gmra.mrb[0].mxu0 %v930
    %v966 = vpop.f32.mrb[0].mxu0
    %v967 = vadd.f32 %v921, %v966
    %v968 = vpop.f32.mrb[0].mxu0
    %v969 = vpop.f32.mrb[0].mxu0
    %v970 = vpop.f32.mrb[0].mxu0
    %971 = vdwg.mxu0
    %972 = vst.msk [vmem:[#allocation2] sm:$0xff] %vm204, %v967
    %v973 = vld [vmem:[#allocation2] sm:$0xff]
    %v974 = vpack.c.bf16 %v973, %v973
    %v975 = vld [vmem:[#allocation10] sm:$0xf]
    %v976 = vld [vmem:[#allocation10 + $0x4] sm:$0xf]
    %v977 = vld [vmem:[#allocation10 + $0x8] sm:$0xf]
    %v978 = vld [vmem:[#allocation10 + $0xc] sm:$0xf]
    %v979 = vld [vmem:[#allocation10 + $0x10] sm:$0xf]
    %v980 = vld [vmem:[#allocation10 + $0x14] sm:$0xf]
    %v981 = vld [vmem:[#allocation10 + $0x18] sm:$0xf]
    %v982 = vld [vmem:[#allocation10 + $0x1c] sm:$0xf]
    %v983 = vld [vmem:[%s4] sm:$0x1]
    %v985 = vlaneseq
    %v986 = vshrl.u32 %v985, 7
    %v987 = vsub.s32 0, %v986
    %v988 = vrot.slane %v983, %v987
    %v998 = vunpack.c.l.b16 %v975
    %v999 = vunpack.c.l.b16 %v976
    %v1000 = vunpack.c.l.b16 %v977
    %v1001 = vunpack.c.l.b16 %v978
    %v1002 = vunpack.c.l.b16 %v979
    %v1003 = vunpack.c.l.b16 %v980
    %v1004 = vunpack.c.l.b16 %v981
    %v1005 = vunpack.c.l.b16 %v982
    %v1006 = vpack.c.b16 %v999, %v998
    %v1007 = vpack.c.b16 %v1001, %v1000
    %v1008 = vpack.c.b16 %v1003, %v1002
    %v1009 = vpack.c.b16 %v1005, %v1004
    %v1015 = vsel %vm247, %v974, 0
    %1017 = vmatprep.subr.bf16.mxu0 0
    %1018 = vmatpush1.bf16.msra.mxu0 %v1006
    %1019 = vmatprep.subr.bf16.mxu0 0
    %1020 = vmatpush1.bf16.msra.mxu0 %v1007
    %1021 = vmatprep.subr.bf16.mxu0 0
    %1022 = vmatpush1.bf16.msra.mxu0 %v1008
    %1023 = vmatprep.subr.bf16.mxu0 0
    %1024 = vmatpush1.bf16.msra.mxu0 %v1009
    %1025 = vmatprep.subr.bf16.mxu0 0
    %1026 = vmatpush1.bf16.msra.mxu0 0
    %1027 = vmatprep.subr.bf16.mxu0 0
    %1028 = vmatpush1.bf16.msra.mxu0 0
    %1029 = vmatprep.subr.bf16.mxu0 0
    %1030 = vmatpush1.bf16.msra.mxu0 0
    %1031 = vmatprep.subr.bf16.mxu0 0
    %1032 = vmatpush1.bf16.msra.mxu0 0
    %1033 = vmatprep.subr.bf16.mxu0 0
    %1034 = vmatpush1.bf16.msra.mxu0 0
    %1035 = vmatprep.subr.bf16.mxu0 0
    %1036 = vmatpush1.bf16.msra.mxu0 0
    %1037 = vmatprep.subr.bf16.mxu0 0
    %1038 = vmatpush1.bf16.msra.mxu0 0
    %1039 = vmatprep.subr.bf16.mxu0 0
    %1040 = vmatpush1.bf16.msra.mxu0 0
    %1041 = vmatprep.subr.bf16.mxu0 0
    %1042 = vmatpush1.bf16.msra.mxu0 0
    %1043 = vmatprep.subr.bf16.mxu0 0
    %1044 = vmatpush1.bf16.msra.mxu0 0
    %1045 = vmatprep.subr.bf16.mxu0 0
    %1046 = vmatpush1.bf16.msra.mxu0 0
    %1047 = vmatprep.subr.bf16.mxu0 0
    %1048 = vmatpush1.bf16.msra.mxu0 0
    %1049 = vmatprep.mubr.bf16.mxu0 0
    %1050 = vmatmul.mubr.bf16.gmra.mrb[0].mxu0 %v1015
    %v1051 = vpop.f32.mrb[0].mxu0
    %v1052 = vadd.f32 %v988, %v1051
    %v1053 = vpop.f32.mrb[0].mxu0
    %v1054 = vpop.f32.mrb[0].mxu0
    %v1055 = vpop.f32.mrb[0].mxu0
    %1056 = vdwg.mxu0
    %v1057 = vmul.f32 %v1052, 0.5
    %v1058 = vtanh.pop %v1057
    %v1059 = vmul.f32 %v1058, 0.5
    %v1060 = vadd.f32 %v1059, 0.5
    %v1061 = vtanh.pop %v1052
    %v1062 = vld [vmem:[#allocation3] sm:$0xff]
    %1064 = vrot.lane.b32.xlu0 %v1062, 32
    %v1065 = vpop.permute.xlu0 %1064
    %v1067 = vmul.f32 %v1060, %v1065
    %1069 = vrot.lane.b32.xlu0 %v1061, 64
    %v1070 = vpop.permute.xlu0 %1069
    %v1072 = vmul.f32 %v1060, %v1070
    %1074 = vrot.lane.b32.xlu0 %v1072, 32
    %v1075 = vpop.permute.xlu0 %1074
    %v1077 = vadd.f32 %v1067, %v1075
    %v1078 = vtanh.pop %v1077
    %1080 = vrot.lane.b32.xlu0 %v1078, 64
    %v1081 = vpop.permute.xlu0 %1080
    %v1083 = vmul.f32 %v1060, %v1081
    %1085 = vrot.lane.b32.xlu0 %v1077, 96
    %v1086 = vpop.permute.xlu0 %1085
    %1088 = vst.msk [vmem:[#allocation3] sm:$0xff] %vm204, %v1086
    %1090 = vrot.lane.b32.xlu0 %v1083, 64
    %v1091 = vpop.permute.xlu0 %1090
    %1093 = vst.msk [vmem:[#allocation2] sm:$0xff] %vm327, %v1091
    %1094 = vrot.lane.b32.xlu0 %v1083, 32
    %v1095 = vpop.permute.xlu0 %1094
    %1097 = vst.msk [vmem:[%s332] sm:$0xff] %vm204, %v1095
    %v1098 = vld [vmem:[%s332] sm:$0xff]
    %v1099 = vpack.c.bf16 %v1098, %v1098
    %v1100 = vld [vmem:[%s336] sm:$0xf]
    %v1101 = vld [vmem:[%s336 + $0x4] sm:$0xf]
    %v1102 = vld [vmem:[%s336 + $0x8] sm:$0xf]
    %v1103 = vld [vmem:[%s336 + $0xc] sm:$0xf]
    %v1104 = vld [vmem:[%s336 + $0x10] sm:$0xf]
    %v1105 = vld [vmem:[%s336 + $0x14] sm:$0xf]
    %v1106 = vld [vmem:[%s336 + $0x18] sm:$0xf]
    %v1107 = vld [vmem:[%s336 + $0x1c] sm:$0xf]
    %v1108 = vld [vmem:[%s345] sm:$0x1]
    %v1110 = vlaneseq
    %v1111 = vshrl.u32 %v1110, 7
    %v1112 = vsub.s32 0, %v1111
    %v1113 = vrot.slane %v1108, %v1112
    %v1123 = vunpack.c.l.b16 %v1100
    %v1124 = vunpack.c.l.b16 %v1101
    %v1125 = vunpack.c.l.b16 %v1102
    %v1126 = vunpack.c.l.b16 %v1103
    %v1127 = vunpack.c.l.b16 %v1104
    %v1128 = vunpack.c.l.b16 %v1105
    %v1129 = vunpack.c.l.b16 %v1106
    %v1130 = vunpack.c.l.b16 %v1107
    %v1131 = vpack.c.b16 %v1124, %v1123
    %v1132 = vpack.c.b16 %v1126, %v1125
    %v1133 = vpack.c.b16 %v1128, %v1127
    %v1134 = vpack.c.b16 %v1130, %v1129
    %v1140 = vsel %vm247, %v1099, 0
    %1142 = vmatprep.subr.bf16.mxu0 0
    %1143 = vmatpush1.bf16.msra.mxu0 %v1131
    %1144 = vmatprep.subr.bf16.mxu0 0
    %1145 = vmatpush1.bf16.msra.mxu0 %v1132
    %1146 = vmatprep.subr.bf16.mxu0 0
    %1147 = vmatpush1.bf16.msra.mxu0 %v1133
    %1148 = vmatprep.subr.bf16.mxu0 0
    %1149 = vmatpush1.bf16.msra.mxu0 %v1134
    %1150 = vmatprep.subr.bf16.mxu0 0
    %1151 = vmatpush1.bf16.msra.mxu0 0
    %1152 = vmatprep.subr.bf16.mxu0 0
    %1153 = vmatpush1.bf16.msra.mxu0 0
    %1154 = vmatprep.subr.bf16.mxu0 0
    %1155 = vmatpush1.bf16.msra.mxu0 0
    %1156 = vmatprep.subr.bf16.mxu0 0
    %1157 = vmatpush1.bf16.msra.mxu0 0
    %1158 = vmatprep.subr.bf16.mxu0 0
    %1159 = vmatpush1.bf16.msra.mxu0 0
    %1160 = vmatprep.subr.bf16.mxu0 0
    %1161 = vmatpush1.bf16.msra.mxu0 0
    %1162 = vmatprep.subr.bf16.mxu0 0
    %1163 = vmatpush1.bf16.msra.mxu0 0
    %1164 = vmatprep.subr.bf16.mxu0 0
    %1165 = vmatpush1.bf16.msra.mxu0 0
    %1166 = vmatprep.subr.bf16.mxu0 0
    %1167 = vmatpush1.bf16.msra.mxu0 0
    %1168 = vmatprep.subr.bf16.mxu0 0
    %1169 = vmatpush1.bf16.msra.mxu0 0
    %1170 = vmatprep.subr.bf16.mxu0 0
    %1171 = vmatpush1.bf16.msra.mxu0 0
    %1172 = vmatprep.subr.bf16.mxu0 0
    %1173 = vmatpush1.bf16.msra.mxu0 0
    %1174 = vmatprep.mubr.bf16.mxu0 0
    %1175 = vmatmul.mubr.bf16.gmra.mrb[0].mxu0 %v1140
    %v1176 = vpop.f32.mrb[0].mxu0
    %v1177 = vadd.f32 %v1113, %v1176
    %v1178 = vpop.f32.mrb[0].mxu0
    %v1179 = vpop.f32.mrb[0].mxu0
    %v1180 = vpop.f32.mrb[0].mxu0
    %1181 = vdwg.mxu0
    %v1182 = vmul.f32 %v1177, 0.5
    %v1183 = vtanh.pop %v1182
    %v1184 = vmul.f32 %v1183, 0.5
    %v1185 = vadd.f32 %v1184, 0.5
    %v1186 = vtanh.pop %v1177
    %v1187 = vld [vmem:[%s425] sm:$0xff]
    %1189 = vrot.lane.b32.xlu0 %v1187, 32
    %v1190 = vpop.permute.xlu0 %1189
    %v1192 = vmul.f32 %v1185, %v1190
    %1194 = vrot.lane.b32.xlu0 %v1186, 64
    %v1195 = vpop.permute.xlu0 %1194
    %v1197 = vmul.f32 %v1185, %v1195
    %1199 = vrot.lane.b32.xlu0 %v1197, 32
    %v1200 = vpop.permute.xlu0 %1199
    %v1202 = vadd.f32 %v1192, %v1200
    %v1203 = vtanh.pop %v1202
    %1205 = vrot.lane.b32.xlu0 %v1203, 64
    %v1206 = vpop.permute.xlu0 %1205
    %v1208 = vmul.f32 %v1185, %v1206
    %1210 = vrot.lane.b32.xlu0 %v1202, 96
    %v1211 = vpop.permute.xlu0 %1210
    %1213 = vst.msk [vmem:[%s425] sm:$0xff] %vm204, %v1211
    %1215 = vrot.lane.b32.xlu0 %v1208, 64
    %v1216 = vpop.permute.xlu0 %1215
    %1218 = vst.msk [vmem:[%s332] sm:$0xff] %vm327, %v1216
    %v1219 = vpack.c.bf16 %v1208, %v1208
    %v1220 = vld [vmem:[%s5] sm:$0xf]
    %v1221 = vld [vmem:[%s5 + $0x4] sm:$0xf]
    %v1222 = vld [vmem:[%s5 + $0x8] sm:$0xf]
    %v1223 = vld [vmem:[%s5 + $0xc] sm:$0xf]
    %v1224 = vld [vmem:[%s6] sm:$0x1]
    %v1226 = vlaneseq
    %v1227 = vshrl.u32 %v1226, 7
    %v1228 = vsub.s32 0, %v1227
    %v1229 = vrot.slane %v1224, %v1228
    %1232 = vrot.lane.b32.xlu0 %v1219, 32
    %v1233 = vpop.permute.xlu0 %1232
    %v1238 = vunpack.c.l.b16 %v1220
    %v1239 = vunpack.c.l.b16 %v1221
    %v1240 = vunpack.c.l.b16 %v1222
    %v1241 = vunpack.c.l.b16 %v1223
    %v1242 = vpack.c.b16 %v1239, %v1238
    %v1243 = vpack.c.b16 %v1241, %v1240
    %v1247 = vsel %vm204, %v1233, 0
    %1249 = vmatprep.subr.bf16.mxu0 0
    %1250 = vmatpush1.bf16.msra.mxu0 %v1242
    %1251 = vmatprep.subr.bf16.mxu0 0
    %1252 = vmatpush1.bf16.msra.mxu0 %v1243
    %1253 = vmatprep.subr.bf16.mxu0 0
    %1254 = vmatpush1.bf16.msra.mxu0 0
    %1255 = vmatprep.subr.bf16.mxu0 0
    %1256 = vmatpush1.bf16.msra.mxu0 0
    %1257 = vmatprep.subr.bf16.mxu0 0
    %1258 = vmatpush1.bf16.msra.mxu0 0
    %1259 = vmatprep.subr.bf16.mxu0 0
    %1260 = vmatpush1.bf16.msra.mxu0 0
    %1261 = vmatprep.subr.bf16.mxu0 0
    %1262 = vmatpush1.bf16.msra.mxu0 0
    %1263 = vmatprep.subr.bf16.mxu0 0
    %1264 = vmatpush1.bf16.msra.mxu0 0
    %1265 = vmatprep.subr.bf16.mxu0 0
    %1266 = vmatpush1.bf16.msra.mxu0 0
    %1267 = vmatprep.subr.bf16.mxu0 0
    %1268 = vmatpush1.bf16.msra.mxu0 0
    %1269 = vmatprep.subr.bf16.mxu0 0
    %1270 = vmatpush1.bf16.msra.mxu0 0
    %1271 = vmatprep.subr.bf16.mxu0 0
    %1272 = vmatpush1.bf16.msra.mxu0 0
    %1273 = vmatprep.subr.bf16.mxu0 0
    %1274 = vmatpush1.bf16.msra.mxu0 0
    %1275 = vmatprep.subr.bf16.mxu0 0
    %1276 = vmatpush1.bf16.msra.mxu0 0
    %1277 = vmatprep.subr.bf16.mxu0 0
    %1278 = vmatpush1.bf16.msra.mxu0 0
    %1279 = vmatprep.subr.bf16.mxu0 0
    %1280 = vmatpush1.bf16.msra.mxu0 0
    %1281 = vmatprep.mubr.bf16.mxu0 0
    %1282 = vmatmul.mubr.bf16.gmra.mrb[0].mxu0 %v1247
    %v1283 = vpop.f32.mrb[0].mxu0
    %v1284 = vadd.f32 %v1229, %v1283
    %v1285 = vpop.f32.mrb[0].mxu0
    %v1286 = vpop.f32.mrb[0].mxu0
    %v1287 = vpop.f32.mrb[0].mxu0
    %1288 = vdwg.mxu0
    %v1289 = vtanh.pop %v1284
    %s1290 = scalar_lea.vmem [#allocation15], 16
    %1291 = vst [vmem:[%s1290] sm:$0xff] %v1289
    %s1292 = scalar_lea.vmem [#allocation4], 24
    %v1293 = vld [vmem:[%s1292] sm:$0xff]
    %v1294 = vpack.c.bf16 %v1293, %v1293
    %v1295 = vld [vmem:[#allocation7] sm:$0xf]
    %v1296 = vld [vmem:[#allocation7 + $0x4] sm:$0xf]
    %v1297 = vld [vmem:[#allocation9] sm:$0x1]
    %v1299 = vlaneseq
    %v1300 = vshrl.u32 %v1299, 7
    %v1301 = vsub.s32 0, %v1300
    %v1302 = vrot.slane %v1297, %v1301
    %v1306 = vunpack.c.l.b16 %v1295
    %v1307 = vunpack.c.l.b16 %v1296
    %v1308 = vpack.c.b16 %v1307, %v1306
    %v1311 = vsel %vm160, %v1294, 0
    %1313 = vmatprep.subr.bf16.mxu0 0
    %1314 = vmatpush1.bf16.msra.mxu0 %v1308
    %1315 = vmatprep.subr.bf16.mxu0 0
    %1316 = vmatpush1.bf16.msra.mxu0 0
    %1317 = vmatprep.subr.bf16.mxu0 0
    %1318 = vmatpush1.bf16.msra.mxu0 0
    %1319 = vmatprep.subr.bf16.mxu0 0
    %1320 = vmatpush1.bf16.msra.mxu0 0
    %1321 = vmatprep.subr.bf16.mxu0 0
    %1322 = vmatpush1.bf16.msra.mxu0 0
    %1323 = vmatprep.subr.bf16.mxu0 0
    %1324 = vmatpush1.bf16.msra.mxu0 0
    %1325 = vmatprep.subr.bf16.mxu0 0
    %1326 = vmatpush1.bf16.msra.mxu0 0
    %1327 = vmatprep.subr.bf16.mxu0 0
    %1328 = vmatpush1.bf16.msra.mxu0 0
    %1329 = vmatprep.subr.bf16.mxu0 0
    %1330 = vmatpush1.bf16.msra.mxu0 0
    %1331 = vmatprep.subr.bf16.mxu0 0
    %1332 = vmatpush1.bf16.msra.mxu0 0
    %1333 = vmatprep.subr.bf16.mxu0 0
    %1334 = vmatpush1.bf16.msra.mxu0 0
    %1335 = vmatprep.subr.bf16.mxu0 0
    %1336 = vmatpush1.bf16.msra.mxu0 0
    %1337 = vmatprep.subr.bf16.mxu0 0
    %1338 = vmatpush1.bf16.msra.mxu0 0
    %1339 = vmatprep.subr.bf16.mxu0 0
    %1340 = vmatpush1.bf16.msra.mxu0 0
    %1341 = vmatprep.subr.bf16.mxu0 0
    %1342 = vmatpush1.bf16.msra.mxu0 0
    %1343 = vmatprep.subr.bf16.mxu0 0
    %1344 = vmatpush1.bf16.msra.mxu0 0
    %1345 = vmatprep.mubr.bf16.mxu0 0
    %1346 = vmatmul.mubr.bf16.gmra.mrb[0].mxu0 %v1311
    %v1347 = vpop.f32.mrb[0].mxu0
    %v1348 = vadd.f32 %v1302, %v1347
    %v1349 = vpop.f32.mrb[0].mxu0
    %v1350 = vpop.f32.mrb[0].mxu0
    %v1351 = vpop.f32.mrb[0].mxu0
    %1352 = vdwg.mxu0
    %1353 = vst.msk [vmem:[#allocation2] sm:$0xff] %vm204, %v1348
    %v1354 = vld [vmem:[#allocation2] sm:$0xff]
    %v1355 = vpack.c.bf16 %v1354, %v1354
    %v1356 = vld [vmem:[#allocation10] sm:$0xf]
    %v1357 = vld [vmem:[#allocation10 + $0x4] sm:$0xf]
    %v1358 = vld [vmem:[#allocation10 + $0x8] sm:$0xf]
    %v1359 = vld [vmem:[#allocation10 + $0xc] sm:$0xf]
    %v1360 = vld [vmem:[#allocation10 + $0x10] sm:$0xf]
    %v1361 = vld [vmem:[#allocation10 + $0x14] sm:$0xf]
    %v1362 = vld [vmem:[#allocation10 + $0x18] sm:$0xf]
    %v1363 = vld [vmem:[#allocation10 + $0x1c] sm:$0xf]
    %v1364 = vld [vmem:[%s4] sm:$0x1]
    %v1366 = vlaneseq
    %v1367 = vshrl.u32 %v1366, 7
    %v1368 = vsub.s32 0, %v1367
    %v1369 = vrot.slane %v1364, %v1368
    %v1379 = vunpack.c.l.b16 %v1356
    %v1380 = vunpack.c.l.b16 %v1357
    %v1381 = vunpack.c.l.b16 %v1358
    %v1382 = vunpack.c.l.b16 %v1359
    %v1383 = vunpack.c.l.b16 %v1360
    %v1384 = vunpack.c.l.b16 %v1361
    %v1385 = vunpack.c.l.b16 %v1362
    %v1386 = vunpack.c.l.b16 %v1363
    %v1387 = vpack.c.b16 %v1380, %v1379
    %v1388 = vpack.c.b16 %v1382, %v1381
    %v1389 = vpack.c.b16 %v1384, %v1383
    %v1390 = vpack.c.b16 %v1386, %v1385
    %v1396 = vsel %vm247, %v1355, 0
    %1398 = vmatprep.subr.bf16.mxu0 0
    %1399 = vmatpush1.bf16.msra.mxu0 %v1387
    %1400 = vmatprep.subr.bf16.mxu0 0
    %1401 = vmatpush1.bf16.msra.mxu0 %v1388
    %1402 = vmatprep.subr.bf16.mxu0 0
    %1403 = vmatpush1.bf16.msra.mxu0 %v1389
    %1404 = vmatprep.subr.bf16.mxu0 0
    %1405 = vmatpush1.bf16.msra.mxu0 %v1390
    %1406 = vmatprep.subr.bf16.mxu0 0
    %1407 = vmatpush1.bf16.msra.mxu0 0
    %1408 = vmatprep.subr.bf16.mxu0 0
    %1409 = vmatpush1.bf16.msra.mxu0 0
    %1410 = vmatprep.subr.bf16.mxu0 0
    %1411 = vmatpush1.bf16.msra.mxu0 0
    %1412 = vmatprep.subr.bf16.mxu0 0
    %1413 = vmatpush1.bf16.msra.mxu0 0
    %1414 = vmatprep.subr.bf16.mxu0 0
    %1415 = vmatpush1.bf16.msra.mxu0 0
    %1416 = vmatprep.subr.bf16.mxu0 0
    %1417 = vmatpush1.bf16.msra.mxu0 0
    %1418 = vmatprep.subr.bf16.mxu0 0
    %1419 = vmatpush1.bf16.msra.mxu0 0
    %1420 = vmatprep.subr.bf16.mxu0 0
    %1421 = vmatpush1.bf16.msra.mxu0 0
    %1422 = vmatprep.subr.bf16.mxu0 0
    %1423 = vmatpush1.bf16.msra.mxu0 0
    %1424 = vmatprep.subr.bf16.mxu0 0
    %1425 = vmatpush1.bf16.msra.mxu0 0
    %1426 = vmatprep.subr.bf16.mxu0 0
    %1427 = vmatpush1.bf16.msra.mxu0 0
    %1428 = vmatprep.subr.bf16.mxu0 0
    %1429 = vmatpush1.bf16.msra.mxu0 0
    %1430 = vmatprep.mubr.bf16.mxu0 0
    %1431 = vmatmul.mubr.bf16.gmra.mrb[0].mxu0 %v1396
    %v1432 = vpop.f32.mrb[0].mxu0
    %v1433 = vadd.f32 %v1369, %v1432
    %v1434 = vpop.f32.mrb[0].mxu0
    %v1435 = vpop.f32.mrb[0].mxu0
    %v1436 = vpop.f32.mrb[0].mxu0
    %1437 = vdwg.mxu0
    %v1438 = vmul.f32 %v1433, 0.5
    %v1439 = vtanh.pop %v1438
    %v1440 = vmul.f32 %v1439, 0.5
    %v1441 = vadd.f32 %v1440, 0.5
    %v1442 = vtanh.pop %v1433
    %v1443 = vld [vmem:[#allocation3] sm:$0xff]
    %1445 = vrot.lane.b32.xlu0 %v1443, 32
    %v1446 = vpop.permute.xlu0 %1445
    %v1448 = vmul.f32 %v1441, %v1446
    %1450 = vrot.lane.b32.xlu0 %v1442, 64
    %v1451 = vpop.permute.xlu0 %1450
    %v1453 = vmul.f32 %v1441, %v1451
    %1455 = vrot.lane.b32.xlu0 %v1453, 32
    %v1456 = vpop.permute.xlu0 %1455
    %v1458 = vadd.f32 %v1448, %v1456
    %v1459 = vtanh.pop %v1458
    %1461 = vrot.lane.b32.xlu0 %v1459, 64
    %v1462 = vpop.permute.xlu0 %1461
    %v1464 = vmul.f32 %v1441, %v1462
    %1466 = vrot.lane.b32.xlu0 %v1458, 96
    %v1467 = vpop.permute.xlu0 %1466
    %1469 = vst.msk [vmem:[#allocation3] sm:$0xff] %vm204, %v1467
    %1471 = vrot.lane.b32.xlu0 %v1464, 64
    %v1472 = vpop.permute.xlu0 %1471
    %1474 = vst.msk [vmem:[#allocation2] sm:$0xff] %vm327, %v1472
    %1475 = vrot.lane.b32.xlu0 %v1464, 32
    %v1476 = vpop.permute.xlu0 %1475
    %1478 = vst.msk [vmem:[%s332] sm:$0xff] %vm204, %v1476
    %v1479 = vld [vmem:[%s332] sm:$0xff]
    %v1480 = vpack.c.bf16 %v1479, %v1479
    %v1481 = vld [vmem:[%s336] sm:$0xf]
    %v1482 = vld [vmem:[%s336 + $0x4] sm:$0xf]
    %v1483 = vld [vmem:[%s336 + $0x8] sm:$0xf]
    %v1484 = vld [vmem:[%s336 + $0xc] sm:$0xf]
    %v1485 = vld [vmem:[%s336 + $0x10] sm:$0xf]
    %v1486 = vld [vmem:[%s336 + $0x14] sm:$0xf]
    %v1487 = vld [vmem:[%s336 + $0x18] sm:$0xf]
    %v1488 = vld [vmem:[%s336 + $0x1c] sm:$0xf]
    %v1489 = vld [vmem:[%s345] sm:$0x1]
    %v1491 = vlaneseq
    %v1492 = vshrl.u32 %v1491, 7
    %v1493 = vsub.s32 0, %v1492
    %v1494 = vrot.slane %v1489, %v1493
    %v1504 = vunpack.c.l.b16 %v1481
    %v1505 = vunpack.c.l.b16 %v1482
    %v1506 = vunpack.c.l.b16 %v1483
    %v1507 = vunpack.c.l.b16 %v1484
    %v1508 = vunpack.c.l.b16 %v1485
    %v1509 = vunpack.c.l.b16 %v1486
    %v1510 = vunpack.c.l.b16 %v1487
    %v1511 = vunpack.c.l.b16 %v1488
    %v1512 = vpack.c.b16 %v1505, %v1504
    %v1513 = vpack.c.b16 %v1507, %v1506
    %v1514 = vpack.c.b16 %v1509, %v1508
    %v1515 = vpack.c.b16 %v1511, %v1510
    %v1521 = vsel %vm247, %v1480, 0
    %1523 = vmatprep.subr.bf16.mxu0 0
    %1524 = vmatpush1.bf16.msra.mxu0 %v1512
    %1525 = vmatprep.subr.bf16.mxu0 0
    %1526 = vmatpush1.bf16.msra.mxu0 %v1513
    %1527 = vmatprep.subr.bf16.mxu0 0
    %1528 = vmatpush1.bf16.msra.mxu0 %v1514
    %1529 = vmatprep.subr.bf16.mxu0 0
    %1530 = vmatpush1.bf16.msra.mxu0 %v1515
    %1531 = vmatprep.subr.bf16.mxu0 0
    %1532 = vmatpush1.bf16.msra.mxu0 0
    %1533 = vmatprep.subr.bf16.mxu0 0
    %1534 = vmatpush1.bf16.msra.mxu0 0
    %1535 = vmatprep.subr.bf16.mxu0 0
    %1536 = vmatpush1.bf16.msra.mxu0 0
    %1537 = vmatprep.subr.bf16.mxu0 0
    %1538 = vmatpush1.bf16.msra.mxu0 0
    %1539 = vmatprep.subr.bf16.mxu0 0
    %1540 = vmatpush1.bf16.msra.mxu0 0
    %1541 = vmatprep.subr.bf16.mxu0 0
    %1542 = vmatpush1.bf16.msra.mxu0 0
    %1543 = vmatprep.subr.bf16.mxu0 0
    %1544 = vmatpush1.bf16.msra.mxu0 0
    %1545 = vmatprep.subr.bf16.mxu0 0
    %1546 = vmatpush1.bf16.msra.mxu0 0
    %1547 = vmatprep.subr.bf16.mxu0 0
    %1548 = vmatpush1.bf16.msra.mxu0 0
    %1549 = vmatprep.subr.bf16.mxu0 0
    %1550 = vmatpush1.bf16.msra.mxu0 0
    %1551 = vmatprep.subr.bf16.mxu0 0
    %1552 = vmatpush1.bf16.msra.mxu0 0
    %1553 = vmatprep.subr.bf16.mxu0 0
    %1554 = vmatpush1.bf16.msra.mxu0 0
    %1555 = vmatprep.mubr.bf16.mxu0 0
    %1556 = vmatmul.mubr.bf16.gmra.mrb[0].mxu0 %v1521
    %v1557 = vpop.f32.mrb[0].mxu0
    %v1558 = vadd.f32 %v1494, %v1557
    %v1559 = vpop.f32.mrb[0].mxu0
    %v1560 = vpop.f32.mrb[0].mxu0
    %v1561 = vpop.f32.mrb[0].mxu0
    %1562 = vdwg.mxu0
    %v1563 = vmul.f32 %v1558, 0.5
    %v1564 = vtanh.pop %v1563
    %v1565 = vmul.f32 %v1564, 0.5
    %v1566 = vadd.f32 %v1565, 0.5
    %v1567 = vtanh.pop %v1558
    %v1568 = vld [vmem:[%s425] sm:$0xff]
    %1570 = vrot.lane.b32.xlu0 %v1568, 32
    %v1571 = vpop.permute.xlu0 %1570
    %v1573 = vmul.f32 %v1566, %v1571
    %1575 = vrot.lane.b32.xlu0 %v1567, 64
    %v1576 = vpop.permute.xlu0 %1575
    %v1578 = vmul.f32 %v1566, %v1576
    %1580 = vrot.lane.b32.xlu0 %v1578, 32
    %v1581 = vpop.permute.xlu0 %1580
    %v1583 = vadd.f32 %v1573, %v1581
    %v1584 = vtanh.pop %v1583
    %1586 = vrot.lane.b32.xlu0 %v1584, 64
    %v1587 = vpop.permute.xlu0 %1586
    %v1589 = vmul.f32 %v1566, %v1587
    %1591 = vrot.lane.b32.xlu0 %v1583, 96
    %v1592 = vpop.permute.xlu0 %1591
    %1594 = vst.msk [vmem:[%s425] sm:$0xff] %vm204, %v1592
    %1596 = vrot.lane.b32.xlu0 %v1589, 64
    %v1597 = vpop.permute.xlu0 %1596
    %1599 = vst.msk [vmem:[%s332] sm:$0xff] %vm327, %v1597
    %v1600 = vpack.c.bf16 %v1589, %v1589
    %v1601 = vld [vmem:[%s5] sm:$0xf]
    %v1602 = vld [vmem:[%s5 + $0x4] sm:$0xf]
    %v1603 = vld [vmem:[%s5 + $0x8] sm:$0xf]
    %v1604 = vld [vmem:[%s5 + $0xc] sm:$0xf]
    %v1605 = vld [vmem:[%s6] sm:$0x1]
    %v1607 = vlaneseq
    %v1608 = vshrl.u32 %v1607, 7
    %v1609 = vsub.s32 0, %v1608
    %v1610 = vrot.slane %v1605, %v1609
    %1613 = vrot.lane.b32.xlu0 %v1600, 32
    %v1614 = vpop.permute.xlu0 %1613
    %v1619 = vunpack.c.l.b16 %v1601
    %v1620 = vunpack.c.l.b16 %v1602
    %v1621 = vunpack.c.l.b16 %v1603
    %v1622 = vunpack.c.l.b16 %v1604
    %v1623 = vpack.c.b16 %v1620, %v1619
    %v1624 = vpack.c.b16 %v1622, %v1621
    %v1628 = vsel %vm204, %v1614, 0
    %1630 = vmatprep.subr.bf16.mxu0 0
    %1631 = vmatpush1.bf16.msra.mxu0 %v1623
    %1632 = vmatprep.subr.bf16.mxu0 0
    %1633 = vmatpush1.bf16.msra.mxu0 %v1624
    %1634 = vmatprep.subr.bf16.mxu0 0
    %1635 = vmatpush1.bf16.msra.mxu0 0
    %1636 = vmatprep.subr.bf16.mxu0 0
    %1637 = vmatpush1.bf16.msra.mxu0 0
    %1638 = vmatprep.subr.bf16.mxu0 0
    %1639 = vmatpush1.bf16.msra.mxu0 0
    %1640 = vmatprep.subr.bf16.mxu0 0
    %1641 = vmatpush1.bf16.msra.mxu0 0
    %1642 = vmatprep.subr.bf16.mxu0 0
    %1643 = vmatpush1.bf16.msra.mxu0 0
    %1644 = vmatprep.subr.bf16.mxu0 0
    %1645 = vmatpush1.bf16.msra.mxu0 0
    %1646 = vmatprep.subr.bf16.mxu0 0
    %1647 = vmatpush1.bf16.msra.mxu0 0
    %1648 = vmatprep.subr.bf16.mxu0 0
    %1649 = vmatpush1.bf16.msra.mxu0 0
    %1650 = vmatprep.subr.bf16.mxu0 0
    %1651 = vmatpush1.bf16.msra.mxu0 0
    %1652 = vmatprep.subr.bf16.mxu0 0
    %1653 = vmatpush1.bf16.msra.mxu0 0
    %1654 = vmatprep.subr.bf16.mxu0 0
    %1655 = vmatpush1.bf16.msra.mxu0 0
    %1656 = vmatprep.subr.bf16.mxu0 0
    %1657 = vmatpush1.bf16.msra.mxu0 0
    %1658 = vmatprep.subr.bf16.mxu0 0
    %1659 = vmatpush1.bf16.msra.mxu0 0
    %1660 = vmatprep.subr.bf16.mxu0 0
    %1661 = vmatpush1.bf16.msra.mxu0 0
    %1662 = vmatprep.mubr.bf16.mxu0 0
    %1663 = vmatmul.mubr.bf16.gmra.mrb[0].mxu0 %v1628
    %v1664 = vpop.f32.mrb[0].mxu0
    %v1665 = vadd.f32 %v1610, %v1664
    %v1666 = vpop.f32.mrb[0].mxu0
    %v1667 = vpop.f32.mrb[0].mxu0
    %v1668 = vpop.f32.mrb[0].mxu0
    %1669 = vdwg.mxu0
    %v1670 = vtanh.pop %v1665
    %s1671 = scalar_lea.vmem [#allocation15], 24
    %1672 = vst [vmem:[%s1671] sm:$0xff] %v1670
    %s1673 = scalar_lea.vmem [#allocation4], 32
    %v1674 = vld [vmem:[%s1673] sm:$0xff]
    %v1675 = vpack.c.bf16 %v1674, %v1674
    %v1676 = vld [vmem:[#allocation7] sm:$0xf]
    %v1677 = vld [vmem:[#allocation7 + $0x4] sm:$0xf]
    %v1678 = vld [vmem:[#allocation9] sm:$0x1]
    %v1680 = vlaneseq
    %v1681 = vshrl.u32 %v1680, 7
    %v1682 = vsub.s32 0, %v1681
    %v1683 = vrot.slane %v1678, %v1682
    %v1687 = vunpack.c.l.b16 %v1676
    %v1688 = vunpack.c.l.b16 %v1677
    %v1689 = vpack.c.b16 %v1688, %v1687
    %v1692 = vsel %vm160, %v1675, 0
    %1694 = vmatprep.subr.bf16.mxu0 0
    %1695 = vmatpush1.bf16.msra.mxu0 %v1689
    %1696 = vmatprep.subr.bf16.mxu0 0
    %1697 = vmatpush1.bf16.msra.mxu0 0
    %1698 = vmatprep.subr.bf16.mxu0 0
    %1699 = vmatpush1.bf16.msra.mxu0 0
    %1700 = vmatprep.subr.bf16.mxu0 0
    %1701 = vmatpush1.bf16.msra.mxu0 0
    %1702 = vmatprep.subr.bf16.mxu0 0
    %1703 = vmatpush1.bf16.msra.mxu0 0
    %1704 = vmatprep.subr.bf16.mxu0 0
    %1705 = vmatpush1.bf16.msra.mxu0 0
    %1706 = vmatprep.subr.bf16.mxu0 0
    %1707 = vmatpush1.bf16.msra.mxu0 0
    %1708 = vmatprep.subr.bf16.mxu0 0
    %1709 = vmatpush1.bf16.msra.mxu0 0
    %1710 = vmatprep.subr.bf16.mxu0 0
    %1711 = vmatpush1.bf16.msra.mxu0 0
    %1712 = vmatprep.subr.bf16.mxu0 0
    %1713 = vmatpush1.bf16.msra.mxu0 0
    %1714 = vmatprep.subr.bf16.mxu0 0
    %1715 = vmatpush1.bf16.msra.mxu0 0
    %1716 = vmatprep.subr.bf16.mxu0 0
    %1717 = vmatpush1.bf16.msra.mxu0 0
    %1718 = vmatprep.subr.bf16.mxu0 0
    %1719 = vmatpush1.bf16.msra.mxu0 0
    %1720 = vmatprep.subr.bf16.mxu0 0
    %1721 = vmatpush1.bf16.msra.mxu0 0
    %1722 = vmatprep.subr.bf16.mxu0 0
    %1723 = vmatpush1.bf16.msra.mxu0 0
    %1724 = vmatprep.subr.bf16.mxu0 0
    %1725 = vmatpush1.bf16.msra.mxu0 0
    %1726 = vmatprep.mubr.bf16.mxu0 0
    %1727 = vmatmul.mubr.bf16.gmra.mrb[0].mxu0 %v1692
    %v1728 = vpop.f32.mrb[0].mxu0
    %v1729 = vadd.f32 %v1683, %v1728
    %v1730 = vpop.f32.mrb[0].mxu0
    %v1731 = vpop.f32.mrb[0].mxu0
    %v1732 = vpop.f32.mrb[0].mxu0
    %1733 = vdwg.mxu0
    %1734 = vst.msk [vmem:[#allocation2] sm:$0xff] %vm204, %v1729
    %v1735 = vld [vmem:[#allocation2] sm:$0xff]
    %v1736 = vpack.c.bf16 %v1735, %v1735
    %v1737 = vld [vmem:[#allocation10] sm:$0xf]
    %v1738 = vld [vmem:[#allocation10 + $0x4] sm:$0xf]
    %v1739 = vld [vmem:[#allocation10 + $0x8] sm:$0xf]
    %v1740 = vld [vmem:[#allocation10 + $0xc] sm:$0xf]
    %v1741 = vld [vmem:[#allocation10 + $0x10] sm:$0xf]
    %v1742 = vld [vmem:[#allocation10 + $0x14] sm:$0xf]
    %v1743 = vld [vmem:[#allocation10 + $0x18] sm:$0xf]
    %v1744 = vld [vmem:[#allocation10 + $0x1c] sm:$0xf]
    %v1745 = vld [vmem:[%s4] sm:$0x1]
    %v1747 = vlaneseq
    %v1748 = vshrl.u32 %v1747, 7
    %v1749 = vsub.s32 0, %v1748
    %v1750 = vrot.slane %v1745, %v1749
    %v1760 = vunpack.c.l.b16 %v1737
    %v1761 = vunpack.c.l.b16 %v1738
    %v1762 = vunpack.c.l.b16 %v1739
    %v1763 = vunpack.c.l.b16 %v1740
    %v1764 = vunpack.c.l.b16 %v1741
    %v1765 = vunpack.c.l.b16 %v1742
    %v1766 = vunpack.c.l.b16 %v1743
    %v1767 = vunpack.c.l.b16 %v1744
    %v1768 = vpack.c.b16 %v1761, %v1760
    %v1769 = vpack.c.b16 %v1763, %v1762
    %v1770 = vpack.c.b16 %v1765, %v1764
    %v1771 = vpack.c.b16 %v1767, %v1766
    %v1777 = vsel %vm247, %v1736, 0
    %1779 = vmatprep.subr.bf16.mxu0 0
    %1780 = vmatpush1.bf16.msra.mxu0 %v1768
    %1781 = vmatprep.subr.bf16.mxu0 0
    %1782 = vmatpush1.bf16.msra.mxu0 %v1769
    %1783 = vmatprep.subr.bf16.mxu0 0
    %1784 = vmatpush1.bf16.msra.mxu0 %v1770
    %1785 = vmatprep.subr.bf16.mxu0 0
    %1786 = vmatpush1.bf16.msra.mxu0 %v1771
    %1787 = vmatprep.subr.bf16.mxu0 0
    %1788 = vmatpush1.bf16.msra.mxu0 0
    %1789 = vmatprep.subr.bf16.mxu0 0
    %1790 = vmatpush1.bf16.msra.mxu0 0
    %1791 = vmatprep.subr.bf16.mxu0 0
    %1792 = vmatpush1.bf16.msra.mxu0 0
    %1793 = vmatprep.subr.bf16.mxu0 0
    %1794 = vmatpush1.bf16.msra.mxu0 0
    %1795 = vmatprep.subr.bf16.mxu0 0
    %1796 = vmatpush1.bf16.msra.mxu0 0
    %1797 = vmatprep.subr.bf16.mxu0 0
    %1798 = vmatpush1.bf16.msra.mxu0 0
    %1799 = vmatprep.subr.bf16.mxu0 0
    %1800 = vmatpush1.bf16.msra.mxu0 0
    %1801 = vmatprep.subr.bf16.mxu0 0
    %1802 = vmatpush1.bf16.msra.mxu0 0
    %1803 = vmatprep.subr.bf16.mxu0 0
    %1804 = vmatpush1.bf16.msra.mxu0 0
    %1805 = vmatprep.subr.bf16.mxu0 0
    %1806 = vmatpush1.bf16.msra.mxu0 0
    %1807 = vmatprep.subr.bf16.mxu0 0
    %1808 = vmatpush1.bf16.msra.mxu0 0
    %1809 = vmatprep.subr.bf16.mxu0 0
    %1810 = vmatpush1.bf16.msra.mxu0 0
    %1811 = vmatprep.mubr.bf16.mxu0 0
    %1812 = vmatmul.mubr.bf16.gmra.mrb[0].mxu0 %v1777
    %v1813 = vpop.f32.mrb[0].mxu0
    %v1814 = vadd.f32 %v1750, %v1813
    %v1815 = vpop.f32.mrb[0].mxu0
    %v1816 = vpop.f32.mrb[0].mxu0
    %v1817 = vpop.f32.mrb[0].mxu0
    %1818 = vdwg.mxu0
    %v1819 = vmul.f32 %v1814, 0.5
    %v1820 = vtanh.pop %v1819
    %v1821 = vmul.f32 %v1820, 0.5
    %v1822 = vadd.f32 %v1821, 0.5
    %v1823 = vtanh.pop %v1814
    %v1824 = vld [vmem:[#allocation3] sm:$0xff]
    %1826 = vrot.lane.b32.xlu0 %v1824, 32
    %v1827 = vpop.permute.xlu0 %1826
    %v1829 = vmul.f32 %v1822, %v1827
    %1831 = vrot.lane.b32.xlu0 %v1823, 64
    %v1832 = vpop.permute.xlu0 %1831
    %v1834 = vmul.f32 %v1822, %v1832
    %1836 = vrot.lane.b32.xlu0 %v1834, 32
    %v1837 = vpop.permute.xlu0 %1836
    %v1839 = vadd.f32 %v1829, %v1837
    %v1840 = vtanh.pop %v1839
    %1842 = vrot.lane.b32.xlu0 %v1840, 64
    %v1843 = vpop.permute.xlu0 %1842
    %v1845 = vmul.f32 %v1822, %v1843
    %1847 = vrot.lane.b32.xlu0 %v1839, 96
    %v1848 = vpop.permute.xlu0 %1847
    %1850 = vst.msk [vmem:[#allocation3] sm:$0xff] %vm204, %v1848
    %1852 = vrot.lane.b32.xlu0 %v1845, 64
    %v1853 = vpop.permute.xlu0 %1852
    %1855 = vst.msk [vmem:[#allocation2] sm:$0xff] %vm327, %v1853
    %1856 = vrot.lane.b32.xlu0 %v1845, 32
    %v1857 = vpop.permute.xlu0 %1856
    %1859 = vst.msk [vmem:[%s332] sm:$0xff] %vm204, %v1857
    %v1860 = vld [vmem:[%s332] sm:$0xff]
    %v1861 = vpack.c.bf16 %v1860, %v1860
    %v1862 = vld [vmem:[%s336] sm:$0xf]
    %v1863 = vld [vmem:[%s336 + $0x4] sm:$0xf]
    %v1864 = vld [vmem:[%s336 + $0x8] sm:$0xf]
    %v1865 = vld [vmem:[%s336 + $0xc] sm:$0xf]
    %v1866 = vld [vmem:[%s336 + $0x10] sm:$0xf]
    %v1867 = vld [vmem:[%s336 + $0x14] sm:$0xf]
    %v1868 = vld [vmem:[%s336 + $0x18] sm:$0xf]
    %v1869 = vld [vmem:[%s336 + $0x1c] sm:$0xf]
    %v1870 = vld [vmem:[%s345] sm:$0x1]
    %v1872 = vlaneseq
    %v1873 = vshrl.u32 %v1872, 7
    %v1874 = vsub.s32 0, %v1873
    %v1875 = vrot.slane %v1870, %v1874
    %v1885 = vunpack.c.l.b16 %v1862
    %v1886 = vunpack.c.l.b16 %v1863
    %v1887 = vunpack.c.l.b16 %v1864
    %v1888 = vunpack.c.l.b16 %v1865
    %v1889 = vunpack.c.l.b16 %v1866
    %v1890 = vunpack.c.l.b16 %v1867
    %v1891 = vunpack.c.l.b16 %v1868
    %v1892 = vunpack.c.l.b16 %v1869
    %v1893 = vpack.c.b16 %v1886, %v1885
    %v1894 = vpack.c.b16 %v1888, %v1887
    %v1895 = vpack.c.b16 %v1890, %v1889
    %v1896 = vpack.c.b16 %v1892, %v1891
    %v1902 = vsel %vm247, %v1861, 0
    %1904 = vmatprep.subr.bf16.mxu0 0
    %1905 = vmatpush1.bf16.msra.mxu0 %v1893
    %1906 = vmatprep.subr.bf16.mxu0 0
    %1907 = vmatpush1.bf16.msra.mxu0 %v1894
    %1908 = vmatprep.subr.bf16.mxu0 0
    %1909 = vmatpush1.bf16.msra.mxu0 %v1895
    %1910 = vmatprep.subr.bf16.mxu0 0
    %1911 = vmatpush1.bf16.msra.mxu0 %v1896
    %1912 = vmatprep.subr.bf16.mxu0 0
    %1913 = vmatpush1.bf16.msra.mxu0 0
    %1914 = vmatprep.subr.bf16.mxu0 0
    %1915 = vmatpush1.bf16.msra.mxu0 0
    %1916 = vmatprep.subr.bf16.mxu0 0
    %1917 = vmatpush1.bf16.msra.mxu0 0
    %1918 = vmatprep.subr.bf16.mxu0 0
    %1919 = vmatpush1.bf16.msra.mxu0 0
    %1920 = vmatprep.subr.bf16.mxu0 0
    %1921 = vmatpush1.bf16.msra.mxu0 0
    %1922 = vmatprep.subr.bf16.mxu0 0
    %1923 = vmatpush1.bf16.msra.mxu0 0
    %1924 = vmatprep.subr.bf16.mxu0 0
    %1925 = vmatpush1.bf16.msra.mxu0 0
    %1926 = vmatprep.subr.bf16.mxu0 0
    %1927 = vmatpush1.bf16.msra.mxu0 0
    %1928 = vmatprep.subr.bf16.mxu0 0
    %1929 = vmatpush1.bf16.msra.mxu0 0
    %1930 = vmatprep.subr.bf16.mxu0 0
    %1931 = vmatpush1.bf16.msra.mxu0 0
    %1932 = vmatprep.subr.bf16.mxu0 0
    %1933 = vmatpush1.bf16.msra.mxu0 0
    %1934 = vmatprep.subr.bf16.mxu0 0
    %1935 = vmatpush1.bf16.msra.mxu0 0
    %1936 = vmatprep.mubr.bf16.mxu0 0
    %1937 = vmatmul.mubr.bf16.gmra.mrb[0].mxu0 %v1902
    %v1938 = vpop.f32.mrb[0].mxu0
    %v1939 = vadd.f32 %v1875, %v1938
    %v1940 = vpop.f32.mrb[0].mxu0
    %v1941 = vpop.f32.mrb[0].mxu0
    %v1942 = vpop.f32.mrb[0].mxu0
    %1943 = vdwg.mxu0
    %v1944 = vmul.f32 %v1939, 0.5
    %v1945 = vtanh.pop %v1944
    %v1946 = vmul.f32 %v1945, 0.5
    %v1947 = vadd.f32 %v1946, 0.5
    %v1948 = vtanh.pop %v1939
    %v1949 = vld [vmem:[%s425] sm:$0xff]
    %1951 = vrot.lane.b32.xlu0 %v1949, 32
    %v1952 = vpop.permute.xlu0 %1951
    %v1954 = vmul.f32 %v1947, %v1952
    %1956 = vrot.lane.b32.xlu0 %v1948, 64
    %v1957 = vpop.permute.xlu0 %1956
    %v1959 = vmul.f32 %v1947, %v1957
    %1961 = vrot.lane.b32.xlu0 %v1959, 32
    %v1962 = vpop.permute.xlu0 %1961
    %v1964 = vadd.f32 %v1954, %v1962
    %v1965 = vtanh.pop %v1964
    %1967 = vrot.lane.b32.xlu0 %v1965, 64
    %v1968 = vpop.permute.xlu0 %1967
    %v1970 = vmul.f32 %v1947, %v1968
    %1972 = vrot.lane.b32.xlu0 %v1964, 96
    %v1973 = vpop.permute.xlu0 %1972
    %1975 = vst.msk [vmem:[%s425] sm:$0xff] %vm204, %v1973
    %1977 = vrot.lane.b32.xlu0 %v1970, 64
    %v1978 = vpop.permute.xlu0 %1977
    %1980 = vst.msk [vmem:[%s332] sm:$0xff] %vm327, %v1978
    %v1981 = vpack.c.bf16 %v1970, %v1970
    %v1982 = vld [vmem:[%s5] sm:$0xf]
    %v1983 = vld [vmem:[%s5 + $0x4] sm:$0xf]
    %v1984 = vld [vmem:[%s5 + $0x8] sm:$0xf]
    %v1985 = vld [vmem:[%s5 + $0xc] sm:$0xf]
    %v1986 = vld [vmem:[%s6] sm:$0x1]
    %v1988 = vlaneseq
    %v1989 = vshrl.u32 %v1988, 7
    %v1990 = vsub.s32 0, %v1989
    %v1991 = vrot.slane %v1986, %v1990
    %1994 = vrot.lane.b32.xlu0 %v1981, 32
    %v1995 = vpop.permute.xlu0 %1994
    %v2000 = vunpack.c.l.b16 %v1982
    %v2001 = vunpack.c.l.b16 %v1983
    %v2002 = vunpack.c.l.b16 %v1984
    %v2003 = vunpack.c.l.b16 %v1985
    %v2004 = vpack.c.b16 %v2001, %v2000
    %v2005 = vpack.c.b16 %v2003, %v2002
    %v2009 = vsel %vm204, %v1995, 0
    %2011 = vmatprep.subr.bf16.mxu0 0
    %2012 = vmatpush1.bf16.msra.mxu0 %v2004
    %2013 = vmatprep.subr.bf16.mxu0 0
    %2014 = vmatpush1.bf16.msra.mxu0 %v2005
    %2015 = vmatprep.subr.bf16.mxu0 0
    %2016 = vmatpush1.bf16.msra.mxu0 0
    %2017 = vmatprep.subr.bf16.mxu0 0
    %2018 = vmatpush1.bf16.msra.mxu0 0
    %2019 = vmatprep.subr.bf16.mxu0 0
    %2020 = vmatpush1.bf16.msra.mxu0 0
    %2021 = vmatprep.subr.bf16.mxu0 0
    %2022 = vmatpush1.bf16.msra.mxu0 0
    %2023 = vmatprep.subr.bf16.mxu0 0
    %2024 = vmatpush1.bf16.msra.mxu0 0
    %2025 = vmatprep.subr.bf16.mxu0 0
    %2026 = vmatpush1.bf16.msra.mxu0 0
    %2027 = vmatprep.subr.bf16.mxu0 0
    %2028 = vmatpush1.bf16.msra.mxu0 0
    %2029 = vmatprep.subr.bf16.mxu0 0
    %2030 = vmatpush1.bf16.msra.mxu0 0
    %2031 = vmatprep.subr.bf16.mxu0 0
    %2032 = vmatpush1.bf16.msra.mxu0 0
    %2033 = vmatprep.subr.bf16.mxu0 0
    %2034 = vmatpush1.bf16.msra.mxu0 0
    %2035 = vmatprep.subr.bf16.mxu0 0
    %2036 = vmatpush1.bf16.msra.mxu0 0
    %2037 = vmatprep.subr.bf16.mxu0 0
    %2038 = vmatpush1.bf16.msra.mxu0 0
    %2039 = vmatprep.subr.bf16.mxu0 0
    %2040 = vmatpush1.bf16.msra.mxu0 0
    %2041 = vmatprep.subr.bf16.mxu0 0
    %2042 = vmatpush1.bf16.msra.mxu0 0
    %2043 = vmatprep.mubr.bf16.mxu0 0
    %2044 = vmatmul.mubr.bf16.gmra.mrb[0].mxu0 %v2009
    %v2045 = vpop.f32.mrb[0].mxu0
    %v2046 = vadd.f32 %v1991, %v2045
    %v2047 = vpop.f32.mrb[0].mxu0
    %v2048 = vpop.f32.mrb[0].mxu0
    %v2049 = vpop.f32.mrb[0].mxu0
    %2050 = vdwg.mxu0
    %v2051 = vtanh.pop %v2046
    %s2052 = scalar_lea.vmem [#allocation15], 32
    %2053 = vst [vmem:[%s2052] sm:$0xff] %v2051
    %s2054 = scalar_lea.vmem [#allocation4], 40
    %v2055 = vld [vmem:[%s2054] sm:$0xff]
    %v2056 = vpack.c.bf16 %v2055, %v2055
    %v2057 = vld [vmem:[#allocation7] sm:$0xf]
    %v2058 = vld [vmem:[#allocation7 + $0x4] sm:$0xf]
    %v2059 = vld [vmem:[#allocation9] sm:$0x1]
    %v2061 = vlaneseq
    %v2062 = vshrl.u32 %v2061, 7
    %v2063 = vsub.s32 0, %v2062
    %v2064 = vrot.slane %v2059, %v2063
    %v2068 = vunpack.c.l.b16 %v2057
    %v2069 = vunpack.c.l.b16 %v2058
    %v2070 = vpack.c.b16 %v2069, %v2068
    %v2073 = vsel %vm160, %v2056, 0
    %2075 = vmatprep.subr.bf16.mxu0 0
    %2076 = vmatpush1.bf16.msra.mxu0 %v2070
    %2077 = vmatprep.subr.bf16.mxu0 0
    %2078 = vmatpush1.bf16.msra.mxu0 0
    %2079 = vmatprep.subr.bf16.mxu0 0
    %2080 = vmatpush1.bf16.msra.mxu0 0
    %2081 = vmatprep.subr.bf16.mxu0 0
    %2082 = vmatpush1.bf16.msra.mxu0 0
    %2083 = vmatprep.subr.bf16.mxu0 0
    %2084 = vmatpush1.bf16.msra.mxu0 0
    %2085 = vmatprep.subr.bf16.mxu0 0
    %2086 = vmatpush1.bf16.msra.mxu0 0
    %2087 = vmatprep.subr.bf16.mxu0 0
    %2088 = vmatpush1.bf16.msra.mxu0 0
    %2089 = vmatprep.subr.bf16.mxu0 0
    %2090 = vmatpush1.bf16.msra.mxu0 0
    %2091 = vmatprep.subr.bf16.mxu0 0
    %2092 = vmatpush1.bf16.msra.mxu0 0
    %2093 = vmatprep.subr.bf16.mxu0 0
    %2094 = vmatpush1.bf16.msra.mxu0 0
    %2095 = vmatprep.subr.bf16.mxu0 0
    %2096 = vmatpush1.bf16.msra.mxu0 0
    %2097 = vmatprep.subr.bf16.mxu0 0
    %2098 = vmatpush1.bf16.msra.mxu0 0
    %2099 = vmatprep.subr.bf16.mxu0 0
    %2100 = vmatpush1.bf16.msra.mxu0 0
    %2101 = vmatprep.subr.bf16.mxu0 0
    %2102 = vmatpush1.bf16.msra.mxu0 0
    %2103 = vmatprep.subr.bf16.mxu0 0
    %2104 = vmatpush1.bf16.msra.mxu0 0
    %2105 = vmatprep.subr.bf16.mxu0 0
    %2106 = vmatpush1.bf16.msra.mxu0 0
    %2107 = vmatprep.mubr.bf16.mxu0 0
    %2108 = vmatmul.mubr.bf16.gmra.mrb[0].mxu0 %v2073
    %v2109 = vpop.f32.mrb[0].mxu0
    %v2110 = vadd.f32 %v2064, %v2109
    %v2111 = vpop.f32.mrb[0].mxu0
    %v2112 = vpop.f32.mrb[0].mxu0
    %v2113 = vpop.f32.mrb[0].mxu0
    %2114 = vdwg.mxu0
    %2115 = vst.msk [vmem:[#allocation2] sm:$0xff] %vm204, %v2110
    %v2116 = vld [vmem:[#allocation2] sm:$0xff]
    %v2117 = vpack.c.bf16 %v2116, %v2116
    %v2118 = vld [vmem:[#allocation10] sm:$0xf]
    %v2119 = vld [vmem:[#allocation10 + $0x4] sm:$0xf]
    %v2120 = vld [vmem:[#allocation10 + $0x8] sm:$0xf]
    %v2121 = vld [vmem:[#allocation10 + $0xc] sm:$0xf]
    %v2122 = vld [vmem:[#allocation10 + $0x10] sm:$0xf]
    %v2123 = vld [vmem:[#allocation10 + $0x14] sm:$0xf]
    %v2124 = vld [vmem:[#allocation10 + $0x18] sm:$0xf]
    %v2125 = vld [vmem:[#allocation10 + $0x1c] sm:$0xf]
    %v2126 = vld [vmem:[%s4] sm:$0x1]
    %v2128 = vlaneseq
    %v2129 = vshrl.u32 %v2128, 7
    %v2130 = vsub.s32 0, %v2129
    %v2131 = vrot.slane %v2126, %v2130
    %v2141 = vunpack.c.l.b16 %v2118
    %v2142 = vunpack.c.l.b16 %v2119
    %v2143 = vunpack.c.l.b16 %v2120
    %v2144 = vunpack.c.l.b16 %v2121
    %v2145 = vunpack.c.l.b16 %v2122
    %v2146 = vunpack.c.l.b16 %v2123
    %v2147 = vunpack.c.l.b16 %v2124
    %v2148 = vunpack.c.l.b16 %v2125
    %v2149 = vpack.c.b16 %v2142, %v2141
    %v2150 = vpack.c.b16 %v2144, %v2143
    %v2151 = vpack.c.b16 %v2146, %v2145
    %v2152 = vpack.c.b16 %v2148, %v2147
    %v2158 = vsel %vm247, %v2117, 0
    %2160 = vmatprep.subr.bf16.mxu0 0
    %2161 = vmatpush1.bf16.msra.mxu0 %v2149
    %2162 = vmatprep.subr.bf16.mxu0 0
    %2163 = vmatpush1.bf16.msra.mxu0 %v2150
    %2164 = vmatprep.subr.bf16.mxu0 0
    %2165 = vmatpush1.bf16.msra.mxu0 %v2151
    %2166 = vmatprep.subr.bf16.mxu0 0
    %2167 = vmatpush1.bf16.msra.mxu0 %v2152
    %2168 = vmatprep.subr.bf16.mxu0 0
    %2169 = vmatpush1.bf16.msra.mxu0 0
    %2170 = vmatprep.subr.bf16.mxu0 0
    %2171 = vmatpush1.bf16.msra.mxu0 0
    %2172 = vmatprep.subr.bf16.mxu0 0
    %2173 = vmatpush1.bf16.msra.mxu0 0
    %2174 = vmatprep.subr.bf16.mxu0 0
    %2175 = vmatpush1.bf16.msra.mxu0 0
    %2176 = vmatprep.subr.bf16.mxu0 0
    %2177 = vmatpush1.bf16.msra.mxu0 0
    %2178 = vmatprep.subr.bf16.mxu0 0
    %2179 = vmatpush1.bf16.msra.mxu0 0
    %2180 = vmatprep.subr.bf16.mxu0 0
    %2181 = vmatpush1.bf16.msra.mxu0 0
    %2182 = vmatprep.subr.bf16.mxu0 0
    %2183 = vmatpush1.bf16.msra.mxu0 0
    %2184 = vmatprep.subr.bf16.mxu0 0
    %2185 = vmatpush1.bf16.msra.mxu0 0
    %2186 = vmatprep.subr.bf16.mxu0 0
    %2187 = vmatpush1.bf16.msra.mxu0 0
    %2188 = vmatprep.subr.bf16.mxu0 0
    %2189 = vmatpush1.bf16.msra.mxu0 0
    %2190 = vmatprep.subr.bf16.mxu0 0
    %2191 = vmatpush1.bf16.msra.mxu0 0
    %2192 = vmatprep.mubr.bf16.mxu0 0
    %2193 = vmatmul.mubr.bf16.gmra.mrb[0].mxu0 %v2158
    %v2194 = vpop.f32.mrb[0].mxu0
    %v2195 = vadd.f32 %v2131, %v2194
    %v2196 = vpop.f32.mrb[0].mxu0
    %v2197 = vpop.f32.mrb[0].mxu0
    %v2198 = vpop.f32.mrb[0].mxu0
    %2199 = vdwg.mxu0
    %v2200 = vmul.f32 %v2195, 0.5
    %v2201 = vtanh.pop %v2200
    %v2202 = vmul.f32 %v2201, 0.5
    %v2203 = vadd.f32 %v2202, 0.5
    %v2204 = vtanh.pop %v2195
    %v2205 = vld [vmem:[#allocation3] sm:$0xff]
    %2207 = vrot.lane.b32.xlu0 %v2205, 32
    %v2208 = vpop.permute.xlu0 %2207
    %v2210 = vmul.f32 %v2203, %v2208
    %2212 = vrot.lane.b32.xlu0 %v2204, 64
    %v2213 = vpop.permute.xlu0 %2212
    %v2215 = vmul.f32 %v2203, %v2213
    %2217 = vrot.lane.b32.xlu0 %v2215, 32
    %v2218 = vpop.permute.xlu0 %2217
    %v2220 = vadd.f32 %v2210, %v2218
    %v2221 = vtanh.pop %v2220
    %2223 = vrot.lane.b32.xlu0 %v2221, 64
    %v2224 = vpop.permute.xlu0 %2223
    %v2226 = vmul.f32 %v2203, %v2224
    %2228 = vrot.lane.b32.xlu0 %v2220, 96
    %v2229 = vpop.permute.xlu0 %2228
    %2231 = vst.msk [vmem:[#allocation3] sm:$0xff] %vm204, %v2229
    %2233 = vrot.lane.b32.xlu0 %v2226, 64
    %v2234 = vpop.permute.xlu0 %2233
    %2236 = vst.msk [vmem:[#allocation2] sm:$0xff] %vm327, %v2234
    %2237 = vrot.lane.b32.xlu0 %v2226, 32
    %v2238 = vpop.permute.xlu0 %2237
    %2240 = vst.msk [vmem:[%s332] sm:$0xff] %vm204, %v2238
    %v2241 = vld [vmem:[%s332] sm:$0xff]
    %v2242 = vpack.c.bf16 %v2241, %v2241
    %v2243 = vld [vmem:[%s336] sm:$0xf]
    %v2244 = vld [vmem:[%s336 + $0x4] sm:$0xf]
    %v2245 = vld [vmem:[%s336 + $0x8] sm:$0xf]
    %v2246 = vld [vmem:[%s336 + $0xc] sm:$0xf]
    %v2247 = vld [vmem:[%s336 + $0x10] sm:$0xf]
    %v2248 = vld [vmem:[%s336 + $0x14] sm:$0xf]
    %v2249 = vld [vmem:[%s336 + $0x18] sm:$0xf]
    %v2250 = vld [vmem:[%s336 + $0x1c] sm:$0xf]
    %v2251 = vld [vmem:[%s345] sm:$0x1]
    %v2253 = vlaneseq
    %v2254 = vshrl.u32 %v2253, 7
    %v2255 = vsub.s32 0, %v2254
    %v2256 = vrot.slane %v2251, %v2255
    %v2266 = vunpack.c.l.b16 %v2243
    %v2267 = vunpack.c.l.b16 %v2244
    %v2268 = vunpack.c.l.b16 %v2245
    %v2269 = vunpack.c.l.b16 %v2246
    %v2270 = vunpack.c.l.b16 %v2247
    %v2271 = vunpack.c.l.b16 %v2248
    %v2272 = vunpack.c.l.b16 %v2249
    %v2273 = vunpack.c.l.b16 %v2250
    %v2274 = vpack.c.b16 %v2267, %v2266
    %v2275 = vpack.c.b16 %v2269, %v2268
    %v2276 = vpack.c.b16 %v2271, %v2270
    %v2277 = vpack.c.b16 %v2273, %v2272
    %v2283 = vsel %vm247, %v2242, 0
    %2285 = vmatprep.subr.bf16.mxu0 0
    %2286 = vmatpush1.bf16.msra.mxu0 %v2274
    %2287 = vmatprep.subr.bf16.mxu0 0
    %2288 = vmatpush1.bf16.msra.mxu0 %v2275
    %2289 = vmatprep.subr.bf16.mxu0 0
    %2290 = vmatpush1.bf16.msra.mxu0 %v2276
    %2291 = vmatprep.subr.bf16.mxu0 0
    %2292 = vmatpush1.bf16.msra.mxu0 %v2277
    %2293 = vmatprep.subr.bf16.mxu0 0
    %2294 = vmatpush1.bf16.msra.mxu0 0
    %2295 = vmatprep.subr.bf16.mxu0 0
    %2296 = vmatpush1.bf16.msra.mxu0 0
    %2297 = vmatprep.subr.bf16.mxu0 0
    %2298 = vmatpush1.bf16.msra.mxu0 0
    %2299 = vmatprep.subr.bf16.mxu0 0
    %2300 = vmatpush1.bf16.msra.mxu0 0
    %2301 = vmatprep.subr.bf16.mxu0 0
    %2302 = vmatpush1.bf16.msra.mxu0 0
    %2303 = vmatprep.subr.bf16.mxu0 0
    %2304 = vmatpush1.bf16.msra.mxu0 0
    %2305 = vmatprep.subr.bf16.mxu0 0
    %2306 = vmatpush1.bf16.msra.mxu0 0
    %2307 = vmatprep.subr.bf16.mxu0 0
    %2308 = vmatpush1.bf16.msra.mxu0 0
    %2309 = vmatprep.subr.bf16.mxu0 0
    %2310 = vmatpush1.bf16.msra.mxu0 0
    %2311 = vmatprep.subr.bf16.mxu0 0
    %2312 = vmatpush1.bf16.msra.mxu0 0
    %2313 = vmatprep.subr.bf16.mxu0 0
    %2314 = vmatpush1.bf16.msra.mxu0 0
    %2315 = vmatprep.subr.bf16.mxu0 0
    %2316 = vmatpush1.bf16.msra.mxu0 0
    %2317 = vmatprep.mubr.bf16.mxu0 0
    %2318 = vmatmul.mubr.bf16.gmra.mrb[0].mxu0 %v2283
    %v2319 = vpop.f32.mrb[0].mxu0
    %v2320 = vadd.f32 %v2256, %v2319
    %v2321 = vpop.f32.mrb[0].mxu0
    %v2322 = vpop.f32.mrb[0].mxu0
    %v2323 = vpop.f32.mrb[0].mxu0
    %2324 = vdwg.mxu0
    %v2325 = vmul.f32 %v2320, 0.5
    %v2326 = vtanh.pop %v2325
    %v2327 = vmul.f32 %v2326, 0.5
    %v2328 = vadd.f32 %v2327, 0.5
    %v2329 = vtanh.pop %v2320
    %v2330 = vld [vmem:[%s425] sm:$0xff]
    %2332 = vrot.lane.b32.xlu0 %v2330, 32
    %v2333 = vpop.permute.xlu0 %2332
    %v2335 = vmul.f32 %v2328, %v2333
    %2337 = vrot.lane.b32.xlu0 %v2329, 64
    %v2338 = vpop.permute.xlu0 %2337
    %v2340 = vmul.f32 %v2328, %v2338
    %2342 = vrot.lane.b32.xlu0 %v2340, 32
    %v2343 = vpop.permute.xlu0 %2342
    %v2345 = vadd.f32 %v2335, %v2343
    %v2346 = vtanh.pop %v2345
    %2348 = vrot.lane.b32.xlu0 %v2346, 64
    %v2349 = vpop.permute.xlu0 %2348
    %v2351 = vmul.f32 %v2328, %v2349
    %2353 = vrot.lane.b32.xlu0 %v2345, 96
    %v2354 = vpop.permute.xlu0 %2353
    %2356 = vst.msk [vmem:[%s425] sm:$0xff] %vm204, %v2354
    %2358 = vrot.lane.b32.xlu0 %v2351, 64
    %v2359 = vpop.permute.xlu0 %2358
    %2361 = vst.msk [vmem:[%s332] sm:$0xff] %vm327, %v2359
    %v2362 = vpack.c.bf16 %v2351, %v2351
    %v2363 = vld [vmem:[%s5] sm:$0xf]
    %v2364 = vld [vmem:[%s5 + $0x4] sm:$0xf]
    %v2365 = vld [vmem:[%s5 + $0x8] sm:$0xf]
    %v2366 = vld [vmem:[%s5 + $0xc] sm:$0xf]
    %v2367 = vld [vmem:[%s6] sm:$0x1]
    %v2369 = vlaneseq
    %v2370 = vshrl.u32 %v2369, 7
    %v2371 = vsub.s32 0, %v2370
    %v2372 = vrot.slane %v2367, %v2371
    %2375 = vrot.lane.b32.xlu0 %v2362, 32
    %v2376 = vpop.permute.xlu0 %2375
    %v2381 = vunpack.c.l.b16 %v2363
    %v2382 = vunpack.c.l.b16 %v2364
    %v2383 = vunpack.c.l.b16 %v2365
    %v2384 = vunpack.c.l.b16 %v2366
    %v2385 = vpack.c.b16 %v2382, %v2381
    %v2386 = vpack.c.b16 %v2384, %v2383
    %v2390 = vsel %vm204, %v2376, 0
    %2392 = vmatprep.subr.bf16.mxu0 0
    %2393 = vmatpush1.bf16.msra.mxu0 %v2385
    %2394 = vmatprep.subr.bf16.mxu0 0
    %2395 = vmatpush1.bf16.msra.mxu0 %v2386
    %2396 = vmatprep.subr.bf16.mxu0 0
    %2397 = vmatpush1.bf16.msra.mxu0 0
    %2398 = vmatprep.subr.bf16.mxu0 0
    %2399 = vmatpush1.bf16.msra.mxu0 0
    %2400 = vmatprep.subr.bf16.mxu0 0
    %2401 = vmatpush1.bf16.msra.mxu0 0
    %2402 = vmatprep.subr.bf16.mxu0 0
    %2403 = vmatpush1.bf16.msra.mxu0 0
    %2404 = vmatprep.subr.bf16.mxu0 0
    %2405 = vmatpush1.bf16.msra.mxu0 0
    %2406 = vmatprep.subr.bf16.mxu0 0
    %2407 = vmatpush1.bf16.msra.mxu0 0
    %2408 = vmatprep.subr.bf16.mxu0 0
    %2409 = vmatpush1.bf16.msra.mxu0 0
    %2410 = vmatprep.subr.bf16.mxu0 0
    %2411 = vmatpush1.bf16.msra.mxu0 0
    %2412 = vmatprep.subr.bf16.mxu0 0
    %2413 = vmatpush1.bf16.msra.mxu0 0
    %2414 = vmatprep.subr.bf16.mxu0 0
    %2415 = vmatpush1.bf16.msra.mxu0 0
    %2416 = vmatprep.subr.bf16.mxu0 0
    %2417 = vmatpush1.bf16.msra.mxu0 0
    %2418 = vmatprep.subr.bf16.mxu0 0
    %2419 = vmatpush1.bf16.msra.mxu0 0
    %2420 = vmatprep.subr.bf16.mxu0 0
    %2421 = vmatpush1.bf16.msra.mxu0 0
    %2422 = vmatprep.subr.bf16.mxu0 0
    %2423 = vmatpush1.bf16.msra.mxu0 0
    %2424 = vmatprep.mubr.bf16.mxu0 0
    %2425 = vmatmul.mubr.bf16.gmra.mrb[0].mxu0 %v2390
    %v2426 = vpop.f32.mrb[0].mxu0
    %v2427 = vadd.f32 %v2372, %v2426
    %v2428 = vpop.f32.mrb[0].mxu0
    %v2429 = vpop.f32.mrb[0].mxu0
    %v2430 = vpop.f32.mrb[0].mxu0
    %2431 = vdwg.mxu0
    %v2432 = vtanh.pop %v2427
    %s2433 = scalar_lea.vmem [#allocation15], 40
    %2434 = vst [vmem:[%s2433] sm:$0xff] %v2432
    %s2435 = scalar_lea.vmem [#allocation4], 48
    %v2436 = vld [vmem:[%s2435] sm:$0xff]
    %v2437 = vpack.c.bf16 %v2436, %v2436
    %v2438 = vld [vmem:[#allocation7] sm:$0xf]
    %v2439 = vld [vmem:[#allocation7 + $0x4] sm:$0xf]
    %v2440 = vld [vmem:[#allocation9] sm:$0x1]
    %v2442 = vlaneseq
    %v2443 = vshrl.u32 %v2442, 7
    %v2444 = vsub.s32 0, %v2443
    %v2445 = vrot.slane %v2440, %v2444
    %v2449 = vunpack.c.l.b16 %v2438
    %v2450 = vunpack.c.l.b16 %v2439
    %v2451 = vpack.c.b16 %v2450, %v2449
    %v2454 = vsel %vm160, %v2437, 0
    %2456 = vmatprep.subr.bf16.mxu0 0
    %2457 = vmatpush1.bf16.msra.mxu0 %v2451
    %2458 = vmatprep.subr.bf16.mxu0 0
    %2459 = vmatpush1.bf16.msra.mxu0 0
    %2460 = vmatprep.subr.bf16.mxu0 0
    %2461 = vmatpush1.bf16.msra.mxu0 0
    %2462 = vmatprep.subr.bf16.mxu0 0
    %2463 = vmatpush1.bf16.msra.mxu0 0
    %2464 = vmatprep.subr.bf16.mxu0 0
    %2465 = vmatpush1.bf16.msra.mxu0 0
    %2466 = vmatprep.subr.bf16.mxu0 0
    %2467 = vmatpush1.bf16.msra.mxu0 0
    %2468 = vmatprep.subr.bf16.mxu0 0
    %2469 = vmatpush1.bf16.msra.mxu0 0
    %2470 = vmatprep.subr.bf16.mxu0 0
    %2471 = vmatpush1.bf16.msra.mxu0 0
    %2472 = vmatprep.subr.bf16.mxu0 0
    %2473 = vmatpush1.bf16.msra.mxu0 0
    %2474 = vmatprep.subr.bf16.mxu0 0
    %2475 = vmatpush1.bf16.msra.mxu0 0
    %2476 = vmatprep.subr.bf16.mxu0 0
    %2477 = vmatpush1.bf16.msra.mxu0 0
    %2478 = vmatprep.subr.bf16.mxu0 0
    %2479 = vmatpush1.bf16.msra.mxu0 0
    %2480 = vmatprep.subr.bf16.mxu0 0
    %2481 = vmatpush1.bf16.msra.mxu0 0
    %2482 = vmatprep.subr.bf16.mxu0 0
    %2483 = vmatpush1.bf16.msra.mxu0 0
    %2484 = vmatprep.subr.bf16.mxu0 0
    %2485 = vmatpush1.bf16.msra.mxu0 0
    %2486 = vmatprep.subr.bf16.mxu0 0
    %2487 = vmatpush1.bf16.msra.mxu0 0
    %2488 = vmatprep.mubr.bf16.mxu0 0
    %2489 = vmatmul.mubr.bf16.gmra.mrb[0].mxu0 %v2454
    %v2490 = vpop.f32.mrb[0].mxu0
    %v2491 = vadd.f32 %v2445, %v2490
    %v2492 = vpop.f32.mrb[0].mxu0
    %v2493 = vpop.f32.mrb[0].mxu0
    %v2494 = vpop.f32.mrb[0].mxu0
    %2495 = vdwg.mxu0
    %2496 = vst.msk [vmem:[#allocation2] sm:$0xff] %vm204, %v2491
    %v2497 = vld [vmem:[#allocation2] sm:$0xff]
    %v2498 = vpack.c.bf16 %v2497, %v2497
    %v2499 = vld [vmem:[#allocation10] sm:$0xf]
    %v2500 = vld [vmem:[#allocation10 + $0x4] sm:$0xf]
    %v2501 = vld [vmem:[#allocation10 + $0x8] sm:$0xf]
    %v2502 = vld [vmem:[#allocation10 + $0xc] sm:$0xf]
    %v2503 = vld [vmem:[#allocation10 + $0x10] sm:$0xf]
    %v2504 = vld [vmem:[#allocation10 + $0x14] sm:$0xf]
    %v2505 = vld [vmem:[#allocation10 + $0x18] sm:$0xf]
    %v2506 = vld [vmem:[#allocation10 + $0x1c] sm:$0xf]
    %v2507 = vld [vmem:[%s4] sm:$0x1]
    %v2509 = vlaneseq
    %v2510 = vshrl.u32 %v2509, 7
    %v2511 = vsub.s32 0, %v2510
    %v2512 = vrot.slane %v2507, %v2511
    %v2522 = vunpack.c.l.b16 %v2499
    %v2523 = vunpack.c.l.b16 %v2500
    %v2524 = vunpack.c.l.b16 %v2501
    %v2525 = vunpack.c.l.b16 %v2502
    %v2526 = vunpack.c.l.b16 %v2503
    %v2527 = vunpack.c.l.b16 %v2504
    %v2528 = vunpack.c.l.b16 %v2505
    %v2529 = vunpack.c.l.b16 %v2506
    %v2530 = vpack.c.b16 %v2523, %v2522
    %v2531 = vpack.c.b16 %v2525, %v2524
    %v2532 = vpack.c.b16 %v2527, %v2526
    %v2533 = vpack.c.b16 %v2529, %v2528
    %v2539 = vsel %vm247, %v2498, 0
    %2541 = vmatprep.subr.bf16.mxu0 0
    %2542 = vmatpush1.bf16.msra.mxu0 %v2530
    %2543 = vmatprep.subr.bf16.mxu0 0
    %2544 = vmatpush1.bf16.msra.mxu0 %v2531
    %2545 = vmatprep.subr.bf16.mxu0 0
    %2546 = vmatpush1.bf16.msra.mxu0 %v2532
    %2547 = vmatprep.subr.bf16.mxu0 0
    %2548 = vmatpush1.bf16.msra.mxu0 %v2533
    %2549 = vmatprep.subr.bf16.mxu0 0
    %2550 = vmatpush1.bf16.msra.mxu0 0
    %2551 = vmatprep.subr.bf16.mxu0 0
    %2552 = vmatpush1.bf16.msra.mxu0 0
    %2553 = vmatprep.subr.bf16.mxu0 0
    %2554 = vmatpush1.bf16.msra.mxu0 0
    %2555 = vmatprep.subr.bf16.mxu0 0
    %2556 = vmatpush1.bf16.msra.mxu0 0
    %2557 = vmatprep.subr.bf16.mxu0 0
    %2558 = vmatpush1.bf16.msra.mxu0 0
    %2559 = vmatprep.subr.bf16.mxu0 0
    %2560 = vmatpush1.bf16.msra.mxu0 0
    %2561 = vmatprep.subr.bf16.mxu0 0
    %2562 = vmatpush1.bf16.msra.mxu0 0
    %2563 = vmatprep.subr.bf16.mxu0 0
    %2564 = vmatpush1.bf16.msra.mxu0 0
    %2565 = vmatprep.subr.bf16.mxu0 0
    %2566 = vmatpush1.bf16.msra.mxu0 0
    %2567 = vmatprep.subr.bf16.mxu0 0
    %2568 = vmatpush1.bf16.msra.mxu0 0
    %2569 = vmatprep.subr.bf16.mxu0 0
    %2570 = vmatpush1.bf16.msra.mxu0 0
    %2571 = vmatprep.subr.bf16.mxu0 0
    %2572 = vmatpush1.bf16.msra.mxu0 0
    %2573 = vmatprep.mubr.bf16.mxu0 0
    %2574 = vmatmul.mubr.bf16.gmra.mrb[0].mxu0 %v2539
    %v2575 = vpop.f32.mrb[0].mxu0
    %v2576 = vadd.f32 %v2512, %v2575
    %v2577 = vpop.f32.mrb[0].mxu0
    %v2578 = vpop.f32.mrb[0].mxu0
    %v2579 = vpop.f32.mrb[0].mxu0
    %2580 = vdwg.mxu0
    %v2581 = vmul.f32 %v2576, 0.5
    %v2582 = vtanh.pop %v2581
    %v2583 = vmul.f32 %v2582, 0.5
    %v2584 = vadd.f32 %v2583, 0.5
    %v2585 = vtanh.pop %v2576
    %v2586 = vld [vmem:[#allocation3] sm:$0xff]
    %2588 = vrot.lane.b32.xlu0 %v2586, 32
    %v2589 = vpop.permute.xlu0 %2588
    %v2591 = vmul.f32 %v2584, %v2589
    %2593 = vrot.lane.b32.xlu0 %v2585, 64
    %v2594 = vpop.permute.xlu0 %2593
    %v2596 = vmul.f32 %v2584, %v2594
    %2598 = vrot.lane.b32.xlu0 %v2596, 32
    %v2599 = vpop.permute.xlu0 %2598
    %v2601 = vadd.f32 %v2591, %v2599
    %v2602 = vtanh.pop %v2601
    %2604 = vrot.lane.b32.xlu0 %v2602, 64
    %v2605 = vpop.permute.xlu0 %2604
    %v2607 = vmul.f32 %v2584, %v2605
    %2609 = vrot.lane.b32.xlu0 %v2601, 96
    %v2610 = vpop.permute.xlu0 %2609
    %2612 = vst.msk [vmem:[#allocation3] sm:$0xff] %vm204, %v2610
    %2614 = vrot.lane.b32.xlu0 %v2607, 64
    %v2615 = vpop.permute.xlu0 %2614
    %2617 = vst.msk [vmem:[#allocation2] sm:$0xff] %vm327, %v2615
    %2618 = vrot.lane.b32.xlu0 %v2607, 32
    %v2619 = vpop.permute.xlu0 %2618
    %2621 = vst.msk [vmem:[%s332] sm:$0xff] %vm204, %v2619
    %v2622 = vld [vmem:[%s332] sm:$0xff]
    %v2623 = vpack.c.bf16 %v2622, %v2622
    %v2624 = vld [vmem:[%s336] sm:$0xf]
    %v2625 = vld [vmem:[%s336 + $0x4] sm:$0xf]
    %v2626 = vld [vmem:[%s336 + $0x8] sm:$0xf]
    %v2627 = vld [vmem:[%s336 + $0xc] sm:$0xf]
    %v2628 = vld [vmem:[%s336 + $0x10] sm:$0xf]
    %v2629 = vld [vmem:[%s336 + $0x14] sm:$0xf]
    %v2630 = vld [vmem:[%s336 + $0x18] sm:$0xf]
    %v2631 = vld [vmem:[%s336 + $0x1c] sm:$0xf]
    %v2632 = vld [vmem:[%s345] sm:$0x1]
    %v2634 = vlaneseq
    %v2635 = vshrl.u32 %v2634, 7
    %v2636 = vsub.s32 0, %v2635
    %v2637 = vrot.slane %v2632, %v2636
    %v2647 = vunpack.c.l.b16 %v2624
    %v2648 = vunpack.c.l.b16 %v2625
    %v2649 = vunpack.c.l.b16 %v2626
    %v2650 = vunpack.c.l.b16 %v2627
    %v2651 = vunpack.c.l.b16 %v2628
    %v2652 = vunpack.c.l.b16 %v2629
    %v2653 = vunpack.c.l.b16 %v2630
    %v2654 = vunpack.c.l.b16 %v2631
    %v2655 = vpack.c.b16 %v2648, %v2647
    %v2656 = vpack.c.b16 %v2650, %v2649
    %v2657 = vpack.c.b16 %v2652, %v2651
    %v2658 = vpack.c.b16 %v2654, %v2653
    %v2664 = vsel %vm247, %v2623, 0
    %2666 = vmatprep.subr.bf16.mxu0 0
    %2667 = vmatpush1.bf16.msra.mxu0 %v2655
    %2668 = vmatprep.subr.bf16.mxu0 0
    %2669 = vmatpush1.bf16.msra.mxu0 %v2656
    %2670 = vmatprep.subr.bf16.mxu0 0
    %2671 = vmatpush1.bf16.msra.mxu0 %v2657
    %2672 = vmatprep.subr.bf16.mxu0 0
    %2673 = vmatpush1.bf16.msra.mxu0 %v2658
    %2674 = vmatprep.subr.bf16.mxu0 0
    %2675 = vmatpush1.bf16.msra.mxu0 0
    %2676 = vmatprep.subr.bf16.mxu0 0
    %2677 = vmatpush1.bf16.msra.mxu0 0
    %2678 = vmatprep.subr.bf16.mxu0 0
    %2679 = vmatpush1.bf16.msra.mxu0 0
    %2680 = vmatprep.subr.bf16.mxu0 0
    %2681 = vmatpush1.bf16.msra.mxu0 0
    %2682 = vmatprep.subr.bf16.mxu0 0
    %2683 = vmatpush1.bf16.msra.mxu0 0
    %2684 = vmatprep.subr.bf16.mxu0 0
    %2685 = vmatpush1.bf16.msra.mxu0 0
    %2686 = vmatprep.subr.bf16.mxu0 0
    %2687 = vmatpush1.bf16.msra.mxu0 0
    %2688 = vmatprep.subr.bf16.mxu0 0
    %2689 = vmatpush1.bf16.msra.mxu0 0
    %2690 = vmatprep.subr.bf16.mxu0 0
    %2691 = vmatpush1.bf16.msra.mxu0 0
    %2692 = vmatprep.subr.bf16.mxu0 0
    %2693 = vmatpush1.bf16.msra.mxu0 0
    %2694 = vmatprep.subr.bf16.mxu0 0
    %2695 = vmatpush1.bf16.msra.mxu0 0
    %2696 = vmatprep.subr.bf16.mxu0 0
    %2697 = vmatpush1.bf16.msra.mxu0 0
    %2698 = vmatprep.mubr.bf16.mxu0 0
    %2699 = vmatmul.mubr.bf16.gmra.mrb[0].mxu0 %v2664
    %v2700 = vpop.f32.mrb[0].mxu0
    %v2701 = vadd.f32 %v2637, %v2700
    %v2702 = vpop.f32.mrb[0].mxu0
    %v2703 = vpop.f32.mrb[0].mxu0
    %v2704 = vpop.f32.mrb[0].mxu0
    %2705 = vdwg.mxu0
    %v2706 = vmul.f32 %v2701, 0.5
    %v2707 = vtanh.pop %v2706
    %v2708 = vmul.f32 %v2707, 0.5
    %v2709 = vadd.f32 %v2708, 0.5
    %v2710 = vtanh.pop %v2701
    %v2711 = vld [vmem:[%s425] sm:$0xff]
    %2713 = vrot.lane.b32.xlu0 %v2711, 32
    %v2714 = vpop.permute.xlu0 %2713
    %v2716 = vmul.f32 %v2709, %v2714
    %2718 = vrot.lane.b32.xlu0 %v2710, 64
    %v2719 = vpop.permute.xlu0 %2718
    %v2721 = vmul.f32 %v2709, %v2719
    %2723 = vrot.lane.b32.xlu0 %v2721, 32
    %v2724 = vpop.permute.xlu0 %2723
    %v2726 = vadd.f32 %v2716, %v2724
    %v2727 = vtanh.pop %v2726
    %2729 = vrot.lane.b32.xlu0 %v2727, 64
    %v2730 = vpop.permute.xlu0 %2729
    %v2732 = vmul.f32 %v2709, %v2730
    %2734 = vrot.lane.b32.xlu0 %v2726, 96
    %v2735 = vpop.permute.xlu0 %2734
    %2737 = vst.msk [vmem:[%s425] sm:$0xff] %vm204, %v2735
    %2739 = vrot.lane.b32.xlu0 %v2732, 64
    %v2740 = vpop.permute.xlu0 %2739
    %2742 = vst.msk [vmem:[%s332] sm:$0xff] %vm327, %v2740
    %v2743 = vpack.c.bf16 %v2732, %v2732
    %v2744 = vld [vmem:[%s5] sm:$0xf]
    %v2745 = vld [vmem:[%s5 + $0x4] sm:$0xf]
    %v2746 = vld [vmem:[%s5 + $0x8] sm:$0xf]
    %v2747 = vld [vmem:[%s5 + $0xc] sm:$0xf]
    %v2748 = vld [vmem:[%s6] sm:$0x1]
    %v2750 = vlaneseq
    %v2751 = vshrl.u32 %v2750, 7
    %v2752 = vsub.s32 0, %v2751
    %v2753 = vrot.slane %v2748, %v2752
    %2756 = vrot.lane.b32.xlu0 %v2743, 32
    %v2757 = vpop.permute.xlu0 %2756
    %v2762 = vunpack.c.l.b16 %v2744
    %v2763 = vunpack.c.l.b16 %v2745
    %v2764 = vunpack.c.l.b16 %v2746
    %v2765 = vunpack.c.l.b16 %v2747
    %v2766 = vpack.c.b16 %v2763, %v2762
    %v2767 = vpack.c.b16 %v2765, %v2764
    %v2771 = vsel %vm204, %v2757, 0
    %2773 = vmatprep.subr.bf16.mxu0 0
    %2774 = vmatpush1.bf16.msra.mxu0 %v2766
    %2775 = vmatprep.subr.bf16.mxu0 0
    %2776 = vmatpush1.bf16.msra.mxu0 %v2767
    %2777 = vmatprep.subr.bf16.mxu0 0
    %2778 = vmatpush1.bf16.msra.mxu0 0
    %2779 = vmatprep.subr.bf16.mxu0 0
    %2780 = vmatpush1.bf16.msra.mxu0 0
    %2781 = vmatprep.subr.bf16.mxu0 0
    %2782 = vmatpush1.bf16.msra.mxu0 0
    %2783 = vmatprep.subr.bf16.mxu0 0
    %2784 = vmatpush1.bf16.msra.mxu0 0
    %2785 = vmatprep.subr.bf16.mxu0 0
    %2786 = vmatpush1.bf16.msra.mxu0 0
    %2787 = vmatprep.subr.bf16.mxu0 0
    %2788 = vmatpush1.bf16.msra.mxu0 0
    %2789 = vmatprep.subr.bf16.mxu0 0
    %2790 = vmatpush1.bf16.msra.mxu0 0
    %2791 = vmatprep.subr.bf16.mxu0 0
    %2792 = vmatpush1.bf16.msra.mxu0 0
    %2793 = vmatprep.subr.bf16.mxu0 0
    %2794 = vmatpush1.bf16.msra.mxu0 0
    %2795 = vmatprep.subr.bf16.mxu0 0
    %2796 = vmatpush1.bf16.msra.mxu0 0
    %2797 = vmatprep.subr.bf16.mxu0 0
    %2798 = vmatpush1.bf16.msra.mxu0 0
    %2799 = vmatprep.subr.bf16.mxu0 0
    %2800 = vmatpush1.bf16.msra.mxu0 0
    %2801 = vmatprep.subr.bf16.mxu0 0
    %2802 = vmatpush1.bf16.msra.mxu0 0
    %2803 = vmatprep.subr.bf16.mxu0 0
    %2804 = vmatpush1.bf16.msra.mxu0 0
    %2805 = vmatprep.mubr.bf16.mxu0 0
    %2806 = vmatmul.mubr.bf16.gmra.mrb[0].mxu0 %v2771
    %v2807 = vpop.f32.mrb[0].mxu0
    %v2808 = vadd.f32 %v2753, %v2807
    %v2809 = vpop.f32.mrb[0].mxu0
    %v2810 = vpop.f32.mrb[0].mxu0
    %v2811 = vpop.f32.mrb[0].mxu0
    %2812 = vdwg.mxu0
    %v2813 = vtanh.pop %v2808
    %s2814 = scalar_lea.vmem [#allocation15], 48
    %2815 = vst [vmem:[%s2814] sm:$0xff] %v2813
    %s2816 = scalar_lea.vmem [#allocation4], 56
    %v2817 = vld [vmem:[%s2816] sm:$0xff]
    %v2818 = vpack.c.bf16 %v2817, %v2817
    %v2819 = vld [vmem:[#allocation7] sm:$0xf]
    %v2820 = vld [vmem:[#allocation7 + $0x4] sm:$0xf]
    %v2821 = vld [vmem:[#allocation9] sm:$0x1]
    %v2823 = vlaneseq
    %v2824 = vshrl.u32 %v2823, 7
    %v2825 = vsub.s32 0, %v2824
    %v2826 = vrot.slane %v2821, %v2825
    %v2830 = vunpack.c.l.b16 %v2819
    %v2831 = vunpack.c.l.b16 %v2820
    %v2832 = vpack.c.b16 %v2831, %v2830
    %v2835 = vsel %vm160, %v2818, 0
    %2837 = vmatprep.subr.bf16.mxu0 0
    %2838 = vmatpush1.bf16.msra.mxu0 %v2832
    %2839 = vmatprep.subr.bf16.mxu0 0
    %2840 = vmatpush1.bf16.msra.mxu0 0
    %2841 = vmatprep.subr.bf16.mxu0 0
    %2842 = vmatpush1.bf16.msra.mxu0 0
    %2843 = vmatprep.subr.bf16.mxu0 0
    %2844 = vmatpush1.bf16.msra.mxu0 0
    %2845 = vmatprep.subr.bf16.mxu0 0
    %2846 = vmatpush1.bf16.msra.mxu0 0
    %2847 = vmatprep.subr.bf16.mxu0 0
    %2848 = vmatpush1.bf16.msra.mxu0 0
    %2849 = vmatprep.subr.bf16.mxu0 0
    %2850 = vmatpush1.bf16.msra.mxu0 0
    %2851 = vmatprep.subr.bf16.mxu0 0
    %2852 = vmatpush1.bf16.msra.mxu0 0
    %2853 = vmatprep.subr.bf16.mxu0 0
    %2854 = vmatpush1.bf16.msra.mxu0 0
    %2855 = vmatprep.subr.bf16.mxu0 0
    %2856 = vmatpush1.bf16.msra.mxu0 0
    %2857 = vmatprep.subr.bf16.mxu0 0
    %2858 = vmatpush1.bf16.msra.mxu0 0
    %2859 = vmatprep.subr.bf16.mxu0 0
    %2860 = vmatpush1.bf16.msra.mxu0 0
    %2861 = vmatprep.subr.bf16.mxu0 0
    %2862 = vmatpush1.bf16.msra.mxu0 0
    %2863 = vmatprep.subr.bf16.mxu0 0
    %2864 = vmatpush1.bf16.msra.mxu0 0
    %2865 = vmatprep.subr.bf16.mxu0 0
    %2866 = vmatpush1.bf16.msra.mxu0 0
    %2867 = vmatprep.subr.bf16.mxu0 0
    %2868 = vmatpush1.bf16.msra.mxu0 0
    %2869 = vmatprep.mubr.bf16.mxu0 0
    %2870 = vmatmul.mubr.bf16.gmra.mrb[0].mxu0 %v2835
    %v2871 = vpop.f32.mrb[0].mxu0
    %v2872 = vadd.f32 %v2826, %v2871
    %v2873 = vpop.f32.mrb[0].mxu0
    %v2874 = vpop.f32.mrb[0].mxu0
    %v2875 = vpop.f32.mrb[0].mxu0
    %2876 = vdwg.mxu0
    %2877 = vst.msk [vmem:[#allocation2] sm:$0xff] %vm204, %v2872
    %v2878 = vld [vmem:[#allocation2] sm:$0xff]
    %v2879 = vpack.c.bf16 %v2878, %v2878
    %v2880 = vld [vmem:[#allocation10] sm:$0xf]
    %v2881 = vld [vmem:[#allocation10 + $0x4] sm:$0xf]
    %v2882 = vld [vmem:[#allocation10 + $0x8] sm:$0xf]
    %v2883 = vld [vmem:[#allocation10 + $0xc] sm:$0xf]
    %v2884 = vld [vmem:[#allocation10 + $0x10] sm:$0xf]
    %v2885 = vld [vmem:[#allocation10 + $0x14] sm:$0xf]
    %v2886 = vld [vmem:[#allocation10 + $0x18] sm:$0xf]
    %v2887 = vld [vmem:[#allocation10 + $0x1c] sm:$0xf]
    %v2888 = vld [vmem:[%s4] sm:$0x1]
    %v2890 = vlaneseq
    %v2891 = vshrl.u32 %v2890, 7
    %v2892 = vsub.s32 0, %v2891
    %v2893 = vrot.slane %v2888, %v2892
    %v2903 = vunpack.c.l.b16 %v2880
    %v2904 = vunpack.c.l.b16 %v2881
    %v2905 = vunpack.c.l.b16 %v2882
    %v2906 = vunpack.c.l.b16 %v2883
    %v2907 = vunpack.c.l.b16 %v2884
    %v2908 = vunpack.c.l.b16 %v2885
    %v2909 = vunpack.c.l.b16 %v2886
    %v2910 = vunpack.c.l.b16 %v2887
    %v2911 = vpack.c.b16 %v2904, %v2903
    %v2912 = vpack.c.b16 %v2906, %v2905
    %v2913 = vpack.c.b16 %v2908, %v2907
    %v2914 = vpack.c.b16 %v2910, %v2909
    %v2920 = vsel %vm247, %v2879, 0
    %2922 = vmatprep.subr.bf16.mxu0 0
    %2923 = vmatpush1.bf16.msra.mxu0 %v2911
    %2924 = vmatprep.subr.bf16.mxu0 0
    %2925 = vmatpush1.bf16.msra.mxu0 %v2912
    %2926 = vmatprep.subr.bf16.mxu0 0
    %2927 = vmatpush1.bf16.msra.mxu0 %v2913
    %2928 = vmatprep.subr.bf16.mxu0 0
    %2929 = vmatpush1.bf16.msra.mxu0 %v2914
    %2930 = vmatprep.subr.bf16.mxu0 0
    %2931 = vmatpush1.bf16.msra.mxu0 0
    %2932 = vmatprep.subr.bf16.mxu0 0
    %2933 = vmatpush1.bf16.msra.mxu0 0
    %2934 = vmatprep.subr.bf16.mxu0 0
    %2935 = vmatpush1.bf16.msra.mxu0 0
    %2936 = vmatprep.subr.bf16.mxu0 0
    %2937 = vmatpush1.bf16.msra.mxu0 0
    %2938 = vmatprep.subr.bf16.mxu0 0
    %2939 = vmatpush1.bf16.msra.mxu0 0
    %2940 = vmatprep.subr.bf16.mxu0 0
    %2941 = vmatpush1.bf16.msra.mxu0 0
    %2942 = vmatprep.subr.bf16.mxu0 0
    %2943 = vmatpush1.bf16.msra.mxu0 0
    %2944 = vmatprep.subr.bf16.mxu0 0
    %2945 = vmatpush1.bf16.msra.mxu0 0
    %2946 = vmatprep.subr.bf16.mxu0 0
    %2947 = vmatpush1.bf16.msra.mxu0 0
    %2948 = vmatprep.subr.bf16.mxu0 0
    %2949 = vmatpush1.bf16.msra.mxu0 0
    %2950 = vmatprep.subr.bf16.mxu0 0
    %2951 = vmatpush1.bf16.msra.mxu0 0
    %2952 = vmatprep.subr.bf16.mxu0 0
    %2953 = vmatpush1.bf16.msra.mxu0 0
    %2954 = vmatprep.mubr.bf16.mxu0 0
    %2955 = vmatmul.mubr.bf16.gmra.mrb[0].mxu0 %v2920
    %v2956 = vpop.f32.mrb[0].mxu0
    %v2957 = vadd.f32 %v2893, %v2956
    %v2958 = vpop.f32.mrb[0].mxu0
    %v2959 = vpop.f32.mrb[0].mxu0
    %v2960 = vpop.f32.mrb[0].mxu0
    %2961 = vdwg.mxu0
    %v2962 = vmul.f32 %v2957, 0.5
    %v2963 = vtanh.pop %v2962
    %v2964 = vmul.f32 %v2963, 0.5
    %v2965 = vadd.f32 %v2964, 0.5
    %v2966 = vtanh.pop %v2957
    %v2967 = vld [vmem:[#allocation3] sm:$0xff]
    %2969 = vrot.lane.b32.xlu0 %v2967, 32
    %v2970 = vpop.permute.xlu0 %2969
    %v2972 = vmul.f32 %v2965, %v2970
    %2974 = vrot.lane.b32.xlu0 %v2966, 64
    %v2975 = vpop.permute.xlu0 %2974
    %v2977 = vmul.f32 %v2965, %v2975
    %2979 = vrot.lane.b32.xlu0 %v2977, 32
    %v2980 = vpop.permute.xlu0 %2979
    %v2982 = vadd.f32 %v2972, %v2980
    %v2983 = vtanh.pop %v2982
    %2985 = vrot.lane.b32.xlu0 %v2983, 64
    %v2986 = vpop.permute.xlu0 %2985
    %v2988 = vmul.f32 %v2965, %v2986
    %2990 = vrot.lane.b32.xlu0 %v2982, 96
    %v2991 = vpop.permute.xlu0 %2990
    %2993 = vst.msk [vmem:[#allocation3] sm:$0xff] %vm204, %v2991
    %2995 = vrot.lane.b32.xlu0 %v2988, 64
    %v2996 = vpop.permute.xlu0 %2995
    %2998 = vst.msk [vmem:[#allocation2] sm:$0xff] %vm327, %v2996
    %2999 = vrot.lane.b32.xlu0 %v2988, 32
    %v3000 = vpop.permute.xlu0 %2999
    %3002 = vst.msk [vmem:[%s332] sm:$0xff] %vm204, %v3000
    %v3003 = vld [vmem:[%s332] sm:$0xff]
    %v3004 = vpack.c.bf16 %v3003, %v3003
    %v3005 = vld [vmem:[%s336] sm:$0xf]
    %v3006 = vld [vmem:[%s336 + $0x4] sm:$0xf]
    %v3007 = vld [vmem:[%s336 + $0x8] sm:$0xf]
    %v3008 = vld [vmem:[%s336 + $0xc] sm:$0xf]
    %v3009 = vld [vmem:[%s336 + $0x10] sm:$0xf]
    %v3010 = vld [vmem:[%s336 + $0x14] sm:$0xf]
    %v3011 = vld [vmem:[%s336 + $0x18] sm:$0xf]
    %v3012 = vld [vmem:[%s336 + $0x1c] sm:$0xf]
    %v3013 = vld [vmem:[%s345] sm:$0x1]
    %v3015 = vlaneseq
    %v3016 = vshrl.u32 %v3015, 7
    %v3017 = vsub.s32 0, %v3016
    %v3018 = vrot.slane %v3013, %v3017
    %v3028 = vunpack.c.l.b16 %v3005
    %v3029 = vunpack.c.l.b16 %v3006
    %v3030 = vunpack.c.l.b16 %v3007
    %v3031 = vunpack.c.l.b16 %v3008
    %v3032 = vunpack.c.l.b16 %v3009
    %v3033 = vunpack.c.l.b16 %v3010
    %v3034 = vunpack.c.l.b16 %v3011
    %v3035 = vunpack.c.l.b16 %v3012
    %v3036 = vpack.c.b16 %v3029, %v3028
    %v3037 = vpack.c.b16 %v3031, %v3030
    %v3038 = vpack.c.b16 %v3033, %v3032
    %v3039 = vpack.c.b16 %v3035, %v3034
    %v3045 = vsel %vm247, %v3004, 0
    %3047 = vmatprep.subr.bf16.mxu0 0
    %3048 = vmatpush1.bf16.msra.mxu0 %v3036
    %3049 = vmatprep.subr.bf16.mxu0 0
    %3050 = vmatpush1.bf16.msra.mxu0 %v3037
    %3051 = vmatprep.subr.bf16.mxu0 0
    %3052 = vmatpush1.bf16.msra.mxu0 %v3038
    %3053 = vmatprep.subr.bf16.mxu0 0
    %3054 = vmatpush1.bf16.msra.mxu0 %v3039
    %3055 = vmatprep.subr.bf16.mxu0 0
    %3056 = vmatpush1.bf16.msra.mxu0 0
    %3057 = vmatprep.subr.bf16.mxu0 0
    %3058 = vmatpush1.bf16.msra.mxu0 0
    %3059 = vmatprep.subr.bf16.mxu0 0
    %3060 = vmatpush1.bf16.msra.mxu0 0
    %3061 = vmatprep.subr.bf16.mxu0 0
    %3062 = vmatpush1.bf16.msra.mxu0 0
    %3063 = vmatprep.subr.bf16.mxu0 0
    %3064 = vmatpush1.bf16.msra.mxu0 0
    %3065 = vmatprep.subr.bf16.mxu0 0
    %3066 = vmatpush1.bf16.msra.mxu0 0
    %3067 = vmatprep.subr.bf16.mxu0 0
    %3068 = vmatpush1.bf16.msra.mxu0 0
    %3069 = vmatprep.subr.bf16.mxu0 0
    %3070 = vmatpush1.bf16.msra.mxu0 0
    %3071 = vmatprep.subr.bf16.mxu0 0
    %3072 = vmatpush1.bf16.msra.mxu0 0
    %3073 = vmatprep.subr.bf16.mxu0 0
    %3074 = vmatpush1.bf16.msra.mxu0 0
    %3075 = vmatprep.subr.bf16.mxu0 0
    %3076 = vmatpush1.bf16.msra.mxu0 0
    %3077 = vmatprep.subr.bf16.mxu0 0
    %3078 = vmatpush1.bf16.msra.mxu0 0
    %3079 = vmatprep.mubr.bf16.mxu0 0
    %3080 = vmatmul.mubr.bf16.gmra.mrb[0].mxu0 %v3045
    %v3081 = vpop.f32.mrb[0].mxu0
    %v3082 = vadd.f32 %v3018, %v3081
    %v3083 = vpop.f32.mrb[0].mxu0
    %v3084 = vpop.f32.mrb[0].mxu0
    %v3085 = vpop.f32.mrb[0].mxu0
    %3086 = vdwg.mxu0
    %v3087 = vmul.f32 %v3082, 0.5
    %v3088 = vtanh.pop %v3087
    %v3089 = vmul.f32 %v3088, 0.5
    %v3090 = vadd.f32 %v3089, 0.5
    %v3091 = vtanh.pop %v3082
    %v3092 = vld [vmem:[%s425] sm:$0xff]
    %3094 = vrot.lane.b32.xlu0 %v3092, 32
    %v3095 = vpop.permute.xlu0 %3094
    %v3097 = vmul.f32 %v3090, %v3095
    %3099 = vrot.lane.b32.xlu0 %v3091, 64
    %v3100 = vpop.permute.xlu0 %3099
    %v3102 = vmul.f32 %v3090, %v3100
    %3104 = vrot.lane.b32.xlu0 %v3102, 32
    %v3105 = vpop.permute.xlu0 %3104
    %v3107 = vadd.f32 %v3097, %v3105
    %v3108 = vtanh.pop %v3107
    %3110 = vrot.lane.b32.xlu0 %v3108, 64
    %v3111 = vpop.permute.xlu0 %3110
    %v3113 = vmul.f32 %v3090, %v3111
    %3115 = vrot.lane.b32.xlu0 %v3107, 96
    %v3116 = vpop.permute.xlu0 %3115
    %3118 = vst.msk [vmem:[%s425] sm:$0xff] %vm204, %v3116
    %3120 = vrot.lane.b32.xlu0 %v3113, 64
    %v3121 = vpop.permute.xlu0 %3120
    %3123 = vst.msk [vmem:[%s332] sm:$0xff] %vm327, %v3121
    %v3124 = vpack.c.bf16 %v3113, %v3113
    %v3125 = vld [vmem:[%s5] sm:$0xf]
    %v3126 = vld [vmem:[%s5 + $0x4] sm:$0xf]
    %v3127 = vld [vmem:[%s5 + $0x8] sm:$0xf]
    %v3128 = vld [vmem:[%s5 + $0xc] sm:$0xf]
    %v3129 = vld [vmem:[%s6] sm:$0x1]
    %v3131 = vlaneseq
    %v3132 = vshrl.u32 %v3131, 7
    %v3133 = vsub.s32 0, %v3132
    %v3134 = vrot.slane %v3129, %v3133
    %3137 = vrot.lane.b32.xlu0 %v3124, 32
    %v3138 = vpop.permute.xlu0 %3137
    %v3143 = vunpack.c.l.b16 %v3125
    %v3144 = vunpack.c.l.b16 %v3126
    %v3145 = vunpack.c.l.b16 %v3127
    %v3146 = vunpack.c.l.b16 %v3128
    %v3147 = vpack.c.b16 %v3144, %v3143
    %v3148 = vpack.c.b16 %v3146, %v3145
    %v3152 = vsel %vm204, %v3138, 0
    %3154 = vmatprep.subr.bf16.mxu0 0
    %3155 = vmatpush1.bf16.msra.mxu0 %v3147
    %3156 = vmatprep.subr.bf16.mxu0 0
    %3157 = vmatpush1.bf16.msra.mxu0 %v3148
    %3158 = vmatprep.subr.bf16.mxu0 0
    %3159 = vmatpush1.bf16.msra.mxu0 0
    %3160 = vmatprep.subr.bf16.mxu0 0
    %3161 = vmatpush1.bf16.msra.mxu0 0
    %3162 = vmatprep.subr.bf16.mxu0 0
    %3163 = vmatpush1.bf16.msra.mxu0 0
    %3164 = vmatprep.subr.bf16.mxu0 0
    %3165 = vmatpush1.bf16.msra.mxu0 0
    %3166 = vmatprep.subr.bf16.mxu0 0
    %3167 = vmatpush1.bf16.msra.mxu0 0
    %3168 = vmatprep.subr.bf16.mxu0 0
    %3169 = vmatpush1.bf16.msra.mxu0 0
    %3170 = vmatprep.subr.bf16.mxu0 0
    %3171 = vmatpush1.bf16.msra.mxu0 0
    %3172 = vmatprep.subr.bf16.mxu0 0
    %3173 = vmatpush1.bf16.msra.mxu0 0
    %3174 = vmatprep.subr.bf16.mxu0 0
    %3175 = vmatpush1.bf16.msra.mxu0 0
    %3176 = vmatprep.subr.bf16.mxu0 0
    %3177 = vmatpush1.bf16.msra.mxu0 0
    %3178 = vmatprep.subr.bf16.mxu0 0
    %3179 = vmatpush1.bf16.msra.mxu0 0
    %3180 = vmatprep.subr.bf16.mxu0 0
    %3181 = vmatpush1.bf16.msra.mxu0 0
    %3182 = vmatprep.subr.bf16.mxu0 0
    %3183 = vmatpush1.bf16.msra.mxu0 0
    %3184 = vmatprep.subr.bf16.mxu0 0
    %3185 = vmatpush1.bf16.msra.mxu0 0
    %3186 = vmatprep.mubr.bf16.mxu0 0
    %3187 = vmatmul.mubr.bf16.gmra.mrb[0].mxu0 %v3152
    %v3188 = vpop.f32.mrb[0].mxu0
    %v3189 = vadd.f32 %v3134, %v3188
    %v3190 = vpop.f32.mrb[0].mxu0
    %v3191 = vpop.f32.mrb[0].mxu0
    %v3192 = vpop.f32.mrb[0].mxu0
    %3193 = vdwg.mxu0
    %v3194 = vtanh.pop %v3189
    %s3195 = scalar_lea.vmem [#allocation15], 56
    %3196 = vst [vmem:[%s3195] sm:$0xff] %v3194
    // Predicated region
    $region66: #{tpu_custom_call.1} parent=1 // pred_check
      %p3197 = pneg %p118
    $region67: #{tpu_custom_call.1} parent=1 // pred_check_branch
      %3199 = sbr.rel (%p3197) target = $region69
    $region68: #{tpu_custom_call.1} parent=1 // pred_region
      %v3200 = vld [vmem:[#allocation2] sm:$0xff]
      %v3201 = vld [vmem:[#allocation2 + $0x8] sm:$0xff]
      %3204 = vrot.lane.b32.xlu0 %v3200, 96
      %v3205 = vpop.permute.xlu0 %3204
      %3206 = vrot.lane.b32.xlu0 %v3201, 96
      %v3207 = vpop.permute.xlu0 %3206
      %3210 = vst.msk [vmem:[#allocation16] sm:$0xff] %vm204, %v3205
      %3211 = vst.msk [vmem:[#allocation16 + $0x8] sm:$0xff] %vm204, %v3207
      %v3212 = vld [vmem:[#allocation3] sm:$0xff]
      %v3213 = vld [vmem:[#allocation3 + $0x8] sm:$0xff]
      %3214 = vst.msk [vmem:[#allocation18] sm:$0xff] %vm204, %v3212
      %3215 = vst.msk [vmem:[#allocation18 + $0x8] sm:$0xff] %vm204, %v3213
    $region69: #{tpu_custom_call.1} parent=1 // pred_fallthru
      _
    // Predicated region
    $region70: #{tpu_custom_call.1} parent=1 // pred_check
      _
    $region71: #{tpu_custom_call.1} parent=1 // pred_check_branch
      %3217 = sbr.rel (0) target = $region73
    $region72: #{tpu_custom_call.1} parent=1 // pred_region
      %s3219 = ssub.s32 1024, 1024
      %3220 = vsyncadd [#allocation6], %s3219
      %s3221 = sshll.u32 [#allocation15], 4
      %s3222 = int_to_ptr.vmem [resolvable:$true] %s3221
      %3227 = dma.vmem_to_hbm [thread:$0]  %s3222, 1024, %s9, [#allocation6], 128, 128, 8
    $region73: #{tpu_custom_call.1} parent=1 // pred_fallthru
      _
    // Predicated region
    $region74: #{tpu_custom_call.1} parent=1 // pred_check
      _
    $region75: #{tpu_custom_call.1} parent=1 // pred_check_branch
      %3229 = sbr.rel (0) target = $region77
    $region76: #{tpu_custom_call.1} parent=1 // pred_region
      %s3231 = ssub.s32 256, 256
      %3232 = vsyncadd [#allocation17], %s3231
      %s3233 = sshll.u32 [#allocation16], 4
      %s3234 = int_to_ptr.vmem [resolvable:$true] %s3233
      %3239 = dma.vmem_to_hbm [thread:$0]  %s3234, 256, %s10, [#allocation17], 128, 128, 8
    $region77: #{tpu_custom_call.1} parent=1 // pred_fallthru
      _
    // Predicated region
    $region78: #{tpu_custom_call.1} parent=1 // pred_check
      _
    $region79: #{tpu_custom_call.1} parent=1 // pred_check_branch
      %3241 = sbr.rel (0) target = $region81
    $region80: #{tpu_custom_call.1} parent=1 // pred_region
      %s3243 = ssub.s32 256, 256
      %3244 = vsyncadd [#allocation17], %s3243
      %s3245 = sshll.u32 [#allocation18], 4
      %s3246 = int_to_ptr.vmem [resolvable:$true] %s3245
      %3251 = dma.vmem_to_hbm [thread:$0]  %s3246, 256, %s11, [#allocation17], 128, 128, 8
    $region81: #{tpu_custom_call.1} parent=1 // pred_fallthru
      _
    // Predicated region
    $region82: #{tpu_custom_call.1} parent=1 // pred_check
      _
    $region83: #{tpu_custom_call.1} parent=1 // pred_check_branch
      %3253 = sbr.rel (0) target = $region85
    $region84: #{tpu_custom_call.1} parent=1 // pred_region
      %3254 = dma.done [#allocation6], 1024
    $region85: #{tpu_custom_call.1} parent=1 // pred_fallthru
      _
    // Predicated region
    $region86: #{tpu_custom_call.1} parent=1 // pred_check
      _
    $region87: #{tpu_custom_call.1} parent=1 // pred_check_branch
      %3256 = sbr.rel (0) target = $region89
    $region88: #{tpu_custom_call.1} parent=1 // pred_region
      %3257 = dma.done [#allocation17], 256
    $region89: #{tpu_custom_call.1} parent=1 // pred_fallthru
      _
    // Predicated region
    $region90: #{tpu_custom_call.1} parent=1 // pred_check
      _
    $region91: #{tpu_custom_call.1} parent=1 // pred_check_branch
      %3259 = sbr.rel (0) target = $region93
    $region92: #{tpu_custom_call.1} parent=1 // pred_region
      %3260 = dma.done [#allocation17], 256
    $region93: #{tpu_custom_call.1} parent=1 // pred_fallthru
      _
    %3261 = vsyncpa [#allocation5], 1
    %3262 = vsyncpa [#allocation8], 1
    %3263 = vsyncpa [#allocation11], 1
    %3264 = vsyncpa [#allocation14], 1
    %3265 = vsyncpa [#allocation6], 1
    %3266 = vsyncpa [#allocation17], 1

</llo_original>
